<compile_context>
chip_gen: v6e
topology: v6e:2x2x1
jax: 0.10.0
libtpu: 0.0.40
codegen_flags: <defaults>
</compile_context>

<pallas_src>
import functools

import jax
import jax.numpy as jnp
from jax.experimental import pallas as pl
from jax.experimental.pallas import tpu as pltpu

_NEG_BIG = -1e30          # finite "minus infinity" for masked logits
_NEG_SLOPE = 0.2          # PyG GATConv default negative_slope
_LANE = 128               # TPU lane width
_TILE_M = 256             # dst-row tile  (256: fills v6e/v7x MXU, ok on v5e)
_TILE_K = 256             # src-node tile
_FUSED_MAX_N = 512        # use the single fused kernel when N_pad <= this
_FUSED_MAX_D = 256        # ... and all padded feature dims <= this


def _round_up(x, m):
    return ((x + m - 1) // m) * m


def _full_spec(shape):
    """BlockSpec covering the whole array (grid=(1,))."""
    return pl.BlockSpec(shape, lambda i: (0,) * len(shape))


# ===================== fused (small-graph) single kernel ===================== #
def _fused_gat_kernel(x_ref, adj_ref, cross_ref, w_ref, asrc_ref, adst_ref,
                      b_ref, out_ref, *, kinds):
    h = x_ref[...]                                             # (N, D) f32
    masks = (adj_ref[...].astype(jnp.float32) > 0.0,           # intra-graph edges
             cross_ref[...].astype(jnp.float32) > 0.0)         # cross edges
    last = len(kinds) - 1
    for li, kind in enumerate(kinds):
        # projection (MXU, f32 accumulate)
        h = jnp.dot(h, w_ref[li], preferred_element_type=jnp.float32)
        # attention logits: a_src as a (1, N) row via one MXU matvec,
        # a_dst as a (N, 1) column via an elementwise multiply + row reduce.
        a_src = jnp.dot(asrc_ref[li], h.T, preferred_element_type=jnp.float32)
        a_dst = jnp.sum(h * adst_ref[li], axis=-1, keepdims=True)
        e = a_dst + a_src                                      # (N, N)
        e = jnp.maximum(e, _NEG_SLOPE * e)                     # LeakyReLU
        e = jnp.where(masks[kind], e, _NEG_BIG)                # mask non-edges
        m = jnp.max(e, axis=-1, keepdims=True)                 # finite: self loops
        p = jnp.exp(e - m)                                     # masked -> 0
        l = jnp.sum(p, axis=-1, keepdims=True)
        h = jnp.dot(p, h, preferred_element_type=jnp.float32) / l + b_ref[li]
        if li != last:
            h = jnp.maximum(h, 0.0)                            # fused ReLU
        # TODO(synk): dropout would go here for training parity.
    out_ref[...] = h


def _cross_gat_fused(x_pad, adj_pad, cross_pad, fused, kinds):
    n_pad, d_pad = x_pad.shape
    n_layers = fused["w"].shape[0]
    kernel = functools.partial(_fused_gat_kernel, kinds=kinds)
    return pl.pallas_call(
        kernel,
        out_shape=jax.ShapeDtypeStruct((n_pad, d_pad), jnp.float32),
        grid=(1,),
        in_specs=[
            _full_spec((n_pad, d_pad)),
            _full_spec((n_pad, n_pad)),
            _full_spec((n_pad, n_pad)),
            _full_spec((n_layers, d_pad, d_pad)),
            _full_spec((n_layers, 1, d_pad)),
            _full_spec((n_layers, 1, d_pad)),
            _full_spec((n_layers, 1, d_pad)),
        ],
        out_specs=_full_spec((n_pad, d_pad)),
        compiler_params=pltpu.CompilerParams(
            dimension_semantics=("arbitrary",)),
    )(x_pad, adj_pad, cross_pad,
      fused["w"], fused["att_src"], fused["att_dst"], fused["bias"])


# ========================= tiled (large-graph) path ========================== #
def _proj_kernel(x_ref, w_ref, h_ref):
    h_ref[...] = jnp.dot(x_ref[...], w_ref[...],
                         preferred_element_type=jnp.float32).astype(h_ref.dtype)


def _gat_project(x, w, tm):
    n_pad, d_in_pad = x.shape
    d_out_pad = w.shape[1]
    return pl.pallas_call(
        _proj_kernel,
        out_shape=jax.ShapeDtypeStruct((n_pad, d_out_pad), jnp.bfloat16),
        grid=(n_pad // tm,),
        in_specs=[pl.BlockSpec((tm, d_in_pad), lambda i: (i, 0)),
                  pl.BlockSpec((d_in_pad, d_out_pad), lambda i: (0, 0))],
        out_specs=pl.BlockSpec((tm, d_out_pad), lambda i: (i, 0)),
        compiler_params=pltpu.CompilerParams(
            dimension_semantics=("parallel",)),
    )(x, w)


def _attn_kernel(asrc_ref, adst_ref, hd_ref, hs_ref, adj_ref, b_ref, out_ref,
                 m_ref, l_ref, acc_ref, ad_ref, *, apply_relu):
    k = pl.program_id(1)

    @pl.when(k == 0)
    def _init():
        # The running max m is a per-row softmax shift; starting it at 0
        # (instead of -inf) keeps exp(e - m) == 0 for fully masked (dst, src)
        # tiles, so no post-exp re-masking of p is needed.
        m_ref[...] = jnp.zeros(m_ref.shape, jnp.float32)
        l_ref[...] = jnp.zeros(l_ref.shape, jnp.float32)
        acc_ref[...] = jnp.zeros(acc_ref.shape, jnp.float32)
        # a_dst for this dst block (computed once per i).
        ad_ref[...] = jnp.sum((hd_ref[...] * adst_ref[...]).astype(jnp.float32),
                              axis=-1, keepdims=True)

    # a_src for this src tile: one small MXU matvec (bf16 in, f32 out).
    a_src = jnp.dot(asrc_ref[...], hs_ref[...].T,
                    preferred_element_type=jnp.float32)          # (1, tk)
    e = ad_ref[...] + a_src                                      # (tm, tk)
    e = jnp.maximum(e, _NEG_SLOPE * e)                           # LeakyReLU
    e = jnp.where(adj_ref[...].astype(jnp.float32) > 0.0, e, _NEG_BIG)

    # Online (flash-style) softmax accumulation over source tiles.
    m_prev = m_ref[...]
    m_new = jnp.maximum(m_prev, jnp.max(e, axis=-1, keepdims=True))
    corr = jnp.exp(m_prev - m_new)
    p = jnp.exp(e - m_new)                                       # masked -> 0
    l_ref[...] = corr * l_ref[...] + jnp.sum(p, axis=-1, keepdims=True)
    acc_ref[...] = corr * acc_ref[...] + jnp.dot(
        p.astype(jnp.bfloat16), hs_ref[...], preferred_element_type=jnp.float32)
    m_ref[...] = m_new

    @pl.when(k == pl.num_programs(1) - 1)
    def _finalize():
        out = acc_ref[...] / l_ref[...] + b_ref[...]             # exact normalizer
        if apply_relu:
            out = jnp.maximum(out, 0.0)                          # fused ReLU
        out_ref[...] = out.astype(out_ref.dtype)


def _gat_attention(att_src, att_dst, h, adj, bias, *, apply_relu, out_dtype, tm, tk):
    n_pad, d_out_pad = h.shape
    kernel = functools.partial(_attn_kernel, apply_relu=apply_relu)
    return pl.pallas_call(
        kernel,
        out_shape=jax.ShapeDtypeStruct((n_pad, d_out_pad), out_dtype),
        grid=(n_pad // tm, n_pad // tk),
        in_specs=[
            pl.BlockSpec((1, d_out_pad), lambda i, k: (0, 0)),    # att_src (bf16)
            pl.BlockSpec((1, d_out_pad), lambda i, k: (0, 0)),    # att_dst (bf16)
            pl.BlockSpec((tm, d_out_pad), lambda i, k: (i, 0)),   # h, dst rows
            pl.BlockSpec((tk, d_out_pad), lambda i, k: (k, 0)),   # h, src rows
            pl.BlockSpec((tm, tk), lambda i, k: (i, k)),          # adjacency (int8)
            pl.BlockSpec((1, d_out_pad), lambda i, k: (0, 0)),    # bias
        ],
        out_specs=pl.BlockSpec((tm, d_out_pad), lambda i, k: (i, 0)),
        scratch_shapes=[
            pltpu.VMEM((tm, 1), jnp.float32),           # running max m
            pltpu.VMEM((tm, 1), jnp.float32),           # running denom l
            pltpu.VMEM((tm, d_out_pad), jnp.float32),   # running weighted sum
            pltpu.VMEM((tm, 1), jnp.float32),           # a_dst for this block
        ],
        compiler_params=pltpu.CompilerParams(
            dimension_semantics=("parallel", "arbitrary")),
    )(att_src, att_dst, h, h, adj, bias)


def _proj_tile(n_pad):
    return 512 if (n_pad % 512 == 0) else 256


# ------------------------------ parameters ----------------------------------- #
def make_gat_params(key, in_dim, out_dim):
    k1, k2, k3 = jax.random.split(key, 3)
    scale = 1.0 / jnp.sqrt(jnp.float32(in_dim))
    return {
        "w": jax.random.normal(k1, (in_dim, out_dim), jnp.float32) * scale,
        "att_src": jax.random.normal(k2, (1, out_dim), jnp.float32) * 0.1,
        "att_dst": jax.random.normal(k3, (1, out_dim), jnp.float32) * 0.1,
        "bias": jnp.zeros((1, out_dim), jnp.float32),
    }


# ------------------------------ graph helpers --------------------------------- #
def dense_adj_from_edge_index(edge_index, num_nodes):
    """edge_index: (2, E) int32, row 0 = src, row 1 = dst. Returns [N_dst, N_src]
    int8 adjacency with self loops (PyG add_self_loops=True default)."""
    src, dst = edge_index[0], edge_index[1]
    adj = jnp.zeros((num_nodes, num_nodes), jnp.int8)
    adj = adj.at[dst, src].set(1)
    diag = jnp.arange(num_nodes)
    adj = adj.at[diag, diag].set(1)
    return adj


def _pad_adj(adj, n_pad):
    n = adj.shape[0]
    out = jnp.zeros((n_pad, n_pad), jnp.int8)
    out = out.at[:n, :n].set(adj.astype(jnp.int8))
    if n_pad > n:
        idx = jnp.arange(n, n_pad)
        out = out.at[idx, idx].set(1)   # self loops keep padded-row softmax finite
    return out


def _pad_features(x, rows, cols, dtype):
    out = jnp.zeros((rows, cols), dtype)
    return out.at[:x.shape[0], :x.shape[1]].set(x.astype(dtype))


# --------------------------------- model -------------------------------------- #
class CrossGATPallas:
    def __init__(self, input_dim, hidden_dim1, hidden_dim2, output_dim, key):
        ks = jax.random.split(key, 5)
        self.dims = [(input_dim, hidden_dim1), (hidden_dim1, hidden_dim1),
                     (hidden_dim1, hidden_dim2), (hidden_dim2, hidden_dim2),
                     (hidden_dim2, output_dim)]
        self.kinds = (0, 1, 0, 1, 0)   # 0 -> adj, 1 -> cross (conv/cross/conv/cross/conv)
        self.params = [make_gat_params(k, din, dout)
                       for k, (din, dout) in zip(ks, self.dims)]
        self.output_dim = output_dim
        self.tm = _TILE_M
        self.tk = _TILE_K
        # per-layer padded params for the tiled path (bf16 MXU feeds)
        self.layers = [self._prep_layer(p, din, dout)
                       for p, (din, dout) in zip(self.params, self.dims)]
        # stacked, uniformly padded params for the fused small-graph kernel (f32)
        self.d_fused = max(_round_up(d, _LANE) for pair in self.dims for d in pair)
        self.fused = self._prep_fused()

    def _prep_layer(self, p, d_in, d_out):
        d_in_pad = _round_up(d_in, _LANE)
        d_out_pad = _round_up(d_out, _LANE)
        w = jnp.zeros((d_in_pad, d_out_pad), jnp.float32).at[:d_in, :d_out].set(p["w"])
        asrc = jnp.zeros((1, d_out_pad), jnp.float32).at[:, :d_out].set(p["att_src"])
        adst = jnp.zeros((1, d_out_pad), jnp.float32).at[:, :d_out].set(p["att_dst"])
        bias = jnp.zeros((1, d_out_pad), jnp.float32).at[:, :d_out].set(p["bias"])
        return {"w": w.astype(jnp.bfloat16),
                "att_src": asrc.astype(jnp.bfloat16),
                "att_dst": adst.astype(jnp.bfloat16),
                "bias": bias,
                "d_in_pad": d_in_pad, "d_out_pad": d_out_pad}

    def _prep_fused(self):
        d = self.d_fused
        n_layers = len(self.params)
        w = jnp.zeros((n_layers, d, d), jnp.float32)
        asrc = jnp.zeros((n_layers, 1, d), jnp.float32)
        adst = jnp.zeros((n_layers, 1, d), jnp.float32)
        bias = jnp.zeros((n_layers, 1, d), jnp.float32)
        for li, (p, (din, dout)) in enumerate(zip(self.params, self.dims)):
            w = w.at[li, :din, :dout].set(p["w"])
            asrc = asrc.at[li, :, :dout].set(p["att_src"])
            adst = adst.at[li, :, :dout].set(p["att_dst"])
            bias = bias.at[li, :, :dout].set(p["bias"])
        return {"w": w, "att_src": asrc, "att_dst": adst, "bias": bias}

    # --- forward paths --- #
    def __call__(self, x, adj, adj_cross):
        n = x.shape[0]
        if _round_up(n, _LANE) <= _FUSED_MAX_N and self.d_fused <= _FUSED_MAX_D:
            return self._forward_fused(x, adj, adj_cross)
        return self._forward_tiled(x, adj, adj_cross)

    def _forward_fused(self, x, adj, adj_cross):
        n = x.shape[0]
        n_pad = _round_up(n, _LANE)
        x_pad = _pad_features(x, n_pad, self.d_fused, jnp.float32)
        adj_pad = _pad_adj(adj, n_pad)
        cross_pad = _pad_adj(adj_cross, n_pad)
        out = _cross_gat_fused(x_pad, adj_pad, cross_pad, self.fused, self.kinds)
        return jnp.squeeze(out[:n, :self.output_dim])   # mirrors x.squeeze()

    def _forward_tiled(self, x, adj, adj_cross):
        n = x.shape[0]
        n_pad = _round_up(n, max(self.tm, self.tk))
        adj_pads = (_pad_adj(adj, n_pad), _pad_adj(adj_cross, n_pad))
        h = _pad_features(x, n_pad, self.layers[0]["d_in_pad"], jnp.bfloat16)
        tm_proj = _proj_tile(n_pad)
        n_layers = len(self.layers)
        for li, (kind, layer) in enumerate(zip(self.kinds, self.layers)):
            last = li == n_layers - 1
            hproj = _gat_project(h, layer["w"], tm_proj)
            h = _gat_attention(layer["att_src"], layer["att_dst"], hproj,
                               adj_pads[kind], layer["bias"],
                               apply_relu=not last,
                               out_dtype=jnp.float32 if last else jnp.bfloat16,
                               tm=self.tm, tk=self.tk)
        return jnp.squeeze(h[:n, :self.output_dim])


# ---------------------------- pure-JAX reference ------------------------------- #
def _gat_layer_ref(x, adj_bool, p):
    h = x @ p["w"]
    a_src = h @ p["att_src"][0]
    a_dst = h @ p["att_dst"][0]
    e = a_dst[:, None] + a_src[None, :]
    e = jnp.where(e > 0, e, _NEG_SLOPE * e)
    e = jnp.where(adj_bool, e, -jnp.inf)
    e = e - jnp.max(e, axis=-1, keepdims=True)
    w = jnp.exp(e)
    w = w / jnp.sum(w, axis=-1, keepdims=True)
    return w @ h + p["bias"]


def cross_gat_reference(x, adj, adj_cross, params, kinds, output_dim):
    masks = (adj.astype(bool), adj_cross.astype(bool))
    h = x
    n_layers = len(params)
    for li, (kind, p) in enumerate(zip(kinds, params)):
        h = _gat_layer_ref(h, masks[kind], p)
        if li != n_layers - 1:
            h = jnp.maximum(h, 0.0)
    return jnp.squeeze(h[:, :output_dim])


# ----------------------------------- main -------------------------------------- #
if __name__ == "__main__":
    key = jax.random.PRNGKey(0)
    k_x, k_e1, k_e2, k_params, k_x2, k_e3, k_e4 = jax.random.split(key, 7)

    # --- shipped small case: exercises the fused single-kernel path ---
    num_nodes = 16
    input_dim, hidden_dim1, hidden_dim2, output_dim = 8, 32, 32, 16
    x = jax.random.normal(k_x, (num_nodes, input_dim), jnp.float32)
    edge_index = jax.random.randint(k_e1, (2, 48), 0, num_nodes, jnp.int32)
    edge_index_cross = jax.random.randint(k_e2, (2, 32), 0, num_nodes, jnp.int32)
    adj = dense_adj_from_edge_index(edge_index, num_nodes)
    adj_cross = dense_adj_from_edge_index(edge_index_cross, num_nodes)

    model = CrossGATPallas(input_dim, hidden_dim1, hidden_dim2, output_dim, k_params)
    out = jax.block_until_ready(model(x, adj, adj_cross))
    ref = cross_gat_reference(x, adj, adj_cross, model.params, model.kinds, output_dim)
    assert out.shape == (num_nodes, output_dim)
    assert bool(jnp.all(jnp.isfinite(out)))
    assert bool(jnp.max(jnp.abs(out - ref)) < 5e-2), float(jnp.max(jnp.abs(out - ref)))

    # --- larger case: exercises the tiled projection + flash-attention path ---
    num_nodes2 = 300
    x2 = jax.random.normal(k_x2, (num_nodes2, input_dim), jnp.float32)
    e1 = jax.random.randint(k_e3, (2, 2048), 0, num_nodes2, jnp.int32)
    e2 = jax.random.randint(k_e4, (2, 1024), 0, num_nodes2, jnp.int32)
    adj2 = dense_adj_from_edge_index(e1, num_nodes2)
    adj2_cross = dense_adj_from_edge_index(e2, num_nodes2)
    out2 = jax.block_until_ready(model._forward_tiled(x2, adj2, adj2_cross))
    ref2 = cross_gat_reference(x2, adj2, adj2_cross, model.params, model.kinds,
                               output_dim)
    assert out2.shape == (num_nodes2, output_dim)
    assert bool(jnp.all(jnp.isfinite(out2)))
    assert bool(jnp.max(jnp.abs(out2 - ref2)) < 1.5e-1), float(jnp.max(jnp.abs(out2 - ref2)))

    print("KERNEL_OK")
</pallas_src>

<mosaic_0001>
module attributes {stable_mosaic.version = 11 : i64} {
  func.func @_fused_gat_kernel(%arg0: i32, %arg1: memref<128x128xf32, #tpu.memory_space<vmem>>, %arg2: memref<128x128xi8, #tpu.memory_space<vmem>>, %arg3: memref<128x128xi8, #tpu.memory_space<vmem>>, %arg4: memref<5x128x128xf32, #tpu.memory_space<vmem>>, %arg5: memref<5x1x128xf32, #tpu.memory_space<vmem>>, %arg6: memref<5x1x128xf32, #tpu.memory_space<vmem>>, %arg7: memref<5x1x128xf32, #tpu.memory_space<vmem>>, %arg8: memref<128x128xf32, #tpu.memory_space<vmem>>) attributes {dimension_semantics = [#tpu.dimension_semantics<arbitrary>], iteration_bounds = array<i64: 1>, scalar_prefetch = 0 : i64, scratch_operands = 0 : i64, tpu.core_type = #tpu.core_type<tc>, window_params = [{pipeline_mode = #tpu.pipeline_mode<synchronous>, transform_indices = @transform_0, window_bounds = array<i64: 128, 128>}, {pipeline_mode = #tpu.pipeline_mode<synchronous>, transform_indices = @transform_1, window_bounds = array<i64: 128, 128>}, {pipeline_mode = #tpu.pipeline_mode<synchronous>, transform_indices = @transform_2, window_bounds = array<i64: 128, 128>}, {pipeline_mode = #tpu.pipeline_mode<synchronous>, transform_indices = @transform_3, window_bounds = array<i64: 5, 128, 128>}, {pipeline_mode = #tpu.pipeline_mode<synchronous>, transform_indices = @transform_4, window_bounds = array<i64: 5, 1, 128>}, {pipeline_mode = #tpu.pipeline_mode<synchronous>, transform_indices = @transform_5, window_bounds = array<i64: 5, 1, 128>}, {pipeline_mode = #tpu.pipeline_mode<synchronous>, transform_indices = @transform_6, window_bounds = array<i64: 5, 1, 128>}, {pipeline_mode = #tpu.pipeline_mode<synchronous>, transform_indices = @transform_7, window_bounds = array<i64: 128, 128>}]} {
    %c0 = arith.constant 0 : index
    %c0_0 = arith.constant 0 : index
    %0 = vector.load %arg1[%c0, %c0_0] : memref<128x128xf32, #tpu.memory_space<vmem>>, vector<128x128xf32>
    %c0_1 = arith.constant 0 : index
    %c0_2 = arith.constant 0 : index
    %1 = vector.load %arg2[%c0_1, %c0_2] : memref<128x128xi8, #tpu.memory_space<vmem>>, vector<128x128xi8>
    %2 = arith.sitofp %1 : vector<128x128xi8> to vector<128x128xf32>
    %cst = arith.constant 0.000000e+00 : f32
    %3 = vector.broadcast %cst : f32 to vector<128x128xf32>
    %4 = arith.cmpf ogt, %2, %3 : vector<128x128xf32>
    %c0_3 = arith.constant 0 : index
    %c0_4 = arith.constant 0 : index
    %5 = vector.load %arg3[%c0_3, %c0_4] : memref<128x128xi8, #tpu.memory_space<vmem>>, vector<128x128xi8>
    %6 = arith.sitofp %5 : vector<128x128xi8> to vector<128x128xf32>
    %cst_5 = arith.constant 0.000000e+00 : f32
    %7 = vector.broadcast %cst_5 : f32 to vector<128x128xf32>
    %8 = arith.cmpf ogt, %6, %7 : vector<128x128xf32>
    %c0_6 = arith.constant 0 : index
    %c0_7 = arith.constant 0 : index
    %c0_8 = arith.constant 0 : index
    %9 = vector.load %arg4[%c0_6, %c0_7, %c0_8] : memref<5x128x128xf32, #tpu.memory_space<vmem>>, vector<1x128x128xf32>
    %10 = vector.shape_cast %9 : vector<1x128x128xf32> to vector<128x128xf32>
    %cst_9 = arith.constant dense<0.000000e+00> : vector<128x128xf32>
    %11 = tpu.matmul %0, %10, %cst_9 {dimension_numbers = #tpu.dot_dimension_numbers<[1], [0], [0], [1], [0, 0, 1, 1], [], []>} : vector<128x128xf32>, vector<128x128xf32>, vector<128x128xf32> -> vector<128x128xf32>
    %c0_10 = arith.constant 0 : index
    %c0_11 = arith.constant 0 : index
    %c0_12 = arith.constant 0 : index
    %12 = vector.load %arg5[%c0_10, %c0_11, %c0_12] : memref<5x1x128xf32, #tpu.memory_space<vmem>>, vector<1x1x128xf32>
    %13 = vector.shape_cast %12 : vector<1x1x128xf32> to vector<1x128xf32>
    %14 = tpu.transpose %11, [1, 0] : vector<128x128xf32> -> vector<128x128xf32>
    %cst_13 = arith.constant dense<0.000000e+00> : vector<1x128xf32>
    %15 = tpu.matmul %13, %14, %cst_13 {dimension_numbers = #tpu.dot_dimension_numbers<[1], [0], [0], [1], [0, 0, 1, 1], [], []>} : vector<1x128xf32>, vector<128x128xf32>, vector<1x128xf32> -> vector<1x128xf32>
    %c0_14 = arith.constant 0 : index
    %c0_15 = arith.constant 0 : index
    %c0_16 = arith.constant 0 : index
    %16 = vector.load %arg6[%c0_14, %c0_15, %c0_16] : memref<5x1x128xf32, #tpu.memory_space<vmem>>, vector<1x1x128xf32>
    %17 = vector.shape_cast %16 : vector<1x1x128xf32> to vector<1x128xf32>
    %18 = vector.broadcast %17 : vector<1x128xf32> to vector<128x128xf32>
    %19 = arith.mulf %11, %18 : vector<128x128xf32>
    %cst_17 = arith.constant dense<0.000000e+00> : vector<128xf32>
    %20 = vector.multi_reduction <add>, %19, %cst_17 [1] : vector<128x128xf32> to vector<128xf32>
    %21 = vector.shape_cast %20 : vector<128xf32> to vector<128x1xf32>
    %22 = vector.broadcast %21 : vector<128x1xf32> to vector<128x128xf32>
    %23 = vector.broadcast %15 : vector<1x128xf32> to vector<128x128xf32>
    %24 = arith.addf %22, %23 : vector<128x128xf32>
    %cst_18 = arith.constant 2.000000e-01 : f32
    %25 = vector.broadcast %cst_18 : f32 to vector<128x128xf32>
    %26 = arith.mulf %25, %24 : vector<128x128xf32>
    %27 = arith.maximumf %24, %26 : vector<128x128xf32>
    %cst_19 = arith.constant -1.000000e+30 : f32
    %28 = vector.broadcast %cst_19 : f32 to vector<128x128xf32>
    %29 = arith.select %4, %27, %28 : vector<128x128xi1>, vector<128x128xf32>
    %cst_20 = arith.constant dense<0xFF800000> : vector<128xf32>
    %30 = vector.multi_reduction <maximumf>, %29, %cst_20 [1] : vector<128x128xf32> to vector<128xf32>
    %31 = vector.shape_cast %30 : vector<128xf32> to vector<128x1xf32>
    %32 = vector.broadcast %31 : vector<128x1xf32> to vector<128x128xf32>
    %33 = arith.subf %29, %32 : vector<128x128xf32>
    %34 = math.exp %33 : vector<128x128xf32>
    %cst_21 = arith.constant dense<0.000000e+00> : vector<128xf32>
    %35 = vector.multi_reduction <add>, %34, %cst_21 [1] : vector<128x128xf32> to vector<128xf32>
    %36 = vector.shape_cast %35 : vector<128xf32> to vector<128x1xf32>
    %cst_22 = arith.constant dense<0.000000e+00> : vector<128x128xf32>
    %37 = tpu.matmul %34, %11, %cst_22 {dimension_numbers = #tpu.dot_dimension_numbers<[1], [0], [0], [1], [0, 0, 1, 1], [], []>} : vector<128x128xf32>, vector<128x128xf32>, vector<128x128xf32> -> vector<128x128xf32>
    %38 = vector.broadcast %36 : vector<128x1xf32> to vector<128x128xf32>
    %39 = arith.divf %37, %38 : vector<128x128xf32>
    %c0_23 = arith.constant 0 : index
    %c0_24 = arith.constant 0 : index
    %c0_25 = arith.constant 0 : index
    %40 = vector.load %arg7[%c0_23, %c0_24, %c0_25] : memref<5x1x128xf32, #tpu.memory_space<vmem>>, vector<1x1x128xf32>
    %41 = vector.shape_cast %40 : vector<1x1x128xf32> to vector<1x128xf32>
    %42 = vector.broadcast %41 : vector<1x128xf32> to vector<128x128xf32>
    %43 = arith.addf %39, %42 : vector<128x128xf32>
    %cst_26 = arith.constant 0.000000e+00 : f32
    %44 = vector.broadcast %cst_26 : f32 to vector<128x128xf32>
    %45 = arith.maximumf %43, %44 : vector<128x128xf32>
    %c1 = arith.constant 1 : index
    %c0_27 = arith.constant 0 : index
    %c0_28 = arith.constant 0 : index
    %46 = vector.load %arg4[%c1, %c0_27, %c0_28] : memref<5x128x128xf32, #tpu.memory_space<vmem>>, vector<1x128x128xf32>
    %47 = vector.shape_cast %46 : vector<1x128x128xf32> to vector<128x128xf32>
    %cst_29 = arith.constant dense<0.000000e+00> : vector<128x128xf32>
    %48 = tpu.matmul %45, %47, %cst_29 {dimension_numbers = #tpu.dot_dimension_numbers<[1], [0], [0], [1], [0, 0, 1, 1], [], []>} : vector<128x128xf32>, vector<128x128xf32>, vector<128x128xf32> -> vector<128x128xf32>
    %c1_30 = arith.constant 1 : index
    %c0_31 = arith.constant 0 : index
    %c0_32 = arith.constant 0 : index
    %49 = vector.load %arg5[%c1_30, %c0_31, %c0_32] : memref<5x1x128xf32, #tpu.memory_space<vmem>>, vector<1x1x128xf32>
    %50 = vector.shape_cast %49 : vector<1x1x128xf32> to vector<1x128xf32>
    %51 = tpu.transpose %48, [1, 0] : vector<128x128xf32> -> vector<128x128xf32>
    %cst_33 = arith.constant dense<0.000000e+00> : vector<1x128xf32>
    %52 = tpu.matmul %50, %51, %cst_33 {dimension_numbers = #tpu.dot_dimension_numbers<[1], [0], [0], [1], [0, 0, 1, 1], [], []>} : vector<1x128xf32>, vector<128x128xf32>, vector<1x128xf32> -> vector<1x128xf32>
    %c1_34 = arith.constant 1 : index
    %c0_35 = arith.constant 0 : index
    %c0_36 = arith.constant 0 : index
    %53 = vector.load %arg6[%c1_34, %c0_35, %c0_36] : memref<5x1x128xf32, #tpu.memory_space<vmem>>, vector<1x1x128xf32>
    %54 = vector.shape_cast %53 : vector<1x1x128xf32> to vector<1x128xf32>
    %55 = vector.broadcast %54 : vector<1x128xf32> to vector<128x128xf32>
    %56 = arith.mulf %48, %55 : vector<128x128xf32>
    %cst_37 = arith.constant dense<0.000000e+00> : vector<128xf32>
    %57 = vector.multi_reduction <add>, %56, %cst_37 [1] : vector<128x128xf32> to vector<128xf32>
    %58 = vector.shape_cast %57 : vector<128xf32> to vector<128x1xf32>
    %59 = vector.broadcast %58 : vector<128x1xf32> to vector<128x128xf32>
    %60 = vector.broadcast %52 : vector<1x128xf32> to vector<128x128xf32>
    %61 = arith.addf %59, %60 : vector<128x128xf32>
    %cst_38 = arith.constant 2.000000e-01 : f32
    %62 = vector.broadcast %cst_38 : f32 to vector<128x128xf32>
    %63 = arith.mulf %62, %61 : vector<128x128xf32>
    %64 = arith.maximumf %61, %63 : vector<128x128xf32>
    %cst_39 = arith.constant -1.000000e+30 : f32
    %65 = vector.broadcast %cst_39 : f32 to vector<128x128xf32>
    %66 = arith.select %8, %64, %65 : vector<128x128xi1>, vector<128x128xf32>
    %cst_40 = arith.constant dense<0xFF800000> : vector<128xf32>
    %67 = vector.multi_reduction <maximumf>, %66, %cst_40 [1] : vector<128x128xf32> to vector<128xf32>
    %68 = vector.shape_cast %67 : vector<128xf32> to vector<128x1xf32>
    %69 = vector.broadcast %68 : vector<128x1xf32> to vector<128x128xf32>
    %70 = arith.subf %66, %69 : vector<128x128xf32>
    %71 = math.exp %70 : vector<128x128xf32>
    %cst_41 = arith.constant dense<0.000000e+00> : vector<128xf32>
    %72 = vector.multi_reduction <add>, %71, %cst_41 [1] : vector<128x128xf32> to vector<128xf32>
    %73 = vector.shape_cast %72 : vector<128xf32> to vector<128x1xf32>
    %cst_42 = arith.constant dense<0.000000e+00> : vector<128x128xf32>
    %74 = tpu.matmul %71, %48, %cst_42 {dimension_numbers = #tpu.dot_dimension_numbers<[1], [0], [0], [1], [0, 0, 1, 1], [], []>} : vector<128x128xf32>, vector<128x128xf32>, vector<128x128xf32> -> vector<128x128xf32>
    %75 = vector.broadcast %73 : vector<128x1xf32> to vector<128x128xf32>
    %76 = arith.divf %74, %75 : vector<128x128xf32>
    %c1_43 = arith.constant 1 : index
    %c0_44 = arith.constant 0 : index
    %c0_45 = arith.constant 0 : index
    %77 = vector.load %arg7[%c1_43, %c0_44, %c0_45] : memref<5x1x128xf32, #tpu.memory_space<vmem>>, vector<1x1x128xf32>
    %78 = vector.shape_cast %77 : vector<1x1x128xf32> to vector<1x128xf32>
    %79 = vector.broadcast %78 : vector<1x128xf32> to vector<128x128xf32>
    %80 = arith.addf %76, %79 : vector<128x128xf32>
    %cst_46 = arith.constant 0.000000e+00 : f32
    %81 = vector.broadcast %cst_46 : f32 to vector<128x128xf32>
    %82 = arith.maximumf %80, %81 : vector<128x128xf32>
    %c2 = arith.constant 2 : index
    %c0_47 = arith.constant 0 : index
    %c0_48 = arith.constant 0 : index
    %83 = vector.load %arg4[%c2, %c0_47, %c0_48] : memref<5x128x128xf32, #tpu.memory_space<vmem>>, vector<1x128x128xf32>
    %84 = vector.shape_cast %83 : vector<1x128x128xf32> to vector<128x128xf32>
    %cst_49 = arith.constant dense<0.000000e+00> : vector<128x128xf32>
    %85 = tpu.matmul %82, %84, %cst_49 {dimension_numbers = #tpu.dot_dimension_numbers<[1], [0], [0], [1], [0, 0, 1, 1], [], []>} : vector<128x128xf32>, vector<128x128xf32>, vector<128x128xf32> -> vector<128x128xf32>
    %c2_50 = arith.constant 2 : index
    %c0_51 = arith.constant 0 : index
    %c0_52 = arith.constant 0 : index
    %86 = vector.load %arg5[%c2_50, %c0_51, %c0_52] : memref<5x1x128xf32, #tpu.memory_space<vmem>>, vector<1x1x128xf32>
    %87 = vector.shape_cast %86 : vector<1x1x128xf32> to vector<1x128xf32>
    %88 = tpu.transpose %85, [1, 0] : vector<128x128xf32> -> vector<128x128xf32>
    %cst_53 = arith.constant dense<0.000000e+00> : vector<1x128xf32>
    %89 = tpu.matmul %87, %88, %cst_53 {dimension_numbers = #tpu.dot_dimension_numbers<[1], [0], [0], [1], [0, 0, 1, 1], [], []>} : vector<1x128xf32>, vector<128x128xf32>, vector<1x128xf32> -> vector<1x128xf32>
    %c2_54 = arith.constant 2 : index
    %c0_55 = arith.constant 0 : index
    %c0_56 = arith.constant 0 : index
    %90 = vector.load %arg6[%c2_54, %c0_55, %c0_56] : memref<5x1x128xf32, #tpu.memory_space<vmem>>, vector<1x1x128xf32>
    %91 = vector.shape_cast %90 : vector<1x1x128xf32> to vector<1x128xf32>
    %92 = vector.broadcast %91 : vector<1x128xf32> to vector<128x128xf32>
    %93 = arith.mulf %85, %92 : vector<128x128xf32>
    %cst_57 = arith.constant dense<0.000000e+00> : vector<128xf32>
    %94 = vector.multi_reduction <add>, %93, %cst_57 [1] : vector<128x128xf32> to vector<128xf32>
    %95 = vector.shape_cast %94 : vector<128xf32> to vector<128x1xf32>
    %96 = vector.broadcast %95 : vector<128x1xf32> to vector<128x128xf32>
    %97 = vector.broadcast %89 : vector<1x128xf32> to vector<128x128xf32>
    %98 = arith.addf %96, %97 : vector<128x128xf32>
    %cst_58 = arith.constant 2.000000e-01 : f32
    %99 = vector.broadcast %cst_58 : f32 to vector<128x128xf32>
    %100 = arith.mulf %99, %98 : vector<128x128xf32>
    %101 = arith.maximumf %98, %100 : vector<128x128xf32>
    %cst_59 = arith.constant -1.000000e+30 : f32
    %102 = vector.broadcast %cst_59 : f32 to vector<128x128xf32>
    %103 = arith.select %4, %101, %102 : vector<128x128xi1>, vector<128x128xf32>
    %cst_60 = arith.constant dense<0xFF800000> : vector<128xf32>
    %104 = vector.multi_reduction <maximumf>, %103, %cst_60 [1] : vector<128x128xf32> to vector<128xf32>
    %105 = vector.shape_cast %104 : vector<128xf32> to vector<128x1xf32>
    %106 = vector.broadcast %105 : vector<128x1xf32> to vector<128x128xf32>
    %107 = arith.subf %103, %106 : vector<128x128xf32>
    %108 = math.exp %107 : vector<128x128xf32>
    %cst_61 = arith.constant dense<0.000000e+00> : vector<128xf32>
    %109 = vector.multi_reduction <add>, %108, %cst_61 [1] : vector<128x128xf32> to vector<128xf32>
    %110 = vector.shape_cast %109 : vector<128xf32> to vector<128x1xf32>
    %cst_62 = arith.constant dense<0.000000e+00> : vector<128x128xf32>
    %111 = tpu.matmul %108, %85, %cst_62 {dimension_numbers = #tpu.dot_dimension_numbers<[1], [0], [0], [1], [0, 0, 1, 1], [], []>} : vector<128x128xf32>, vector<128x128xf32>, vector<128x128xf32> -> vector<128x128xf32>
    %112 = vector.broadcast %110 : vector<128x1xf32> to vector<128x128xf32>
    %113 = arith.divf %111, %112 : vector<128x128xf32>
    %c2_63 = arith.constant 2 : index
    %c0_64 = arith.constant 0 : index
    %c0_65 = arith.constant 0 : index
    %114 = vector.load %arg7[%c2_63, %c0_64, %c0_65] : memref<5x1x128xf32, #tpu.memory_space<vmem>>, vector<1x1x128xf32>
    %115 = vector.shape_cast %114 : vector<1x1x128xf32> to vector<1x128xf32>
    %116 = vector.broadcast %115 : vector<1x128xf32> to vector<128x128xf32>
    %117 = arith.addf %113, %116 : vector<128x128xf32>
    %cst_66 = arith.constant 0.000000e+00 : f32
    %118 = vector.broadcast %cst_66 : f32 to vector<128x128xf32>
    %119 = arith.maximumf %117, %118 : vector<128x128xf32>
    %c3 = arith.constant 3 : index
    %c0_67 = arith.constant 0 : index
    %c0_68 = arith.constant 0 : index
    %120 = vector.load %arg4[%c3, %c0_67, %c0_68] : memref<5x128x128xf32, #tpu.memory_space<vmem>>, vector<1x128x128xf32>
    %121 = vector.shape_cast %120 : vector<1x128x128xf32> to vector<128x128xf32>
    %cst_69 = arith.constant dense<0.000000e+00> : vector<128x128xf32>
    %122 = tpu.matmul %119, %121, %cst_69 {dimension_numbers = #tpu.dot_dimension_numbers<[1], [0], [0], [1], [0, 0, 1, 1], [], []>} : vector<128x128xf32>, vector<128x128xf32>, vector<128x128xf32> -> vector<128x128xf32>
    %c3_70 = arith.constant 3 : index
    %c0_71 = arith.constant 0 : index
    %c0_72 = arith.constant 0 : index
    %123 = vector.load %arg5[%c3_70, %c0_71, %c0_72] : memref<5x1x128xf32, #tpu.memory_space<vmem>>, vector<1x1x128xf32>
    %124 = vector.shape_cast %123 : vector<1x1x128xf32> to vector<1x128xf32>
    %125 = tpu.transpose %122, [1, 0] : vector<128x128xf32> -> vector<128x128xf32>
    %cst_73 = arith.constant dense<0.000000e+00> : vector<1x128xf32>
    %126 = tpu.matmul %124, %125, %cst_73 {dimension_numbers = #tpu.dot_dimension_numbers<[1], [0], [0], [1], [0, 0, 1, 1], [], []>} : vector<1x128xf32>, vector<128x128xf32>, vector<1x128xf32> -> vector<1x128xf32>
    %c3_74 = arith.constant 3 : index
    %c0_75 = arith.constant 0 : index
    %c0_76 = arith.constant 0 : index
    %127 = vector.load %arg6[%c3_74, %c0_75, %c0_76] : memref<5x1x128xf32, #tpu.memory_space<vmem>>, vector<1x1x128xf32>
    %128 = vector.shape_cast %127 : vector<1x1x128xf32> to vector<1x128xf32>
    %129 = vector.broadcast %128 : vector<1x128xf32> to vector<128x128xf32>
    %130 = arith.mulf %122, %129 : vector<128x128xf32>
    %cst_77 = arith.constant dense<0.000000e+00> : vector<128xf32>
    %131 = vector.multi_reduction <add>, %130, %cst_77 [1] : vector<128x128xf32> to vector<128xf32>
    %132 = vector.shape_cast %131 : vector<128xf32> to vector<128x1xf32>
    %133 = vector.broadcast %132 : vector<128x1xf32> to vector<128x128xf32>
    %134 = vector.broadcast %126 : vector<1x128xf32> to vector<128x128xf32>
    %135 = arith.addf %133, %134 : vector<128x128xf32>
    %cst_78 = arith.constant 2.000000e-01 : f32
    %136 = vector.broadcast %cst_78 : f32 to vector<128x128xf32>
    %137 = arith.mulf %136, %135 : vector<128x128xf32>
    %138 = arith.maximumf %135, %137 : vector<128x128xf32>
    %cst_79 = arith.constant -1.000000e+30 : f32
    %139 = vector.broadcast %cst_79 : f32 to vector<128x128xf32>
    %140 = arith.select %8, %138, %139 : vector<128x128xi1>, vector<128x128xf32>
    %cst_80 = arith.constant dense<0xFF800000> : vector<128xf32>
    %141 = vector.multi_reduction <maximumf>, %140, %cst_80 [1] : vector<128x128xf32> to vector<128xf32>
    %142 = vector.shape_cast %141 : vector<128xf32> to vector<128x1xf32>
    %143 = vector.broadcast %142 : vector<128x1xf32> to vector<128x128xf32>
    %144 = arith.subf %140, %143 : vector<128x128xf32>
    %145 = math.exp %144 : vector<128x128xf32>
    %cst_81 = arith.constant dense<0.000000e+00> : vector<128xf32>
    %146 = vector.multi_reduction <add>, %145, %cst_81 [1] : vector<128x128xf32> to vector<128xf32>
    %147 = vector.shape_cast %146 : vector<128xf32> to vector<128x1xf32>
    %cst_82 = arith.constant dense<0.000000e+00> : vector<128x128xf32>
    %148 = tpu.matmul %145, %122, %cst_82 {dimension_numbers = #tpu.dot_dimension_numbers<[1], [0], [0], [1], [0, 0, 1, 1], [], []>} : vector<128x128xf32>, vector<128x128xf32>, vector<128x128xf32> -> vector<128x128xf32>
    %149 = vector.broadcast %147 : vector<128x1xf32> to vector<128x128xf32>
    %150 = arith.divf %148, %149 : vector<128x128xf32>
    %c3_83 = arith.constant 3 : index
    %c0_84 = arith.constant 0 : index
    %c0_85 = arith.constant 0 : index
    %151 = vector.load %arg7[%c3_83, %c0_84, %c0_85] : memref<5x1x128xf32, #tpu.memory_space<vmem>>, vector<1x1x128xf32>
    %152 = vector.shape_cast %151 : vector<1x1x128xf32> to vector<1x128xf32>
    %153 = vector.broadcast %152 : vector<1x128xf32> to vector<128x128xf32>
    %154 = arith.addf %150, %153 : vector<128x128xf32>
    %cst_86 = arith.constant 0.000000e+00 : f32
    %155 = vector.broadcast %cst_86 : f32 to vector<128x128xf32>
    %156 = arith.maximumf %154, %155 : vector<128x128xf32>
    %c4 = arith.constant 4 : index
    %c0_87 = arith.constant 0 : index
    %c0_88 = arith.constant 0 : index
    %157 = vector.load %arg4[%c4, %c0_87, %c0_88] : memref<5x128x128xf32, #tpu.memory_space<vmem>>, vector<1x128x128xf32>
    %158 = vector.shape_cast %157 : vector<1x128x128xf32> to vector<128x128xf32>
    %cst_89 = arith.constant dense<0.000000e+00> : vector<128x128xf32>
    %159 = tpu.matmul %156, %158, %cst_89 {dimension_numbers = #tpu.dot_dimension_numbers<[1], [0], [0], [1], [0, 0, 1, 1], [], []>} : vector<128x128xf32>, vector<128x128xf32>, vector<128x128xf32> -> vector<128x128xf32>
    %c4_90 = arith.constant 4 : index
    %c0_91 = arith.constant 0 : index
    %c0_92 = arith.constant 0 : index
    %160 = vector.load %arg5[%c4_90, %c0_91, %c0_92] : memref<5x1x128xf32, #tpu.memory_space<vmem>>, vector<1x1x128xf32>
    %161 = vector.shape_cast %160 : vector<1x1x128xf32> to vector<1x128xf32>
    %162 = tpu.transpose %159, [1, 0] : vector<128x128xf32> -> vector<128x128xf32>
    %cst_93 = arith.constant dense<0.000000e+00> : vector<1x128xf32>
    %163 = tpu.matmul %161, %162, %cst_93 {dimension_numbers = #tpu.dot_dimension_numbers<[1], [0], [0], [1], [0, 0, 1, 1], [], []>} : vector<1x128xf32>, vector<128x128xf32>, vector<1x128xf32> -> vector<1x128xf32>
    %c4_94 = arith.constant 4 : index
    %c0_95 = arith.constant 0 : index
    %c0_96 = arith.constant 0 : index
    %164 = vector.load %arg6[%c4_94, %c0_95, %c0_96] : memref<5x1x128xf32, #tpu.memory_space<vmem>>, vector<1x1x128xf32>
    %165 = vector.shape_cast %164 : vector<1x1x128xf32> to vector<1x128xf32>
    %166 = vector.broadcast %165 : vector<1x128xf32> to vector<128x128xf32>
    %167 = arith.mulf %159, %166 : vector<128x128xf32>
    %cst_97 = arith.constant dense<0.000000e+00> : vector<128xf32>
    %168 = vector.multi_reduction <add>, %167, %cst_97 [1] : vector<128x128xf32> to vector<128xf32>
    %169 = vector.shape_cast %168 : vector<128xf32> to vector<128x1xf32>
    %170 = vector.broadcast %169 : vector<128x1xf32> to vector<128x128xf32>
    %171 = vector.broadcast %163 : vector<1x128xf32> to vector<128x128xf32>
    %172 = arith.addf %170, %171 : vector<128x128xf32>
    %cst_98 = arith.constant 2.000000e-01 : f32
    %173 = vector.broadcast %cst_98 : f32 to vector<128x128xf32>
    %174 = arith.mulf %173, %172 : vector<128x128xf32>
    %175 = arith.maximumf %172, %174 : vector<128x128xf32>
    %cst_99 = arith.constant -1.000000e+30 : f32
    %176 = vector.broadcast %cst_99 : f32 to vector<128x128xf32>
    %177 = arith.select %4, %175, %176 : vector<128x128xi1>, vector<128x128xf32>
    %cst_100 = arith.constant dense<0xFF800000> : vector<128xf32>
    %178 = vector.multi_reduction <maximumf>, %177, %cst_100 [1] : vector<128x128xf32> to vector<128xf32>
    %179 = vector.shape_cast %178 : vector<128xf32> to vector<128x1xf32>
    %180 = vector.broadcast %179 : vector<128x1xf32> to vector<128x128xf32>
    %181 = arith.subf %177, %180 : vector<128x128xf32>
    %182 = math.exp %181 : vector<128x128xf32>
    %cst_101 = arith.constant dense<0.000000e+00> : vector<128xf32>
    %183 = vector.multi_reduction <add>, %182, %cst_101 [1] : vector<128x128xf32> to vector<128xf32>
    %184 = vector.shape_cast %183 : vector<128xf32> to vector<128x1xf32>
    %cst_102 = arith.constant dense<0.000000e+00> : vector<128x128xf32>
    %185 = tpu.matmul %182, %159, %cst_102 {dimension_numbers = #tpu.dot_dimension_numbers<[1], [0], [0], [1], [0, 0, 1, 1], [], []>} : vector<128x128xf32>, vector<128x128xf32>, vector<128x128xf32> -> vector<128x128xf32>
    %186 = vector.broadcast %184 : vector<128x1xf32> to vector<128x128xf32>
    %187 = arith.divf %185, %186 : vector<128x128xf32>
    %c4_103 = arith.constant 4 : index
    %c0_104 = arith.constant 0 : index
    %c0_105 = arith.constant 0 : index
    %188 = vector.load %arg7[%c4_103, %c0_104, %c0_105] : memref<5x1x128xf32, #tpu.memory_space<vmem>>, vector<1x1x128xf32>
    %189 = vector.shape_cast %188 : vector<1x1x128xf32> to vector<1x128xf32>
    %190 = vector.broadcast %189 : vector<1x128xf32> to vector<128x128xf32>
    %191 = arith.addf %187, %190 : vector<128x128xf32>
    %c0_106 = arith.constant 0 : index
    %c0_107 = arith.constant 0 : index
    %192 = vector.load %arg8[%c0_106, %c0_107] : memref<128x128xf32, #tpu.memory_space<vmem>>, vector<128x128xf32>
    tpu.vector_store %arg8[%c0_106, %c0_107], %191 {strides = array<i32>} : memref<128x128xf32, #tpu.memory_space<vmem>>, vector<128x128xf32>,
    return
  }
  func.func @transform_0(%arg0: i32) -> (i32, i32) {
    %c0_i32 = arith.constant 0 : i32
    %c0_i32_0 = arith.constant 0 : i32
    %c0_i32_1 = arith.constant 0 : i32
    return %c0_i32, %c0_i32_0 : i32, i32
  }
  func.func @transform_1(%arg0: i32) -> (i32, i32) {
    %c0_i32 = arith.constant 0 : i32
    %c0_i32_0 = arith.constant 0 : i32
    %c0_i32_1 = arith.constant 0 : i32
    return %c0_i32, %c0_i32_0 : i32, i32
  }
  func.func @transform_2(%arg0: i32) -> (i32, i32) {
    %c0_i32 = arith.constant 0 : i32
    %c0_i32_0 = arith.constant 0 : i32
    %c0_i32_1 = arith.constant 0 : i32
    return %c0_i32, %c0_i32_0 : i32, i32
  }
  func.func @transform_3(%arg0: i32) -> (i32, i32, i32) {
    %c0_i32 = arith.constant 0 : i32
    %c0_i32_0 = arith.constant 0 : i32
    %c0_i32_1 = arith.constant 0 : i32
    %c0_i32_2 = arith.constant 0 : i32
    return %c0_i32, %c0_i32_0, %c0_i32_1 : i32, i32, i32
  }
  func.func @transform_4(%arg0: i32) -> (i32, i32, i32) {
    %c0_i32 = arith.constant 0 : i32
    %c0_i32_0 = arith.constant 0 : i32
    %c0_i32_1 = arith.constant 0 : i32
    %c0_i32_2 = arith.constant 0 : i32
    return %c0_i32, %c0_i32_0, %c0_i32_1 : i32, i32, i32
  }
  func.func @transform_5(%arg0: i32) -> (i32, i32, i32) {
    %c0_i32 = arith.constant 0 : i32
    %c0_i32_0 = arith.constant 0 : i32
    %c0_i32_1 = arith.constant 0 : i32
    %c0_i32_2 = arith.constant 0 : i32
    return %c0_i32, %c0_i32_0, %c0_i32_1 : i32, i32, i32
  }
  func.func @transform_6(%arg0: i32) -> (i32, i32, i32) {
    %c0_i32 = arith.constant 0 : i32
    %c0_i32_0 = arith.constant 0 : i32
    %c0_i32_1 = arith.constant 0 : i32
    %c0_i32_2 = arith.constant 0 : i32
    return %c0_i32, %c0_i32_0, %c0_i32_1 : i32, i32, i32
  }
  func.func @transform_7(%arg0: i32) -> (i32, i32) {
    %c0_i32 = arith.constant 0 : i32
    %c0_i32_0 = arith.constant 0 : i32
    %c0_i32_1 = arith.constant 0 : i32
    return %c0_i32, %c0_i32_0 : i32, i32
  }
}

</mosaic_0001>

<llo_original>
// kernel: tpu_custom_call.1
$region0: #{tpu_custom_call.1}
  #allocation0 [shape = 'u32[]', space=smem, size = 0x4, offset = 0x4, fixed_abs, tag = 'smem constant byte address 0x4 - core index']
  #allocation1 [shape = 'u32[144,128]{1,0:T(1,128)}', space=vmem, size = 0x12000, scoped, tag = 'internal scratch']
  %s0 = inlined_call_operand.hbm [shape: f32[128,128], index: 0, kind: input, shape index: {}]
  %s1 = inlined_call_operand.hbm [shape: s8[128,128], index: 1, kind: input, shape index: {}]
  %s2 = inlined_call_operand.hbm [shape: s8[128,128], index: 2, kind: input, shape index: {}]
  %s3 = inlined_call_operand.hbm [shape: f32[5,128,128], index: 3, kind: input, shape index: {}]
  %s4 = inlined_call_operand.vmem [shape: f32[5,1,128], index: 4, kind: input, shape index: {}]
  %s5 = inlined_call_operand.hbm [shape: f32[5,1,128], index: 5, kind: input, shape index: {}]
  %s6 = inlined_call_operand.vmem [shape: f32[5,1,128], index: 6, kind: input, shape index: {}]
  %s7 = inlined_call_operand.hbm [shape: f32[128,128], index: 7, kind: output, shape index: {}]
  %s8 = sld [smem:[#allocation0]]
  $region58: #{tpu_custom_call.1} parent=0
    _
  %s10 = ssub.s32 1, %s8
  %s11 = scalar_select 0, %s10, %s8
  $region1: #{tpu_custom_call.1} parent=0
    #allocation2 [shape = 'u8[65536]{0}', space=vmem, size = 0x10000, scoped, tag = 'input window, operand 0, single buffered']
    #allocation3 [shape = 's32[1]{0}', space=sflag, size = 0x4, scoped, tag = 'scoped memory for tpu_custom_call.1']
    #allocation4 [shape = 's32[1]{0}', space=sflag, size = 0x4, scoped, tag = 'scoped memory for tpu_custom_call.1']
    #allocation5 [shape = 'u8[16384]{0}', space=vmem, size = 0x4000, scoped, tag = 'input window, operand 1, single buffered']
    #allocation6 [shape = 's32[1]{0}', space=sflag, size = 0x4, scoped, tag = 'scoped memory for tpu_custom_call.1']
    #allocation7 [shape = 'u8[16384]{0}', space=vmem, size = 0x4000, scoped, tag = 'input window, operand 2, single buffered']
    #allocation8 [shape = 'u8[327680]{0}', space=vmem, size = 0x50000, scoped, tag = 'input window, operand 3, single buffered']
    #allocation9 [shape = 's32[1]{0}', space=sflag, size = 0x4, scoped, tag = 'scoped memory for tpu_custom_call.1']
    #allocation10 [shape = 'u8[2560]{0}', space=vmem, size = 0xc00, scoped, tag = 'input window, operand 5, single buffered']
    #allocation11 [shape = 'u8[65536]{0}', space=vmem, size = 0x10000, scoped, tag = 'output window, operand 0, single buffered']
    %12 = vsyncpa [#allocation3], 0
    %13 = vsyncpa [#allocation6], 0
    %14 = vsyncpa [#allocation9], 0
    %15 = vsyncpa [#allocation4], 0
    // Predicated region
    $region2: #{tpu_custom_call.1} parent=1 // pred_check
      _
    $region3: #{tpu_custom_call.1} parent=1 // pred_check_branch
      %17 = sbr.rel (0) target = $region5
    $region4: #{tpu_custom_call.1} parent=1 // pred_region
      %s19 = ssub.s32 2048, 2048
      %20 = vsyncadd [#allocation3], %s19
      %s21 = sshll.u32 [#allocation2], 4
      %s22 = int_to_ptr.vmem [resolvable:$true] %s21
      %27 = dma.hbm_to_vmem [thread:$0]  %s0, 2048, %s22, [#allocation3], 128, 128, 8
    $region5: #{tpu_custom_call.1} parent=1 // pred_fallthru
      _
    // Predicated region
    $region6: #{tpu_custom_call.1} parent=1 // pred_check
      _
    $region7: #{tpu_custom_call.1} parent=1 // pred_check_branch
      %29 = sbr.rel (0) target = $region9
    $region8: #{tpu_custom_call.1} parent=1 // pred_region
      %s31 = ssub.s32 512, 512
      %32 = vsyncadd [#allocation6], %s31
      %s33 = sshll.u32 [#allocation5], 4
      %s34 = int_to_ptr.vmem [resolvable:$true] %s33
      %39 = dma.hbm_to_vmem [thread:$0]  %s1, 512, %s34, [#allocation6], 128, 128, 8
    $region9: #{tpu_custom_call.1} parent=1 // pred_fallthru
      _
    // Predicated region
    $region10: #{tpu_custom_call.1} parent=1 // pred_check
      _
    $region11: #{tpu_custom_call.1} parent=1 // pred_check_branch
      %41 = sbr.rel (0) target = $region13
    $region12: #{tpu_custom_call.1} parent=1 // pred_region
      %s43 = ssub.s32 512, 512
      %44 = vsyncadd [#allocation6], %s43
      %s45 = sshll.u32 [#allocation7], 4
      %s46 = int_to_ptr.vmem [resolvable:$true] %s45
      %51 = dma.hbm_to_vmem [thread:$0]  %s2, 512, %s46, [#allocation6], 128, 128, 8
    $region13: #{tpu_custom_call.1} parent=1 // pred_fallthru
      _
    // Predicated region
    $region14: #{tpu_custom_call.1} parent=1 // pred_check
      _
    $region15: #{tpu_custom_call.1} parent=1 // pred_check_branch
      %53 = sbr.rel (0) target = $region17
    $region16: #{tpu_custom_call.1} parent=1 // pred_region
      %s55 = ssub.s32 10240, 10240
      %56 = vsyncadd [#allocation9], %s55
      %s57 = sshll.u32 [#allocation8], 4
      %s58 = int_to_ptr.vmem [resolvable:$true] %s57
      %63 = dma.hbm_to_vmem [thread:$0]  %s3, 10240, %s58, [#allocation9], 128, 128, 8
    $region17: #{tpu_custom_call.1} parent=1 // pred_fallthru
      _
    // Predicated region
    $region18: #{tpu_custom_call.1} parent=1 // pred_check
      _
    $region19: #{tpu_custom_call.1} parent=1 // pred_check_branch
      %65 = sbr.rel (0) target = $region21
    $region20: #{tpu_custom_call.1} parent=1 // pred_region
      _
    $region21: #{tpu_custom_call.1} parent=1 // pred_fallthru
      _
    // Predicated region
    $region22: #{tpu_custom_call.1} parent=1 // pred_check
      _
    $region23: #{tpu_custom_call.1} parent=1 // pred_check_branch
      %67 = sbr.rel (0) target = $region25
    $region24: #{tpu_custom_call.1} parent=1 // pred_region
      %s69 = ssub.s32 80, 80
      %70 = vsyncadd [#allocation9], %s69
      %s71 = sshll.u32 [#allocation10], 4
      %s72 = int_to_ptr.vmem [resolvable:$true] %s71
      %77 = dma.hbm_to_vmem [thread:$0]  %s5, 80, %s72, [#allocation9], 16, 16, 1
    $region25: #{tpu_custom_call.1} parent=1 // pred_fallthru
      _
    // Predicated region
    $region26: #{tpu_custom_call.1} parent=1 // pred_check
      _
    $region27: #{tpu_custom_call.1} parent=1 // pred_check_branch
      %79 = sbr.rel (0) target = $region29
    $region28: #{tpu_custom_call.1} parent=1 // pred_region
      _
    $region29: #{tpu_custom_call.1} parent=1 // pred_fallthru
      _
    // Predicated region
    $region30: #{tpu_custom_call.1} parent=1 // pred_check
      _
    $region31: #{tpu_custom_call.1} parent=1 // pred_check_branch
      %81 = sbr.rel (0) target = $region33
    $region32: #{tpu_custom_call.1} parent=1 // pred_region
      %82 = dma.done [#allocation3], 2048
    $region33: #{tpu_custom_call.1} parent=1 // pred_fallthru
      _
    // Predicated region
    $region34: #{tpu_custom_call.1} parent=1 // pred_check
      _
    $region35: #{tpu_custom_call.1} parent=1 // pred_check_branch
      %84 = sbr.rel (0) target = $region37
    $region36: #{tpu_custom_call.1} parent=1 // pred_region
      %85 = dma.done [#allocation6], 512
    $region37: #{tpu_custom_call.1} parent=1 // pred_fallthru
      _
    // Predicated region
    $region38: #{tpu_custom_call.1} parent=1 // pred_check
      _
    $region39: #{tpu_custom_call.1} parent=1 // pred_check_branch
      %87 = sbr.rel (0) target = $region41
    $region40: #{tpu_custom_call.1} parent=1 // pred_region
      %88 = dma.done [#allocation6], 512
    $region41: #{tpu_custom_call.1} parent=1 // pred_fallthru
      _
    // Predicated region
    $region42: #{tpu_custom_call.1} parent=1 // pred_check
      _
    $region43: #{tpu_custom_call.1} parent=1 // pred_check_branch
      %90 = sbr.rel (0) target = $region45
    $region44: #{tpu_custom_call.1} parent=1 // pred_region
      %91 = dma.done [#allocation9], 10240
    $region45: #{tpu_custom_call.1} parent=1 // pred_fallthru
      _
    // Predicated region
    $region46: #{tpu_custom_call.1} parent=1 // pred_check
      _
    $region47: #{tpu_custom_call.1} parent=1 // pred_check_branch
      %93 = sbr.rel (0) target = $region49
    $region48: #{tpu_custom_call.1} parent=1 // pred_region
      %94 = dma.done [#allocation9], 80
    $region49: #{tpu_custom_call.1} parent=1 // pred_fallthru
      _
    %v95 = vld [vmem:[#allocation2] sm:$0xff]
    %v96 = vld [vmem:[#allocation2 + $0x8] sm:$0xff]
    %v97 = vld [vmem:[#allocation2 + $0x10] sm:$0xff]
    %v98 = vld [vmem:[#allocation2 + $0x18] sm:$0xff]
    %v99 = vld [vmem:[#allocation2 + $0x20] sm:$0xff]
    %v100 = vld [vmem:[#allocation2 + $0x28] sm:$0xff]
    %v101 = vld [vmem:[#allocation2 + $0x30] sm:$0xff]
    %v102 = vld [vmem:[#allocation2 + $0x38] sm:$0xff]
    %v103 = vld [vmem:[#allocation2 + $0x40] sm:$0xff]
    %v104 = vld [vmem:[#allocation2 + $0x48] sm:$0xff]
    %v105 = vld [vmem:[#allocation2 + $0x50] sm:$0xff]
    %v106 = vld [vmem:[#allocation2 + $0x58] sm:$0xff]
    %v107 = vld [vmem:[#allocation2 + $0x60] sm:$0xff]
    %v108 = vld [vmem:[#allocation2 + $0x68] sm:$0xff]
    %v109 = vld [vmem:[#allocation2 + $0x70] sm:$0xff]
    %v110 = vld [vmem:[#allocation2 + $0x78] sm:$0xff]
    %v111 = vld [vmem:[#allocation5] sm:$0xff]
    %v112 = vld [vmem:[#allocation5 + $0x8] sm:$0xff]
    %v113 = vld [vmem:[#allocation5 + $0x10] sm:$0xff]
    %v114 = vld [vmem:[#allocation5 + $0x18] sm:$0xff]
    %v115 = vunpack.c.0.s8 %v111
    %v116 = vunpack.c.1.s8 %v111
    %v117 = vunpack.c.2.s8 %v111
    %v118 = vunpack.c.3.s8 %v111
    %v119 = vunpack.c.0.s8 %v112
    %v120 = vunpack.c.1.s8 %v112
    %v121 = vunpack.c.2.s8 %v112
    %v122 = vunpack.c.3.s8 %v112
    %v123 = vunpack.c.0.s8 %v113
    %v124 = vunpack.c.1.s8 %v113
    %v125 = vunpack.c.2.s8 %v113
    %v126 = vunpack.c.3.s8 %v113
    %v127 = vunpack.c.0.s8 %v114
    %v128 = vunpack.c.1.s8 %v114
    %v129 = vunpack.c.2.s8 %v114
    %v130 = vunpack.c.3.s8 %v114
    %v131 = vcvt.s32.f32 %v115
    %v132 = vcvt.s32.f32 %v116
    %v133 = vcvt.s32.f32 %v117
    %v134 = vcvt.s32.f32 %v118
    %v135 = vcvt.s32.f32 %v119
    %v136 = vcvt.s32.f32 %v120
    %v137 = vcvt.s32.f32 %v121
    %v138 = vcvt.s32.f32 %v122
    %v139 = vcvt.s32.f32 %v123
    %v140 = vcvt.s32.f32 %v124
    %v141 = vcvt.s32.f32 %v125
    %v142 = vcvt.s32.f32 %v126
    %v143 = vcvt.s32.f32 %v127
    %v144 = vcvt.s32.f32 %v128
    %v145 = vcvt.s32.f32 %v129
    %v146 = vcvt.s32.f32 %v130
    %vm147 = vcmp.gt.f32.partialorder %v131, 0.0
    %vm148 = vcmp.gt.f32.partialorder %v132, 0.0
    %vm149 = vcmp.gt.f32.partialorder %v133, 0.0
    %vm150 = vcmp.gt.f32.partialorder %v134, 0.0
    %vm151 = vcmp.gt.f32.partialorder %v135, 0.0
    %vm152 = vcmp.gt.f32.partialorder %v136, 0.0
    %vm153 = vcmp.gt.f32.partialorder %v137, 0.0
    %vm154 = vcmp.gt.f32.partialorder %v138, 0.0
    %vm155 = vcmp.gt.f32.partialorder %v139, 0.0
    %vm156 = vcmp.gt.f32.partialorder %v140, 0.0
    %vm157 = vcmp.gt.f32.partialorder %v141, 0.0
    %vm158 = vcmp.gt.f32.partialorder %v142, 0.0
    %vm159 = vcmp.gt.f32.partialorder %v143, 0.0
    %vm160 = vcmp.gt.f32.partialorder %v144, 0.0
    %vm161 = vcmp.gt.f32.partialorder %v145, 0.0
    %vm162 = vcmp.gt.f32.partialorder %v146, 0.0
    %v163 = vld [vmem:[#allocation7] sm:$0xff]
    %v164 = vld [vmem:[#allocation7 + $0x8] sm:$0xff]
    %v165 = vld [vmem:[#allocation7 + $0x10] sm:$0xff]
    %v166 = vld [vmem:[#allocation7 + $0x18] sm:$0xff]
    %v167 = vunpack.c.0.s8 %v163
    %v168 = vunpack.c.1.s8 %v163
    %v169 = vunpack.c.2.s8 %v163
    %v170 = vunpack.c.3.s8 %v163
    %v171 = vunpack.c.0.s8 %v164
    %v172 = vunpack.c.1.s8 %v164
    %v173 = vunpack.c.2.s8 %v164
    %v174 = vunpack.c.3.s8 %v164
    %v175 = vunpack.c.0.s8 %v165
    %v176 = vunpack.c.1.s8 %v165
    %v177 = vunpack.c.2.s8 %v165
    %v178 = vunpack.c.3.s8 %v165
    %v179 = vunpack.c.0.s8 %v166
    %v180 = vunpack.c.1.s8 %v166
    %v181 = vunpack.c.2.s8 %v166
    %v182 = vunpack.c.3.s8 %v166
    %v183 = vcvt.s32.f32 %v167
    %v184 = vcvt.s32.f32 %v168
    %v185 = vcvt.s32.f32 %v169
    %v186 = vcvt.s32.f32 %v170
    %v187 = vcvt.s32.f32 %v171
    %v188 = vcvt.s32.f32 %v172
    %v189 = vcvt.s32.f32 %v173
    %v190 = vcvt.s32.f32 %v174
    %v191 = vcvt.s32.f32 %v175
    %v192 = vcvt.s32.f32 %v176
    %v193 = vcvt.s32.f32 %v177
    %v194 = vcvt.s32.f32 %v178
    %v195 = vcvt.s32.f32 %v179
    %v196 = vcvt.s32.f32 %v180
    %v197 = vcvt.s32.f32 %v181
    %v198 = vcvt.s32.f32 %v182
    %vm199 = vcmp.gt.f32.partialorder %v183, 0.0
    %vm200 = vcmp.gt.f32.partialorder %v184, 0.0
    %vm201 = vcmp.gt.f32.partialorder %v185, 0.0
    %vm202 = vcmp.gt.f32.partialorder %v186, 0.0
    %vm203 = vcmp.gt.f32.partialorder %v187, 0.0
    %vm204 = vcmp.gt.f32.partialorder %v188, 0.0
    %vm205 = vcmp.gt.f32.partialorder %v189, 0.0
    %vm206 = vcmp.gt.f32.partialorder %v190, 0.0
    %vm207 = vcmp.gt.f32.partialorder %v191, 0.0
    %vm208 = vcmp.gt.f32.partialorder %v192, 0.0
    %vm209 = vcmp.gt.f32.partialorder %v193, 0.0
    %vm210 = vcmp.gt.f32.partialorder %v194, 0.0
    %vm211 = vcmp.gt.f32.partialorder %v195, 0.0
    %vm212 = vcmp.gt.f32.partialorder %v196, 0.0
    %vm213 = vcmp.gt.f32.partialorder %v197, 0.0
    %vm214 = vcmp.gt.f32.partialorder %v198, 0.0
    %v215 = vld [vmem:[#allocation8] sm:$0xff]
    %v216 = vld [vmem:[#allocation8 + $0x8] sm:$0xff]
    %v217 = vld [vmem:[#allocation8 + $0x10] sm:$0xff]
    %v218 = vld [vmem:[#allocation8 + $0x18] sm:$0xff]
    %v219 = vld [vmem:[#allocation8 + $0x20] sm:$0xff]
    %v220 = vld [vmem:[#allocation8 + $0x28] sm:$0xff]
    %v221 = vld [vmem:[#allocation8 + $0x30] sm:$0xff]
    %v222 = vld [vmem:[#allocation8 + $0x38] sm:$0xff]
    %v223 = vld [vmem:[#allocation8 + $0x40] sm:$0xff]
    %v224 = vld [vmem:[#allocation8 + $0x48] sm:$0xff]
    %v225 = vld [vmem:[#allocation8 + $0x50] sm:$0xff]
    %v226 = vld [vmem:[#allocation8 + $0x58] sm:$0xff]
    %v227 = vld [vmem:[#allocation8 + $0x60] sm:$0xff]
    %v228 = vld [vmem:[#allocation8 + $0x68] sm:$0xff]
    %v229 = vld [vmem:[#allocation8 + $0x70] sm:$0xff]
    %v230 = vld [vmem:[#allocation8 + $0x78] sm:$0xff]
    %231 = vmatprep.subr.mxu0 0.0
    %232 = vmatpush1.msra.mxu0 %v230
    %233 = vmatprep.subr.mxu0 0.0
    %234 = vmatpush1.msra.mxu0 %v229
    %235 = vmatprep.subr.mxu0 0.0
    %236 = vmatpush1.msra.mxu0 %v228
    %237 = vmatprep.subr.mxu0 0.0
    %238 = vmatpush1.msra.mxu0 %v227
    %239 = vmatprep.subr.mxu0 0.0
    %240 = vmatpush1.msra.mxu0 %v226
    %241 = vmatprep.subr.mxu0 0.0
    %242 = vmatpush1.msra.mxu0 %v225
    %243 = vmatprep.subr.mxu0 0.0
    %244 = vmatpush1.msra.mxu0 %v224
    %245 = vmatprep.subr.mxu0 0.0
    %246 = vmatpush1.msra.mxu0 %v223
    %247 = vmatprep.subr.mxu0 0.0
    %248 = vmatpush1.msra.mxu0 %v222
    %249 = vmatprep.subr.mxu0 0.0
    %250 = vmatpush1.msra.mxu0 %v221
    %251 = vmatprep.subr.mxu0 0.0
    %252 = vmatpush1.msra.mxu0 %v220
    %253 = vmatprep.subr.mxu0 0.0
    %254 = vmatpush1.msra.mxu0 %v219
    %255 = vmatprep.subr.mxu0 0.0
    %256 = vmatpush1.msra.mxu0 %v218
    %257 = vmatprep.subr.mxu0 0.0
    %258 = vmatpush1.msra.mxu0 %v217
    %259 = vmatprep.subr.mxu0 0.0
    %260 = vmatpush1.msra.mxu0 %v216
    %261 = vmatprep.subr.mxu0 0.0
    %262 = vmatpush1.msra.mxu0 %v215
    %263 = vmatprep.subr.mxu0 0.0
    %264 = vmatpush2.msra.mxu0 0.0
    %265 = vmatprep.subr.mxu0 0.0
    %266 = vmatpush2.msra.mxu0 0.0
    %267 = vmatprep.subr.mxu0 0.0
    %268 = vmatpush2.msra.mxu0 0.0
    %269 = vmatprep.subr.mxu0 0.0
    %270 = vmatpush2.msra.mxu0 0.0
    %271 = vmatprep.subr.mxu0 0.0
    %272 = vmatpush2.msra.mxu0 0.0
    %273 = vmatprep.subr.mxu0 0.0
    %274 = vmatpush2.msra.mxu0 0.0
    %275 = vmatprep.subr.mxu0 0.0
    %276 = vmatpush2.msra.mxu0 0.0
    %277 = vmatprep.subr.mxu0 0.0
    %278 = vmatpush2.msra.mxu0 0.0
    %279 = vmatprep.subr.mxu0 0.0
    %280 = vmatpush2.msra.mxu0 0.0
    %281 = vmatprep.subr.mxu0 0.0
    %282 = vmatpush2.msra.mxu0 0.0
    %283 = vmatprep.subr.mxu0 0.0
    %284 = vmatpush2.msra.mxu0 0.0
    %285 = vmatprep.subr.mxu0 0.0
    %286 = vmatpush2.msra.mxu0 0.0
    %287 = vmatprep.subr.mxu0 0.0
    %288 = vmatpush2.msra.mxu0 0.0
    %289 = vmatprep.subr.mxu0 0.0
    %290 = vmatpush2.msra.mxu0 0.0
    %291 = vmatprep.subr.mxu0 0.0
    %292 = vmatpush2.msra.mxu0 0.0
    %293 = vmatprep.subr.mxu0 0.0
    %294 = vmatpush2.msra.mxu0 0.0
    %295 = vmatprep.mubr.f32.mxu0 0.0
    %296 = vmatmul.mubr.f32.gmra.mxu0 %v95
    %v297 = vpop.f32.mrf.mxu0
    %v298 = vadd.f32 0.0, %v297
    %v299 = vpop.f32.mrf.mxu0
    %300 = vmatprep.mubr.f32.mxu0 0.0
    %301 = vmatmul.mubr.f32.gmra.mxu0 %v96
    %v302 = vpop.f32.mrf.mxu0
    %v303 = vadd.f32 0.0, %v302
    %v304 = vpop.f32.mrf.mxu0
    %305 = vmatprep.mubr.f32.mxu0 0.0
    %306 = vmatmul.mubr.f32.gmra.mxu0 %v97
    %v307 = vpop.f32.mrf.mxu0
    %v308 = vadd.f32 0.0, %v307
    %v309 = vpop.f32.mrf.mxu0
    %310 = vmatprep.mubr.f32.mxu0 0.0
    %311 = vmatmul.mubr.f32.gmra.mxu0 %v98
    %v312 = vpop.f32.mrf.mxu0
    %v313 = vadd.f32 0.0, %v312
    %v314 = vpop.f32.mrf.mxu0
    %315 = vmatprep.mubr.f32.mxu0 0.0
    %316 = vmatmul.mubr.f32.gmra.mxu0 %v99
    %v317 = vpop.f32.mrf.mxu0
    %v318 = vadd.f32 0.0, %v317
    %v319 = vpop.f32.mrf.mxu0
    %320 = vmatprep.mubr.f32.mxu0 0.0
    %321 = vmatmul.mubr.f32.gmra.mxu0 %v100
    %v322 = vpop.f32.mrf.mxu0
    %v323 = vadd.f32 0.0, %v322
    %v324 = vpop.f32.mrf.mxu0
    %325 = vmatprep.mubr.f32.mxu0 0.0
    %326 = vmatmul.mubr.f32.gmra.mxu0 %v101
    %v327 = vpop.f32.mrf.mxu0
    %v328 = vadd.f32 0.0, %v327
    %v329 = vpop.f32.mrf.mxu0
    %330 = vmatprep.mubr.f32.mxu0 0.0
    %331 = vmatmul.mubr.f32.gmra.mxu0 %v102
    %v332 = vpop.f32.mrf.mxu0
    %v333 = vadd.f32 0.0, %v332
    %v334 = vpop.f32.mrf.mxu0
    %335 = vmatprep.mubr.f32.mxu0 0.0
    %336 = vmatmul.mubr.f32.gmra.mxu0 %v103
    %v337 = vpop.f32.mrf.mxu0
    %v338 = vadd.f32 0.0, %v337
    %v339 = vpop.f32.mrf.mxu0
    %340 = vmatprep.mubr.f32.mxu0 0.0
    %341 = vmatmul.mubr.f32.gmra.mxu0 %v104
    %v342 = vpop.f32.mrf.mxu0
    %v343 = vadd.f32 0.0, %v342
    %v344 = vpop.f32.mrf.mxu0
    %345 = vmatprep.mubr.f32.mxu0 0.0
    %346 = vmatmul.mubr.f32.gmra.mxu0 %v105
    %v347 = vpop.f32.mrf.mxu0
    %v348 = vadd.f32 0.0, %v347
    %v349 = vpop.f32.mrf.mxu0
    %350 = vmatprep.mubr.f32.mxu0 0.0
    %351 = vmatmul.mubr.f32.gmra.mxu0 %v106
    %v352 = vpop.f32.mrf.mxu0
    %v353 = vadd.f32 0.0, %v352
    %v354 = vpop.f32.mrf.mxu0
    %355 = vmatprep.mubr.f32.mxu0 0.0
    %356 = vmatmul.mubr.f32.gmra.mxu0 %v107
    %v357 = vpop.f32.mrf.mxu0
    %v358 = vadd.f32 0.0, %v357
    %v359 = vpop.f32.mrf.mxu0
    %360 = vmatprep.mubr.f32.mxu0 0.0
    %361 = vmatmul.mubr.f32.gmra.mxu0 %v108
    %v362 = vpop.f32.mrf.mxu0
    %v363 = vadd.f32 0.0, %v362
    %v364 = vpop.f32.mrf.mxu0
    %365 = vmatprep.mubr.f32.mxu0 0.0
    %366 = vmatmul.mubr.f32.gmra.mxu0 %v109
    %v367 = vpop.f32.mrf.mxu0
    %v368 = vadd.f32 0.0, %v367
    %v369 = vpop.f32.mrf.mxu0
    %370 = vmatprep.mubr.f32.mxu0 0.0
    %371 = vmatmul.mubr.f32.gmra.mxu0 %v110
    %v372 = vpop.f32.mrf.mxu0
    %v373 = vadd.f32 0.0, %v372
    %v374 = vpop.f32.mrf.mxu0
    %375 = vdwg.mxu0
    %v376 = vld [vmem:[%s4] sm:$0x1]
    %377 = vmatprep.subr.mxu0 0.0
    %378 = vmatpush1.xpose.msra.mxu0 %v373
    %379 = vmatprep.subr.mxu0 0.0
    %380 = vmatpush1.xpose.msra.mxu0 %v368
    %381 = vmatprep.subr.mxu0 0.0
    %382 = vmatpush1.xpose.msra.mxu0 %v363
    %383 = vmatprep.subr.mxu0 0.0
    %384 = vmatpush1.xpose.msra.mxu0 %v358
    %385 = vmatprep.subr.mxu0 0.0
    %386 = vmatpush1.xpose.msra.mxu0 %v353
    %387 = vmatprep.subr.mxu0 0.0
    %388 = vmatpush1.xpose.msra.mxu0 %v348
    %389 = vmatprep.subr.mxu0 0.0
    %390 = vmatpush1.xpose.msra.mxu0 %v343
    %391 = vmatprep.subr.mxu0 0.0
    %392 = vmatpush1.xpose.msra.mxu0 %v338
    %393 = vmatprep.subr.mxu0 0.0
    %394 = vmatpush1.xpose.msra.mxu0 %v333
    %395 = vmatprep.subr.mxu0 0.0
    %396 = vmatpush1.xpose.msra.mxu0 %v328
    %397 = vmatprep.subr.mxu0 0.0
    %398 = vmatpush1.xpose.msra.mxu0 %v323
    %399 = vmatprep.subr.mxu0 0.0
    %400 = vmatpush1.xpose.msra.mxu0 %v318
    %401 = vmatprep.subr.mxu0 0.0
    %402 = vmatpush1.xpose.msra.mxu0 %v313
    %403 = vmatprep.subr.mxu0 0.0
    %404 = vmatpush1.xpose.msra.mxu0 %v308
    %405 = vmatprep.subr.mxu0 0.0
    %406 = vmatpush1.xpose.msra.mxu0 %v303
    %407 = vmatprep.subr.mxu0 0.0
    %408 = vmatpush1.xpose.msra.mxu0 %v298
    %409 = vmatprep.subr.mxu0 0.0
    %410 = vmatpush2.xpose.msra.mxu0 0.0
    %411 = vmatprep.subr.mxu0 0.0
    %412 = vmatpush2.xpose.msra.mxu0 0.0
    %413 = vmatprep.subr.mxu0 0.0
    %414 = vmatpush2.xpose.msra.mxu0 0.0
    %415 = vmatprep.subr.mxu0 0.0
    %416 = vmatpush2.xpose.msra.mxu0 0.0
    %417 = vmatprep.subr.mxu0 0.0
    %418 = vmatpush2.xpose.msra.mxu0 0.0
    %419 = vmatprep.subr.mxu0 0.0
    %420 = vmatpush2.xpose.msra.mxu0 0.0
    %421 = vmatprep.subr.mxu0 0.0
    %422 = vmatpush2.xpose.msra.mxu0 0.0
    %423 = vmatprep.subr.mxu0 0.0
    %424 = vmatpush2.xpose.msra.mxu0 0.0
    %425 = vmatprep.subr.mxu0 0.0
    %426 = vmatpush2.xpose.msra.mxu0 0.0
    %427 = vmatprep.subr.mxu0 0.0
    %428 = vmatpush2.xpose.msra.mxu0 0.0
    %429 = vmatprep.subr.mxu0 0.0
    %430 = vmatpush2.xpose.msra.mxu0 0.0
    %431 = vmatprep.subr.mxu0 0.0
    %432 = vmatpush2.xpose.msra.mxu0 0.0
    %433 = vmatprep.subr.mxu0 0.0
    %434 = vmatpush2.xpose.msra.mxu0 0.0
    %435 = vmatprep.subr.mxu0 0.0
    %436 = vmatpush2.xpose.msra.mxu0 0.0
    %437 = vmatprep.subr.mxu0 0.0
    %438 = vmatpush2.xpose.msra.mxu0 0.0
    %439 = vmatprep.subr.mxu0 0.0
    %440 = vmatpush2.xpose.msra.mxu0 0.0
    %441 = vmatprep.mubr.f32.mxu0 0.0
    %442 = vmatmul.mubr.f32.gmra.mxu0 %v376
    %v443 = vpop.f32.mrf.mxu0
    %v444 = vadd.f32 0.0, %v443
    %v445 = vpop.f32.mrf.mxu0
    %446 = vdwg.mxu0
    %v447 = vld [vmem:[#allocation10] sm:$0x1]
    %v449 = vlaneseq
    %v450 = vshrl.u32 %v449, 7
    %v451 = vsub.s32 0, %v450
    %v452 = vrot.slane %v447, %v451
    %v454 = vmul.f32 %v298, %v452
    %v455 = vmul.f32 %v303, %v452
    %v456 = vmul.f32 %v308, %v452
    %v457 = vmul.f32 %v313, %v452
    %v458 = vmul.f32 %v318, %v452
    %v459 = vmul.f32 %v323, %v452
    %v460 = vmul.f32 %v328, %v452
    %v461 = vmul.f32 %v333, %v452
    %v462 = vmul.f32 %v338, %v452
    %v463 = vmul.f32 %v343, %v452
    %v464 = vmul.f32 %v348, %v452
    %v465 = vmul.f32 %v353, %v452
    %v466 = vmul.f32 %v358, %v452
    %v467 = vmul.f32 %v363, %v452
    %v468 = vmul.f32 %v368, %v452
    %v469 = vmul.f32 %v373, %v452
    %470 = vadd.xlane.f32.xlu0 %v454
    %v471 = vpop.xlane.xlu0 %470
    %472 = vadd.xlane.f32.xlu0 %v455
    %v473 = vpop.xlane.xlu0 %472
    %474 = vadd.xlane.f32.xlu0 %v456
    %v475 = vpop.xlane.xlu0 %474
    %476 = vadd.xlane.f32.xlu0 %v457
    %v477 = vpop.xlane.xlu0 %476
    %478 = vadd.xlane.f32.xlu0 %v458
    %v479 = vpop.xlane.xlu0 %478
    %480 = vadd.xlane.f32.xlu0 %v459
    %v481 = vpop.xlane.xlu0 %480
    %482 = vadd.xlane.f32.xlu0 %v460
    %v483 = vpop.xlane.xlu0 %482
    %484 = vadd.xlane.f32.xlu0 %v461
    %v485 = vpop.xlane.xlu0 %484
    %486 = vadd.xlane.f32.xlu0 %v462
    %v487 = vpop.xlane.xlu0 %486
    %488 = vadd.xlane.f32.xlu0 %v463
    %v489 = vpop.xlane.xlu0 %488
    %490 = vadd.xlane.f32.xlu0 %v464
    %v491 = vpop.xlane.xlu0 %490
    %492 = vadd.xlane.f32.xlu0 %v465
    %v493 = vpop.xlane.xlu0 %492
    %494 = vadd.xlane.f32.xlu0 %v466
    %v495 = vpop.xlane.xlu0 %494
    %496 = vadd.xlane.f32.xlu0 %v467
    %v497 = vpop.xlane.xlu0 %496
    %498 = vadd.xlane.f32.xlu0 %v468
    %v499 = vpop.xlane.xlu0 %498
    %500 = vadd.xlane.f32.xlu0 %v469
    %v501 = vpop.xlane.xlu0 %500
    %v502 = vlaneseq
    %v503 = vshrl.u32 %v502, 7
    %v504 = vsub.s32 0, %v503
    %v505 = vrot.slane %v444, %v504
    %v506 = vadd.f32 %v471, %v505
    %v507 = vadd.f32 %v473, %v505
    %v508 = vadd.f32 %v475, %v505
    %v509 = vadd.f32 %v477, %v505
    %v510 = vadd.f32 %v479, %v505
    %v511 = vadd.f32 %v481, %v505
    %v512 = vadd.f32 %v483, %v505
    %v513 = vadd.f32 %v485, %v505
    %v514 = vadd.f32 %v487, %v505
    %v515 = vadd.f32 %v489, %v505
    %v516 = vadd.f32 %v491, %v505
    %v517 = vadd.f32 %v493, %v505
    %v518 = vadd.f32 %v495, %v505
    %v519 = vadd.f32 %v497, %v505
    %v520 = vadd.f32 %v499, %v505
    %v521 = vadd.f32 %v501, %v505
    %v522 = vmul.f32 %v506, 0.2
    %v523 = vmul.f32 %v507, 0.2
    %v524 = vmul.f32 %v508, 0.2
    %v525 = vmul.f32 %v509, 0.2
    %v526 = vmul.f32 %v510, 0.2
    %v527 = vmul.f32 %v511, 0.2
    %v528 = vmul.f32 %v512, 0.2
    %v529 = vmul.f32 %v513, 0.2
    %v530 = vmul.f32 %v514, 0.2
    %v531 = vmul.f32 %v515, 0.2
    %v532 = vmul.f32 %v516, 0.2
    %v533 = vmul.f32 %v517, 0.2
    %v534 = vmul.f32 %v518, 0.2
    %v535 = vmul.f32 %v519, 0.2
    %v536 = vmul.f32 %v520, 0.2
    %v537 = vmul.f32 %v521, 0.2
    %v538 = vmax.f32 %v506, %v522
    %v539 = vmax.f32 %v507, %v523
    %v540 = vmax.f32 %v508, %v524
    %v541 = vmax.f32 %v509, %v525
    %v542 = vmax.f32 %v510, %v526
    %v543 = vmax.f32 %v511, %v527
    %v544 = vmax.f32 %v512, %v528
    %v545 = vmax.f32 %v513, %v529
    %v546 = vmax.f32 %v514, %v530
    %v547 = vmax.f32 %v515, %v531
    %v548 = vmax.f32 %v516, %v532
    %v549 = vmax.f32 %v517, %v533
    %v550 = vmax.f32 %v518, %v534
    %v551 = vmax.f32 %v519, %v535
    %v552 = vmax.f32 %v520, %v536
    %v553 = vmax.f32 %v521, %v537
    %v554 = vsel %vm147, %v538, -1e+30
    %v555 = vsel %vm148, %v539, -1e+30
    %v556 = vsel %vm149, %v540, -1e+30
    %v557 = vsel %vm150, %v541, -1e+30
    %v558 = vsel %vm151, %v542, -1e+30
    %v559 = vsel %vm152, %v543, -1e+30
    %v560 = vsel %vm153, %v544, -1e+30
    %v561 = vsel %vm154, %v545, -1e+30
    %v562 = vsel %vm155, %v546, -1e+30
    %v563 = vsel %vm156, %v547, -1e+30
    %v564 = vsel %vm157, %v548, -1e+30
    %v565 = vsel %vm158, %v549, -1e+30
    %v566 = vsel %vm159, %v550, -1e+30
    %v567 = vsel %vm160, %v551, -1e+30
    %v568 = vsel %vm161, %v552, -1e+30
    %v569 = vsel %vm162, %v553, -1e+30
    %570 = vmax.xlane.f32.xlu0 %v554
    %v571 = vpop.xlane.xlu0 %570
    %572 = vmax.xlane.f32.xlu0 %v555
    %v573 = vpop.xlane.xlu0 %572
    %574 = vmax.xlane.f32.xlu0 %v556
    %v575 = vpop.xlane.xlu0 %574
    %576 = vmax.xlane.f32.xlu0 %v557
    %v577 = vpop.xlane.xlu0 %576
    %578 = vmax.xlane.f32.xlu0 %v558
    %v579 = vpop.xlane.xlu0 %578
    %580 = vmax.xlane.f32.xlu0 %v559
    %v581 = vpop.xlane.xlu0 %580
    %582 = vmax.xlane.f32.xlu0 %v560
    %v583 = vpop.xlane.xlu0 %582
    %584 = vmax.xlane.f32.xlu0 %v561
    %v585 = vpop.xlane.xlu0 %584
    %586 = vmax.xlane.f32.xlu0 %v562
    %v587 = vpop.xlane.xlu0 %586
    %588 = vmax.xlane.f32.xlu0 %v563
    %v589 = vpop.xlane.xlu0 %588
    %590 = vmax.xlane.f32.xlu0 %v564
    %v591 = vpop.xlane.xlu0 %590
    %592 = vmax.xlane.f32.xlu0 %v565
    %v593 = vpop.xlane.xlu0 %592
    %594 = vmax.xlane.f32.xlu0 %v566
    %v595 = vpop.xlane.xlu0 %594
    %596 = vmax.xlane.f32.xlu0 %v567
    %v597 = vpop.xlane.xlu0 %596
    %598 = vmax.xlane.f32.xlu0 %v568
    %v599 = vpop.xlane.xlu0 %598
    %600 = vmax.xlane.f32.xlu0 %v569
    %v601 = vpop.xlane.xlu0 %600
    %v602 = vsub.f32 %v554, %v571
    %v603 = vsub.f32 %v555, %v573
    %v604 = vsub.f32 %v556, %v575
    %v605 = vsub.f32 %v557, %v577
    %v606 = vsub.f32 %v558, %v579
    %v607 = vsub.f32 %v559, %v581
    %v608 = vsub.f32 %v560, %v583
    %v609 = vsub.f32 %v561, %v585
    %v610 = vsub.f32 %v562, %v587
    %v611 = vsub.f32 %v563, %v589
    %v612 = vsub.f32 %v564, %v591
    %v613 = vsub.f32 %v565, %v593
    %v614 = vsub.f32 %v566, %v595
    %v615 = vsub.f32 %v567, %v597
    %v616 = vsub.f32 %v568, %v599
    %v617 = vsub.f32 %v569, %v601
    %v618 = vmul.f32 %v602, 1.442695
    %v619 = vpow.pop %v618
    %v620 = vmul.f32 %v603, 1.442695
    %v621 = vpow.pop %v620
    %v622 = vmul.f32 %v604, 1.442695
    %v623 = vpow.pop %v622
    %v624 = vmul.f32 %v605, 1.442695
    %v625 = vpow.pop %v624
    %v626 = vmul.f32 %v606, 1.442695
    %v627 = vpow.pop %v626
    %v628 = vmul.f32 %v607, 1.442695
    %v629 = vpow.pop %v628
    %v630 = vmul.f32 %v608, 1.442695
    %v631 = vpow.pop %v630
    %v632 = vmul.f32 %v609, 1.442695
    %v633 = vpow.pop %v632
    %v634 = vmul.f32 %v610, 1.442695
    %v635 = vpow.pop %v634
    %v636 = vmul.f32 %v611, 1.442695
    %v637 = vpow.pop %v636
    %v638 = vmul.f32 %v612, 1.442695
    %v639 = vpow.pop %v638
    %v640 = vmul.f32 %v613, 1.442695
    %v641 = vpow.pop %v640
    %v642 = vmul.f32 %v614, 1.442695
    %v643 = vpow.pop %v642
    %v644 = vmul.f32 %v615, 1.442695
    %v645 = vpow.pop %v644
    %v646 = vmul.f32 %v616, 1.442695
    %v647 = vpow.pop %v646
    %v648 = vmul.f32 %v617, 1.442695
    %v649 = vpow.pop %v648
    %650 = vadd.xlane.f32.xlu0 %v619
    %v651 = vpop.xlane.xlu0 %650
    %652 = vadd.xlane.f32.xlu0 %v621
    %v653 = vpop.xlane.xlu0 %652
    %654 = vadd.xlane.f32.xlu0 %v623
    %v655 = vpop.xlane.xlu0 %654
    %656 = vadd.xlane.f32.xlu0 %v625
    %v657 = vpop.xlane.xlu0 %656
    %658 = vadd.xlane.f32.xlu0 %v627
    %v659 = vpop.xlane.xlu0 %658
    %660 = vadd.xlane.f32.xlu0 %v629
    %v661 = vpop.xlane.xlu0 %660
    %662 = vadd.xlane.f32.xlu0 %v631
    %v663 = vpop.xlane.xlu0 %662
    %664 = vadd.xlane.f32.xlu0 %v633
    %v665 = vpop.xlane.xlu0 %664
    %666 = vadd.xlane.f32.xlu0 %v635
    %v667 = vpop.xlane.xlu0 %666
    %668 = vadd.xlane.f32.xlu0 %v637
    %v669 = vpop.xlane.xlu0 %668
    %670 = vadd.xlane.f32.xlu0 %v639
    %v671 = vpop.xlane.xlu0 %670
    %672 = vadd.xlane.f32.xlu0 %v641
    %v673 = vpop.xlane.xlu0 %672
    %674 = vadd.xlane.f32.xlu0 %v643
    %v675 = vpop.xlane.xlu0 %674
    %676 = vadd.xlane.f32.xlu0 %v645
    %v677 = vpop.xlane.xlu0 %676
    %678 = vadd.xlane.f32.xlu0 %v647
    %v679 = vpop.xlane.xlu0 %678
    %680 = vadd.xlane.f32.xlu0 %v649
    %v681 = vpop.xlane.xlu0 %680
    %682 = vmatprep.subr.mxu0 0.0
    %683 = vmatpush1.msra.mxu0 %v373
    %684 = vmatprep.subr.mxu0 0.0
    %685 = vmatpush1.msra.mxu0 %v368
    %686 = vmatprep.subr.mxu0 0.0
    %687 = vmatpush1.msra.mxu0 %v363
    %688 = vmatprep.subr.mxu0 0.0
    %689 = vmatpush1.msra.mxu0 %v358
    %690 = vmatprep.subr.mxu0 0.0
    %691 = vmatpush1.msra.mxu0 %v353
    %692 = vmatprep.subr.mxu0 0.0
    %693 = vmatpush1.msra.mxu0 %v348
    %694 = vmatprep.subr.mxu0 0.0
    %695 = vmatpush1.msra.mxu0 %v343
    %696 = vmatprep.subr.mxu0 0.0
    %697 = vmatpush1.msra.mxu0 %v338
    %698 = vmatprep.subr.mxu0 0.0
    %699 = vmatpush1.msra.mxu0 %v333
    %700 = vmatprep.subr.mxu0 0.0
    %701 = vmatpush1.msra.mxu0 %v328
    %702 = vmatprep.subr.mxu0 0.0
    %703 = vmatpush1.msra.mxu0 %v323
    %704 = vmatprep.subr.mxu0 0.0
    %705 = vmatpush1.msra.mxu0 %v318
    %706 = vmatprep.subr.mxu0 0.0
    %707 = vmatpush1.msra.mxu0 %v313
    %708 = vmatprep.subr.mxu0 0.0
    %709 = vmatpush1.msra.mxu0 %v308
    %710 = vmatprep.subr.mxu0 0.0
    %711 = vmatpush1.msra.mxu0 %v303
    %712 = vmatprep.subr.mxu0 0.0
    %713 = vmatpush1.msra.mxu0 %v298
    %714 = vmatprep.subr.mxu0 0.0
    %715 = vmatpush2.msra.mxu0 0.0
    %716 = vmatprep.subr.mxu0 0.0
    %717 = vmatpush2.msra.mxu0 0.0
    %718 = vmatprep.subr.mxu0 0.0
    %719 = vmatpush2.msra.mxu0 0.0
    %720 = vmatprep.subr.mxu0 0.0
    %721 = vmatpush2.msra.mxu0 0.0
    %722 = vmatprep.subr.mxu0 0.0
    %723 = vmatpush2.msra.mxu0 0.0
    %724 = vmatprep.subr.mxu0 0.0
    %725 = vmatpush2.msra.mxu0 0.0
    %726 = vmatprep.subr.mxu0 0.0
    %727 = vmatpush2.msra.mxu0 0.0
    %728 = vmatprep.subr.mxu0 0.0
    %729 = vmatpush2.msra.mxu0 0.0
    %730 = vmatprep.subr.mxu0 0.0
    %731 = vmatpush2.msra.mxu0 0.0
    %732 = vmatprep.subr.mxu0 0.0
    %733 = vmatpush2.msra.mxu0 0.0
    %734 = vmatprep.subr.mxu0 0.0
    %735 = vmatpush2.msra.mxu0 0.0
    %736 = vmatprep.subr.mxu0 0.0
    %737 = vmatpush2.msra.mxu0 0.0
    %738 = vmatprep.subr.mxu0 0.0
    %739 = vmatpush2.msra.mxu0 0.0
    %740 = vmatprep.subr.mxu0 0.0
    %741 = vmatpush2.msra.mxu0 0.0
    %742 = vmatprep.subr.mxu0 0.0
    %743 = vmatpush2.msra.mxu0 0.0
    %744 = vmatprep.subr.mxu0 0.0
    %745 = vmatpush2.msra.mxu0 0.0
    %746 = vmatprep.mubr.f32.mxu0 0.0
    %747 = vmatmul.mubr.f32.gmra.mxu0 %v619
    %v748 = vpop.f32.mrf.mxu0
    %v749 = vadd.f32 0.0, %v748
    %v750 = vpop.f32.mrf.mxu0
    %751 = vmatprep.mubr.f32.mxu0 0.0
    %752 = vmatmul.mubr.f32.gmra.mxu0 %v621
    %v753 = vpop.f32.mrf.mxu0
    %v754 = vadd.f32 0.0, %v753
    %v755 = vpop.f32.mrf.mxu0
    %756 = vmatprep.mubr.f32.mxu0 0.0
    %757 = vmatmul.mubr.f32.gmra.mxu0 %v623
    %v758 = vpop.f32.mrf.mxu0
    %v759 = vadd.f32 0.0, %v758
    %v760 = vpop.f32.mrf.mxu0
    %761 = vmatprep.mubr.f32.mxu0 0.0
    %762 = vmatmul.mubr.f32.gmra.mxu0 %v625
    %v763 = vpop.f32.mrf.mxu0
    %v764 = vadd.f32 0.0, %v763
    %v765 = vpop.f32.mrf.mxu0
    %766 = vmatprep.mubr.f32.mxu0 0.0
    %767 = vmatmul.mubr.f32.gmra.mxu0 %v627
    %v768 = vpop.f32.mrf.mxu0
    %v769 = vadd.f32 0.0, %v768
    %v770 = vpop.f32.mrf.mxu0
    %771 = vmatprep.mubr.f32.mxu0 0.0
    %772 = vmatmul.mubr.f32.gmra.mxu0 %v629
    %v773 = vpop.f32.mrf.mxu0
    %v774 = vadd.f32 0.0, %v773
    %v775 = vpop.f32.mrf.mxu0
    %776 = vmatprep.mubr.f32.mxu0 0.0
    %777 = vmatmul.mubr.f32.gmra.mxu0 %v631
    %v778 = vpop.f32.mrf.mxu0
    %v779 = vadd.f32 0.0, %v778
    %v780 = vpop.f32.mrf.mxu0
    %781 = vmatprep.mubr.f32.mxu0 0.0
    %782 = vmatmul.mubr.f32.gmra.mxu0 %v633
    %v783 = vpop.f32.mrf.mxu0
    %v784 = vadd.f32 0.0, %v783
    %v785 = vpop.f32.mrf.mxu0
    %786 = vmatprep.mubr.f32.mxu0 0.0
    %787 = vmatmul.mubr.f32.gmra.mxu0 %v635
    %v788 = vpop.f32.mrf.mxu0
    %v789 = vadd.f32 0.0, %v788
    %v790 = vpop.f32.mrf.mxu0
    %791 = vmatprep.mubr.f32.mxu0 0.0
    %792 = vmatmul.mubr.f32.gmra.mxu0 %v637
    %v793 = vpop.f32.mrf.mxu0
    %v794 = vadd.f32 0.0, %v793
    %v795 = vpop.f32.mrf.mxu0
    %796 = vmatprep.mubr.f32.mxu0 0.0
    %797 = vmatmul.mubr.f32.gmra.mxu0 %v639
    %v798 = vpop.f32.mrf.mxu0
    %v799 = vadd.f32 0.0, %v798
    %v800 = vpop.f32.mrf.mxu0
    %801 = vmatprep.mubr.f32.mxu0 0.0
    %802 = vmatmul.mubr.f32.gmra.mxu0 %v641
    %v803 = vpop.f32.mrf.mxu0
    %v804 = vadd.f32 0.0, %v803
    %v805 = vpop.f32.mrf.mxu0
    %806 = vmatprep.mubr.f32.mxu0 0.0
    %807 = vmatmul.mubr.f32.gmra.mxu0 %v643
    %v808 = vpop.f32.mrf.mxu0
    %v809 = vadd.f32 0.0, %v808
    %v810 = vpop.f32.mrf.mxu0
    %811 = vmatprep.mubr.f32.mxu0 0.0
    %812 = vmatmul.mubr.f32.gmra.mxu0 %v645
    %v813 = vpop.f32.mrf.mxu0
    %v814 = vadd.f32 0.0, %v813
    %v815 = vpop.f32.mrf.mxu0
    %816 = vmatprep.mubr.f32.mxu0 0.0
    %817 = vmatmul.mubr.f32.gmra.mxu0 %v647
    %v818 = vpop.f32.mrf.mxu0
    %v819 = vadd.f32 0.0, %v818
    %v820 = vpop.f32.mrf.mxu0
    %821 = vmatprep.mubr.f32.mxu0 0.0
    %822 = vmatmul.mubr.f32.gmra.mxu0 %v649
    %v823 = vpop.f32.mrf.mxu0
    %v824 = vadd.f32 0.0, %v823
    %v825 = vpop.f32.mrf.mxu0
    %826 = vdwg.mxu0
    %v827 = vrcp.pop %v651
    %v828 = vmul.f32 %v749, %v827
    %v829 = vrcp.pop %v653
    %v830 = vmul.f32 %v754, %v829
    %v831 = vrcp.pop %v655
    %v832 = vmul.f32 %v759, %v831
    %v833 = vrcp.pop %v657
    %v834 = vmul.f32 %v764, %v833
    %v835 = vrcp.pop %v659
    %v836 = vmul.f32 %v769, %v835
    %v837 = vrcp.pop %v661
    %v838 = vmul.f32 %v774, %v837
    %v839 = vrcp.pop %v663
    %v840 = vmul.f32 %v779, %v839
    %v841 = vrcp.pop %v665
    %v842 = vmul.f32 %v784, %v841
    %v843 = vrcp.pop %v667
    %v844 = vmul.f32 %v789, %v843
    %v845 = vrcp.pop %v669
    %v846 = vmul.f32 %v794, %v845
    %v847 = vrcp.pop %v671
    %v848 = vmul.f32 %v799, %v847
    %v849 = vrcp.pop %v673
    %v850 = vmul.f32 %v804, %v849
    %v851 = vrcp.pop %v675
    %v852 = vmul.f32 %v809, %v851
    %v853 = vrcp.pop %v677
    %v854 = vmul.f32 %v814, %v853
    %v855 = vrcp.pop %v679
    %v856 = vmul.f32 %v819, %v855
    %v857 = vrcp.pop %v681
    %v858 = vmul.f32 %v824, %v857
    %v859 = vld [vmem:[%s6] sm:$0x1]
    %v861 = vlaneseq
    %v862 = vshrl.u32 %v861, 7
    %v863 = vsub.s32 0, %v862
    %v864 = vrot.slane %v859, %v863
    %v866 = vadd.f32 %v828, %v864
    %v867 = vadd.f32 %v830, %v864
    %v868 = vadd.f32 %v832, %v864
    %v869 = vadd.f32 %v834, %v864
    %v870 = vadd.f32 %v836, %v864
    %v871 = vadd.f32 %v838, %v864
    %v872 = vadd.f32 %v840, %v864
    %v873 = vadd.f32 %v842, %v864
    %v874 = vadd.f32 %v844, %v864
    %v875 = vadd.f32 %v846, %v864
    %v876 = vadd.f32 %v848, %v864
    %v877 = vadd.f32 %v850, %v864
    %v878 = vadd.f32 %v852, %v864
    %v879 = vadd.f32 %v854, %v864
    %v880 = vadd.f32 %v856, %v864
    %v881 = vadd.f32 %v858, %v864
    %v882 = vmax.f32 %v866, 0.0
    %v883 = vmax.f32 %v867, 0.0
    %v884 = vmax.f32 %v868, 0.0
    %v885 = vmax.f32 %v869, 0.0
    %v886 = vmax.f32 %v870, 0.0
    %v887 = vmax.f32 %v871, 0.0
    %v888 = vmax.f32 %v872, 0.0
    %v889 = vmax.f32 %v873, 0.0
    %v890 = vmax.f32 %v874, 0.0
    %v891 = vmax.f32 %v875, 0.0
    %v892 = vmax.f32 %v876, 0.0
    %v893 = vmax.f32 %v877, 0.0
    %v894 = vmax.f32 %v878, 0.0
    %v895 = vmax.f32 %v879, 0.0
    %v896 = vmax.f32 %v880, 0.0
    %v897 = vmax.f32 %v881, 0.0
    %s898 = scalar_lea.vmem [#allocation8], 128
    %v899 = vld [vmem:[%s898] sm:$0xff]
    %v900 = vld [vmem:[%s898 + $0x8] sm:$0xff]
    %v901 = vld [vmem:[%s898 + $0x10] sm:$0xff]
    %v902 = vld [vmem:[%s898 + $0x18] sm:$0xff]
    %v903 = vld [vmem:[%s898 + $0x20] sm:$0xff]
    %v904 = vld [vmem:[%s898 + $0x28] sm:$0xff]
    %v905 = vld [vmem:[%s898 + $0x30] sm:$0xff]
    %v906 = vld [vmem:[%s898 + $0x38] sm:$0xff]
    %v907 = vld [vmem:[%s898 + $0x40] sm:$0xff]
    %v908 = vld [vmem:[%s898 + $0x48] sm:$0xff]
    %v909 = vld [vmem:[%s898 + $0x50] sm:$0xff]
    %v910 = vld [vmem:[%s898 + $0x58] sm:$0xff]
    %v911 = vld [vmem:[%s898 + $0x60] sm:$0xff]
    %v912 = vld [vmem:[%s898 + $0x68] sm:$0xff]
    %v913 = vld [vmem:[%s898 + $0x70] sm:$0xff]
    %v914 = vld [vmem:[%s898 + $0x78] sm:$0xff]
    %915 = vmatprep.subr.mxu0 0.0
    %916 = vmatpush1.msra.mxu0 %v914
    %917 = vmatprep.subr.mxu0 0.0
    %918 = vmatpush1.msra.mxu0 %v913
    %919 = vmatprep.subr.mxu0 0.0
    %920 = vmatpush1.msra.mxu0 %v912
    %921 = vmatprep.subr.mxu0 0.0
    %922 = vmatpush1.msra.mxu0 %v911
    %923 = vmatprep.subr.mxu0 0.0
    %924 = vmatpush1.msra.mxu0 %v910
    %925 = vmatprep.subr.mxu0 0.0
    %926 = vmatpush1.msra.mxu0 %v909
    %927 = vmatprep.subr.mxu0 0.0
    %928 = vmatpush1.msra.mxu0 %v908
    %929 = vmatprep.subr.mxu0 0.0
    %930 = vmatpush1.msra.mxu0 %v907
    %931 = vmatprep.subr.mxu0 0.0
    %932 = vmatpush1.msra.mxu0 %v906
    %933 = vmatprep.subr.mxu0 0.0
    %934 = vmatpush1.msra.mxu0 %v905
    %935 = vmatprep.subr.mxu0 0.0
    %936 = vmatpush1.msra.mxu0 %v904
    %937 = vmatprep.subr.mxu0 0.0
    %938 = vmatpush1.msra.mxu0 %v903
    %939 = vmatprep.subr.mxu0 0.0
    %940 = vmatpush1.msra.mxu0 %v902
    %941 = vmatprep.subr.mxu0 0.0
    %942 = vmatpush1.msra.mxu0 %v901
    %943 = vmatprep.subr.mxu0 0.0
    %944 = vmatpush1.msra.mxu0 %v900
    %945 = vmatprep.subr.mxu0 0.0
    %946 = vmatpush1.msra.mxu0 %v899
    %947 = vmatprep.subr.mxu0 0.0
    %948 = vmatpush2.msra.mxu0 0.0
    %949 = vmatprep.subr.mxu0 0.0
    %950 = vmatpush2.msra.mxu0 0.0
    %951 = vmatprep.subr.mxu0 0.0
    %952 = vmatpush2.msra.mxu0 0.0
    %953 = vmatprep.subr.mxu0 0.0
    %954 = vmatpush2.msra.mxu0 0.0
    %955 = vmatprep.subr.mxu0 0.0
    %956 = vmatpush2.msra.mxu0 0.0
    %957 = vmatprep.subr.mxu0 0.0
    %958 = vmatpush2.msra.mxu0 0.0
    %959 = vmatprep.subr.mxu0 0.0
    %960 = vmatpush2.msra.mxu0 0.0
    %961 = vmatprep.subr.mxu0 0.0
    %962 = vmatpush2.msra.mxu0 0.0
    %963 = vmatprep.subr.mxu0 0.0
    %964 = vmatpush2.msra.mxu0 0.0
    %965 = vmatprep.subr.mxu0 0.0
    %966 = vmatpush2.msra.mxu0 0.0
    %967 = vmatprep.subr.mxu0 0.0
    %968 = vmatpush2.msra.mxu0 0.0
    %969 = vmatprep.subr.mxu0 0.0
    %970 = vmatpush2.msra.mxu0 0.0
    %971 = vmatprep.subr.mxu0 0.0
    %972 = vmatpush2.msra.mxu0 0.0
    %973 = vmatprep.subr.mxu0 0.0
    %974 = vmatpush2.msra.mxu0 0.0
    %975 = vmatprep.subr.mxu0 0.0
    %976 = vmatpush2.msra.mxu0 0.0
    %977 = vmatprep.subr.mxu0 0.0
    %978 = vmatpush2.msra.mxu0 0.0
    %979 = vmatprep.mubr.f32.mxu0 0.0
    %980 = vmatmul.mubr.f32.gmra.mxu0 %v882
    %v981 = vpop.f32.mrf.mxu0
    %v982 = vadd.f32 0.0, %v981
    %v983 = vpop.f32.mrf.mxu0
    %984 = vmatprep.mubr.f32.mxu0 0.0
    %985 = vmatmul.mubr.f32.gmra.mxu0 %v883
    %v986 = vpop.f32.mrf.mxu0
    %v987 = vadd.f32 0.0, %v986
    %v988 = vpop.f32.mrf.mxu0
    %989 = vmatprep.mubr.f32.mxu0 0.0
    %990 = vmatmul.mubr.f32.gmra.mxu0 %v884
    %v991 = vpop.f32.mrf.mxu0
    %v992 = vadd.f32 0.0, %v991
    %v993 = vpop.f32.mrf.mxu0
    %994 = vmatprep.mubr.f32.mxu0 0.0
    %995 = vmatmul.mubr.f32.gmra.mxu0 %v885
    %v996 = vpop.f32.mrf.mxu0
    %v997 = vadd.f32 0.0, %v996
    %v998 = vpop.f32.mrf.mxu0
    %999 = vmatprep.mubr.f32.mxu0 0.0
    %1000 = vmatmul.mubr.f32.gmra.mxu0 %v886
    %v1001 = vpop.f32.mrf.mxu0
    %v1002 = vadd.f32 0.0, %v1001
    %v1003 = vpop.f32.mrf.mxu0
    %1004 = vmatprep.mubr.f32.mxu0 0.0
    %1005 = vmatmul.mubr.f32.gmra.mxu0 %v887
    %v1006 = vpop.f32.mrf.mxu0
    %v1007 = vadd.f32 0.0, %v1006
    %v1008 = vpop.f32.mrf.mxu0
    %1009 = vmatprep.mubr.f32.mxu0 0.0
    %1010 = vmatmul.mubr.f32.gmra.mxu0 %v888
    %v1011 = vpop.f32.mrf.mxu0
    %v1012 = vadd.f32 0.0, %v1011
    %v1013 = vpop.f32.mrf.mxu0
    %1014 = vmatprep.mubr.f32.mxu0 0.0
    %1015 = vmatmul.mubr.f32.gmra.mxu0 %v889
    %v1016 = vpop.f32.mrf.mxu0
    %v1017 = vadd.f32 0.0, %v1016
    %v1018 = vpop.f32.mrf.mxu0
    %1019 = vmatprep.mubr.f32.mxu0 0.0
    %1020 = vmatmul.mubr.f32.gmra.mxu0 %v890
    %v1021 = vpop.f32.mrf.mxu0
    %v1022 = vadd.f32 0.0, %v1021
    %v1023 = vpop.f32.mrf.mxu0
    %1024 = vmatprep.mubr.f32.mxu0 0.0
    %1025 = vmatmul.mubr.f32.gmra.mxu0 %v891
    %v1026 = vpop.f32.mrf.mxu0
    %v1027 = vadd.f32 0.0, %v1026
    %v1028 = vpop.f32.mrf.mxu0
    %1029 = vmatprep.mubr.f32.mxu0 0.0
    %1030 = vmatmul.mubr.f32.gmra.mxu0 %v892
    %v1031 = vpop.f32.mrf.mxu0
    %v1032 = vadd.f32 0.0, %v1031
    %v1033 = vpop.f32.mrf.mxu0
    %1034 = vmatprep.mubr.f32.mxu0 0.0
    %1035 = vmatmul.mubr.f32.gmra.mxu0 %v893
    %v1036 = vpop.f32.mrf.mxu0
    %v1037 = vadd.f32 0.0, %v1036
    %v1038 = vpop.f32.mrf.mxu0
    %1039 = vmatprep.mubr.f32.mxu0 0.0
    %1040 = vmatmul.mubr.f32.gmra.mxu0 %v894
    %v1041 = vpop.f32.mrf.mxu0
    %v1042 = vadd.f32 0.0, %v1041
    %v1043 = vpop.f32.mrf.mxu0
    %1044 = vmatprep.mubr.f32.mxu0 0.0
    %1045 = vmatmul.mubr.f32.gmra.mxu0 %v895
    %v1046 = vpop.f32.mrf.mxu0
    %v1047 = vadd.f32 0.0, %v1046
    %v1048 = vpop.f32.mrf.mxu0
    %1049 = vmatprep.mubr.f32.mxu0 0.0
    %1050 = vmatmul.mubr.f32.gmra.mxu0 %v896
    %v1051 = vpop.f32.mrf.mxu0
    %v1052 = vadd.f32 0.0, %v1051
    %v1053 = vpop.f32.mrf.mxu0
    %1054 = vmatprep.mubr.f32.mxu0 0.0
    %1055 = vmatmul.mubr.f32.gmra.mxu0 %v897
    %v1056 = vpop.f32.mrf.mxu0
    %v1057 = vadd.f32 0.0, %v1056
    %v1058 = vpop.f32.mrf.mxu0
    %1059 = vdwg.mxu0
    %s1060 = scalar_lea.vmem %s4, 1
    %v1061 = vld [vmem:[%s1060] sm:$0x1]
    %1062 = vmatprep.subr.mxu0 0.0
    %1063 = vmatpush1.xpose.msra.mxu0 %v1057
    %1064 = vmatprep.subr.mxu0 0.0
    %1065 = vmatpush1.xpose.msra.mxu0 %v1052
    %1066 = vmatprep.subr.mxu0 0.0
    %1067 = vmatpush1.xpose.msra.mxu0 %v1047
    %1068 = vmatprep.subr.mxu0 0.0
    %1069 = vmatpush1.xpose.msra.mxu0 %v1042
    %1070 = vmatprep.subr.mxu0 0.0
    %1071 = vmatpush1.xpose.msra.mxu0 %v1037
    %1072 = vmatprep.subr.mxu0 0.0
    %1073 = vmatpush1.xpose.msra.mxu0 %v1032
    %1074 = vmatprep.subr.mxu0 0.0
    %1075 = vmatpush1.xpose.msra.mxu0 %v1027
    %1076 = vmatprep.subr.mxu0 0.0
    %1077 = vmatpush1.xpose.msra.mxu0 %v1022
    %1078 = vmatprep.subr.mxu0 0.0
    %1079 = vmatpush1.xpose.msra.mxu0 %v1017
    %1080 = vmatprep.subr.mxu0 0.0
    %1081 = vmatpush1.xpose.msra.mxu0 %v1012
    %1082 = vmatprep.subr.mxu0 0.0
    %1083 = vmatpush1.xpose.msra.mxu0 %v1007
    %1084 = vmatprep.subr.mxu0 0.0
    %1085 = vmatpush1.xpose.msra.mxu0 %v1002
    %1086 = vmatprep.subr.mxu0 0.0
    %1087 = vmatpush1.xpose.msra.mxu0 %v997
    %1088 = vmatprep.subr.mxu0 0.0
    %1089 = vmatpush1.xpose.msra.mxu0 %v992
    %1090 = vmatprep.subr.mxu0 0.0
    %1091 = vmatpush1.xpose.msra.mxu0 %v987
    %1092 = vmatprep.subr.mxu0 0.0
    %1093 = vmatpush1.xpose.msra.mxu0 %v982
    %1094 = vmatprep.subr.mxu0 0.0
    %1095 = vmatpush2.xpose.msra.mxu0 0.0
    %1096 = vmatprep.subr.mxu0 0.0
    %1097 = vmatpush2.xpose.msra.mxu0 0.0
    %1098 = vmatprep.subr.mxu0 0.0
    %1099 = vmatpush2.xpose.msra.mxu0 0.0
    %1100 = vmatprep.subr.mxu0 0.0
    %1101 = vmatpush2.xpose.msra.mxu0 0.0
    %1102 = vmatprep.subr.mxu0 0.0
    %1103 = vmatpush2.xpose.msra.mxu0 0.0
    %1104 = vmatprep.subr.mxu0 0.0
    %1105 = vmatpush2.xpose.msra.mxu0 0.0
    %1106 = vmatprep.subr.mxu0 0.0
    %1107 = vmatpush2.xpose.msra.mxu0 0.0
    %1108 = vmatprep.subr.mxu0 0.0
    %1109 = vmatpush2.xpose.msra.mxu0 0.0
    %1110 = vmatprep.subr.mxu0 0.0
    %1111 = vmatpush2.xpose.msra.mxu0 0.0
    %1112 = vmatprep.subr.mxu0 0.0
    %1113 = vmatpush2.xpose.msra.mxu0 0.0
    %1114 = vmatprep.subr.mxu0 0.0
    %1115 = vmatpush2.xpose.msra.mxu0 0.0
    %1116 = vmatprep.subr.mxu0 0.0
    %1117 = vmatpush2.xpose.msra.mxu0 0.0
    %1118 = vmatprep.subr.mxu0 0.0
    %1119 = vmatpush2.xpose.msra.mxu0 0.0
    %1120 = vmatprep.subr.mxu0 0.0
    %1121 = vmatpush2.xpose.msra.mxu0 0.0
    %1122 = vmatprep.subr.mxu0 0.0
    %1123 = vmatpush2.xpose.msra.mxu0 0.0
    %1124 = vmatprep.subr.mxu0 0.0
    %1125 = vmatpush2.xpose.msra.mxu0 0.0
    %1126 = vmatprep.mubr.f32.mxu0 0.0
    %1127 = vmatmul.mubr.f32.gmra.mxu0 %v1061
    %v1128 = vpop.f32.mrf.mxu0
    %v1129 = vadd.f32 0.0, %v1128
    %v1130 = vpop.f32.mrf.mxu0
    %1131 = vdwg.mxu0
    %s1132 = scalar_lea.vmem [#allocation10], 1
    %v1133 = vld [vmem:[%s1132] sm:$0x1]
    %v1135 = vlaneseq
    %v1136 = vshrl.u32 %v1135, 7
    %v1137 = vsub.s32 0, %v1136
    %v1138 = vrot.slane %v1133, %v1137
    %v1140 = vmul.f32 %v982, %v1138
    %v1141 = vmul.f32 %v987, %v1138
    %v1142 = vmul.f32 %v992, %v1138
    %v1143 = vmul.f32 %v997, %v1138
    %v1144 = vmul.f32 %v1002, %v1138
    %v1145 = vmul.f32 %v1007, %v1138
    %v1146 = vmul.f32 %v1012, %v1138
    %v1147 = vmul.f32 %v1017, %v1138
    %v1148 = vmul.f32 %v1022, %v1138
    %v1149 = vmul.f32 %v1027, %v1138
    %v1150 = vmul.f32 %v1032, %v1138
    %v1151 = vmul.f32 %v1037, %v1138
    %v1152 = vmul.f32 %v1042, %v1138
    %v1153 = vmul.f32 %v1047, %v1138
    %v1154 = vmul.f32 %v1052, %v1138
    %v1155 = vmul.f32 %v1057, %v1138
    %1156 = vadd.xlane.f32.xlu0 %v1140
    %v1157 = vpop.xlane.xlu0 %1156
    %1158 = vadd.xlane.f32.xlu0 %v1141
    %v1159 = vpop.xlane.xlu0 %1158
    %1160 = vadd.xlane.f32.xlu0 %v1142
    %v1161 = vpop.xlane.xlu0 %1160
    %1162 = vadd.xlane.f32.xlu0 %v1143
    %v1163 = vpop.xlane.xlu0 %1162
    %1164 = vadd.xlane.f32.xlu0 %v1144
    %v1165 = vpop.xlane.xlu0 %1164
    %1166 = vadd.xlane.f32.xlu0 %v1145
    %v1167 = vpop.xlane.xlu0 %1166
    %1168 = vadd.xlane.f32.xlu0 %v1146
    %v1169 = vpop.xlane.xlu0 %1168
    %1170 = vadd.xlane.f32.xlu0 %v1147
    %v1171 = vpop.xlane.xlu0 %1170
    %1172 = vadd.xlane.f32.xlu0 %v1148
    %v1173 = vpop.xlane.xlu0 %1172
    %1174 = vadd.xlane.f32.xlu0 %v1149
    %v1175 = vpop.xlane.xlu0 %1174
    %1176 = vadd.xlane.f32.xlu0 %v1150
    %v1177 = vpop.xlane.xlu0 %1176
    %1178 = vadd.xlane.f32.xlu0 %v1151
    %v1179 = vpop.xlane.xlu0 %1178
    %1180 = vadd.xlane.f32.xlu0 %v1152
    %v1181 = vpop.xlane.xlu0 %1180
    %1182 = vadd.xlane.f32.xlu0 %v1153
    %v1183 = vpop.xlane.xlu0 %1182
    %1184 = vadd.xlane.f32.xlu0 %v1154
    %v1185 = vpop.xlane.xlu0 %1184
    %1186 = vadd.xlane.f32.xlu0 %v1155
    %v1187 = vpop.xlane.xlu0 %1186
    %v1188 = vlaneseq
    %v1189 = vshrl.u32 %v1188, 7
    %v1190 = vsub.s32 0, %v1189
    %v1191 = vrot.slane %v1129, %v1190
    %v1192 = vadd.f32 %v1157, %v1191
    %v1193 = vadd.f32 %v1159, %v1191
    %v1194 = vadd.f32 %v1161, %v1191
    %v1195 = vadd.f32 %v1163, %v1191
    %v1196 = vadd.f32 %v1165, %v1191
    %v1197 = vadd.f32 %v1167, %v1191
    %v1198 = vadd.f32 %v1169, %v1191
    %v1199 = vadd.f32 %v1171, %v1191
    %v1200 = vadd.f32 %v1173, %v1191
    %v1201 = vadd.f32 %v1175, %v1191
    %v1202 = vadd.f32 %v1177, %v1191
    %v1203 = vadd.f32 %v1179, %v1191
    %v1204 = vadd.f32 %v1181, %v1191
    %v1205 = vadd.f32 %v1183, %v1191
    %v1206 = vadd.f32 %v1185, %v1191
    %v1207 = vadd.f32 %v1187, %v1191
    %v1208 = vmul.f32 %v1192, 0.2
    %v1209 = vmul.f32 %v1193, 0.2
    %v1210 = vmul.f32 %v1194, 0.2
    %v1211 = vmul.f32 %v1195, 0.2
    %v1212 = vmul.f32 %v1196, 0.2
    %v1213 = vmul.f32 %v1197, 0.2
    %v1214 = vmul.f32 %v1198, 0.2
    %v1215 = vmul.f32 %v1199, 0.2
    %v1216 = vmul.f32 %v1200, 0.2
    %v1217 = vmul.f32 %v1201, 0.2
    %v1218 = vmul.f32 %v1202, 0.2
    %v1219 = vmul.f32 %v1203, 0.2
    %v1220 = vmul.f32 %v1204, 0.2
    %v1221 = vmul.f32 %v1205, 0.2
    %v1222 = vmul.f32 %v1206, 0.2
    %v1223 = vmul.f32 %v1207, 0.2
    %v1224 = vmax.f32 %v1192, %v1208
    %v1225 = vmax.f32 %v1193, %v1209
    %v1226 = vmax.f32 %v1194, %v1210
    %v1227 = vmax.f32 %v1195, %v1211
    %v1228 = vmax.f32 %v1196, %v1212
    %v1229 = vmax.f32 %v1197, %v1213
    %v1230 = vmax.f32 %v1198, %v1214
    %v1231 = vmax.f32 %v1199, %v1215
    %v1232 = vmax.f32 %v1200, %v1216
    %v1233 = vmax.f32 %v1201, %v1217
    %v1234 = vmax.f32 %v1202, %v1218
    %v1235 = vmax.f32 %v1203, %v1219
    %v1236 = vmax.f32 %v1204, %v1220
    %v1237 = vmax.f32 %v1205, %v1221
    %v1238 = vmax.f32 %v1206, %v1222
    %v1239 = vmax.f32 %v1207, %v1223
    %v1240 = vsel %vm199, %v1224, -1e+30
    %v1241 = vsel %vm200, %v1225, -1e+30
    %v1242 = vsel %vm201, %v1226, -1e+30
    %v1243 = vsel %vm202, %v1227, -1e+30
    %v1244 = vsel %vm203, %v1228, -1e+30
    %v1245 = vsel %vm204, %v1229, -1e+30
    %v1246 = vsel %vm205, %v1230, -1e+30
    %v1247 = vsel %vm206, %v1231, -1e+30
    %v1248 = vsel %vm207, %v1232, -1e+30
    %v1249 = vsel %vm208, %v1233, -1e+30
    %v1250 = vsel %vm209, %v1234, -1e+30
    %v1251 = vsel %vm210, %v1235, -1e+30
    %v1252 = vsel %vm211, %v1236, -1e+30
    %v1253 = vsel %vm212, %v1237, -1e+30
    %v1254 = vsel %vm213, %v1238, -1e+30
    %v1255 = vsel %vm214, %v1239, -1e+30
    %1256 = vmax.xlane.f32.xlu0 %v1240
    %v1257 = vpop.xlane.xlu0 %1256
    %1258 = vmax.xlane.f32.xlu0 %v1241
    %v1259 = vpop.xlane.xlu0 %1258
    %1260 = vmax.xlane.f32.xlu0 %v1242
    %v1261 = vpop.xlane.xlu0 %1260
    %1262 = vmax.xlane.f32.xlu0 %v1243
    %v1263 = vpop.xlane.xlu0 %1262
    %1264 = vmax.xlane.f32.xlu0 %v1244
    %v1265 = vpop.xlane.xlu0 %1264
    %1266 = vmax.xlane.f32.xlu0 %v1245
    %v1267 = vpop.xlane.xlu0 %1266
    %1268 = vmax.xlane.f32.xlu0 %v1246
    %v1269 = vpop.xlane.xlu0 %1268
    %1270 = vmax.xlane.f32.xlu0 %v1247
    %v1271 = vpop.xlane.xlu0 %1270
    %1272 = vmax.xlane.f32.xlu0 %v1248
    %v1273 = vpop.xlane.xlu0 %1272
    %1274 = vmax.xlane.f32.xlu0 %v1249
    %v1275 = vpop.xlane.xlu0 %1274
    %1276 = vmax.xlane.f32.xlu0 %v1250
    %v1277 = vpop.xlane.xlu0 %1276
    %1278 = vmax.xlane.f32.xlu0 %v1251
    %v1279 = vpop.xlane.xlu0 %1278
    %1280 = vmax.xlane.f32.xlu0 %v1252
    %v1281 = vpop.xlane.xlu0 %1280
    %1282 = vmax.xlane.f32.xlu0 %v1253
    %v1283 = vpop.xlane.xlu0 %1282
    %1284 = vmax.xlane.f32.xlu0 %v1254
    %v1285 = vpop.xlane.xlu0 %1284
    %1286 = vmax.xlane.f32.xlu0 %v1255
    %v1287 = vpop.xlane.xlu0 %1286
    %v1288 = vsub.f32 %v1240, %v1257
    %v1289 = vsub.f32 %v1241, %v1259
    %v1290 = vsub.f32 %v1242, %v1261
    %v1291 = vsub.f32 %v1243, %v1263
    %v1292 = vsub.f32 %v1244, %v1265
    %v1293 = vsub.f32 %v1245, %v1267
    %v1294 = vsub.f32 %v1246, %v1269
    %v1295 = vsub.f32 %v1247, %v1271
    %v1296 = vsub.f32 %v1248, %v1273
    %v1297 = vsub.f32 %v1249, %v1275
    %v1298 = vsub.f32 %v1250, %v1277
    %v1299 = vsub.f32 %v1251, %v1279
    %v1300 = vsub.f32 %v1252, %v1281
    %v1301 = vsub.f32 %v1253, %v1283
    %v1302 = vsub.f32 %v1254, %v1285
    %v1303 = vsub.f32 %v1255, %v1287
    %v1304 = vmul.f32 %v1288, 1.442695
    %v1305 = vpow.pop %v1304
    %v1306 = vmul.f32 %v1289, 1.442695
    %v1307 = vpow.pop %v1306
    %v1308 = vmul.f32 %v1290, 1.442695
    %v1309 = vpow.pop %v1308
    %v1310 = vmul.f32 %v1291, 1.442695
    %v1311 = vpow.pop %v1310
    %v1312 = vmul.f32 %v1292, 1.442695
    %v1313 = vpow.pop %v1312
    %v1314 = vmul.f32 %v1293, 1.442695
    %v1315 = vpow.pop %v1314
    %v1316 = vmul.f32 %v1294, 1.442695
    %v1317 = vpow.pop %v1316
    %v1318 = vmul.f32 %v1295, 1.442695
    %v1319 = vpow.pop %v1318
    %v1320 = vmul.f32 %v1296, 1.442695
    %v1321 = vpow.pop %v1320
    %v1322 = vmul.f32 %v1297, 1.442695
    %v1323 = vpow.pop %v1322
    %v1324 = vmul.f32 %v1298, 1.442695
    %v1325 = vpow.pop %v1324
    %v1326 = vmul.f32 %v1299, 1.442695
    %v1327 = vpow.pop %v1326
    %v1328 = vmul.f32 %v1300, 1.442695
    %v1329 = vpow.pop %v1328
    %v1330 = vmul.f32 %v1301, 1.442695
    %v1331 = vpow.pop %v1330
    %v1332 = vmul.f32 %v1302, 1.442695
    %v1333 = vpow.pop %v1332
    %v1334 = vmul.f32 %v1303, 1.442695
    %v1335 = vpow.pop %v1334
    %1336 = vadd.xlane.f32.xlu0 %v1305
    %v1337 = vpop.xlane.xlu0 %1336
    %1338 = vadd.xlane.f32.xlu0 %v1307
    %v1339 = vpop.xlane.xlu0 %1338
    %1340 = vadd.xlane.f32.xlu0 %v1309
    %v1341 = vpop.xlane.xlu0 %1340
    %1342 = vadd.xlane.f32.xlu0 %v1311
    %v1343 = vpop.xlane.xlu0 %1342
    %1344 = vadd.xlane.f32.xlu0 %v1313
    %v1345 = vpop.xlane.xlu0 %1344
    %1346 = vadd.xlane.f32.xlu0 %v1315
    %v1347 = vpop.xlane.xlu0 %1346
    %1348 = vadd.xlane.f32.xlu0 %v1317
    %v1349 = vpop.xlane.xlu0 %1348
    %1350 = vadd.xlane.f32.xlu0 %v1319
    %v1351 = vpop.xlane.xlu0 %1350
    %1352 = vadd.xlane.f32.xlu0 %v1321
    %v1353 = vpop.xlane.xlu0 %1352
    %1354 = vadd.xlane.f32.xlu0 %v1323
    %v1355 = vpop.xlane.xlu0 %1354
    %1356 = vadd.xlane.f32.xlu0 %v1325
    %v1357 = vpop.xlane.xlu0 %1356
    %1358 = vadd.xlane.f32.xlu0 %v1327
    %v1359 = vpop.xlane.xlu0 %1358
    %1360 = vadd.xlane.f32.xlu0 %v1329
    %v1361 = vpop.xlane.xlu0 %1360
    %1362 = vadd.xlane.f32.xlu0 %v1331
    %v1363 = vpop.xlane.xlu0 %1362
    %1364 = vadd.xlane.f32.xlu0 %v1333
    %v1365 = vpop.xlane.xlu0 %1364
    %1366 = vadd.xlane.f32.xlu0 %v1335
    %v1367 = vpop.xlane.xlu0 %1366
    %1368 = vmatprep.subr.mxu0 0.0
    %1369 = vmatpush1.msra.mxu0 %v1057
    %1370 = vmatprep.subr.mxu0 0.0
    %1371 = vmatpush1.msra.mxu0 %v1052
    %1372 = vmatprep.subr.mxu0 0.0
    %1373 = vmatpush1.msra.mxu0 %v1047
    %1374 = vmatprep.subr.mxu0 0.0
    %1375 = vmatpush1.msra.mxu0 %v1042
    %1376 = vmatprep.subr.mxu0 0.0
    %1377 = vmatpush1.msra.mxu0 %v1037
    %1378 = vmatprep.subr.mxu0 0.0
    %1379 = vmatpush1.msra.mxu0 %v1032
    %1380 = vmatprep.subr.mxu0 0.0
    %1381 = vmatpush1.msra.mxu0 %v1027
    %1382 = vmatprep.subr.mxu0 0.0
    %1383 = vmatpush1.msra.mxu0 %v1022
    %1384 = vmatprep.subr.mxu0 0.0
    %1385 = vmatpush1.msra.mxu0 %v1017
    %1386 = vmatprep.subr.mxu0 0.0
    %1387 = vmatpush1.msra.mxu0 %v1012
    %1388 = vmatprep.subr.mxu0 0.0
    %1389 = vmatpush1.msra.mxu0 %v1007
    %1390 = vmatprep.subr.mxu0 0.0
    %1391 = vmatpush1.msra.mxu0 %v1002
    %1392 = vmatprep.subr.mxu0 0.0
    %1393 = vmatpush1.msra.mxu0 %v997
    %1394 = vmatprep.subr.mxu0 0.0
    %1395 = vmatpush1.msra.mxu0 %v992
    %1396 = vmatprep.subr.mxu0 0.0
    %1397 = vmatpush1.msra.mxu0 %v987
    %1398 = vmatprep.subr.mxu0 0.0
    %1399 = vmatpush1.msra.mxu0 %v982
    %1400 = vmatprep.subr.mxu0 0.0
    %1401 = vmatpush2.msra.mxu0 0.0
    %1402 = vmatprep.subr.mxu0 0.0
    %1403 = vmatpush2.msra.mxu0 0.0
    %1404 = vmatprep.subr.mxu0 0.0
    %1405 = vmatpush2.msra.mxu0 0.0
    %1406 = vmatprep.subr.mxu0 0.0
    %1407 = vmatpush2.msra.mxu0 0.0
    %1408 = vmatprep.subr.mxu0 0.0
    %1409 = vmatpush2.msra.mxu0 0.0
    %1410 = vmatprep.subr.mxu0 0.0
    %1411 = vmatpush2.msra.mxu0 0.0
    %1412 = vmatprep.subr.mxu0 0.0
    %1413 = vmatpush2.msra.mxu0 0.0
    %1414 = vmatprep.subr.mxu0 0.0
    %1415 = vmatpush2.msra.mxu0 0.0
    %1416 = vmatprep.subr.mxu0 0.0
    %1417 = vmatpush2.msra.mxu0 0.0
    %1418 = vmatprep.subr.mxu0 0.0
    %1419 = vmatpush2.msra.mxu0 0.0
    %1420 = vmatprep.subr.mxu0 0.0
    %1421 = vmatpush2.msra.mxu0 0.0
    %1422 = vmatprep.subr.mxu0 0.0
    %1423 = vmatpush2.msra.mxu0 0.0
    %1424 = vmatprep.subr.mxu0 0.0
    %1425 = vmatpush2.msra.mxu0 0.0
    %1426 = vmatprep.subr.mxu0 0.0
    %1427 = vmatpush2.msra.mxu0 0.0
    %1428 = vmatprep.subr.mxu0 0.0
    %1429 = vmatpush2.msra.mxu0 0.0
    %1430 = vmatprep.subr.mxu0 0.0
    %1431 = vmatpush2.msra.mxu0 0.0
    %1432 = vmatprep.mubr.f32.mxu0 0.0
    %1433 = vmatmul.mubr.f32.gmra.mxu0 %v1305
    %v1434 = vpop.f32.mrf.mxu0
    %v1435 = vadd.f32 0.0, %v1434
    %v1436 = vpop.f32.mrf.mxu0
    %1437 = vmatprep.mubr.f32.mxu0 0.0
    %1438 = vmatmul.mubr.f32.gmra.mxu0 %v1307
    %v1439 = vpop.f32.mrf.mxu0
    %v1440 = vadd.f32 0.0, %v1439
    %v1441 = vpop.f32.mrf.mxu0
    %1442 = vmatprep.mubr.f32.mxu0 0.0
    %1443 = vmatmul.mubr.f32.gmra.mxu0 %v1309
    %v1444 = vpop.f32.mrf.mxu0
    %v1445 = vadd.f32 0.0, %v1444
    %v1446 = vpop.f32.mrf.mxu0
    %1447 = vmatprep.mubr.f32.mxu0 0.0
    %1448 = vmatmul.mubr.f32.gmra.mxu0 %v1311
    %v1449 = vpop.f32.mrf.mxu0
    %v1450 = vadd.f32 0.0, %v1449
    %v1451 = vpop.f32.mrf.mxu0
    %1452 = vmatprep.mubr.f32.mxu0 0.0
    %1453 = vmatmul.mubr.f32.gmra.mxu0 %v1313
    %v1454 = vpop.f32.mrf.mxu0
    %v1455 = vadd.f32 0.0, %v1454
    %v1456 = vpop.f32.mrf.mxu0
    %1457 = vmatprep.mubr.f32.mxu0 0.0
    %1458 = vmatmul.mubr.f32.gmra.mxu0 %v1315
    %v1459 = vpop.f32.mrf.mxu0
    %v1460 = vadd.f32 0.0, %v1459
    %v1461 = vpop.f32.mrf.mxu0
    %1462 = vmatprep.mubr.f32.mxu0 0.0
    %1463 = vmatmul.mubr.f32.gmra.mxu0 %v1317
    %v1464 = vpop.f32.mrf.mxu0
    %v1465 = vadd.f32 0.0, %v1464
    %v1466 = vpop.f32.mrf.mxu0
    %1467 = vmatprep.mubr.f32.mxu0 0.0
    %1468 = vmatmul.mubr.f32.gmra.mxu0 %v1319
    %v1469 = vpop.f32.mrf.mxu0
    %v1470 = vadd.f32 0.0, %v1469
    %v1471 = vpop.f32.mrf.mxu0
    %1472 = vmatprep.mubr.f32.mxu0 0.0
    %1473 = vmatmul.mubr.f32.gmra.mxu0 %v1321
    %v1474 = vpop.f32.mrf.mxu0
    %v1475 = vadd.f32 0.0, %v1474
    %v1476 = vpop.f32.mrf.mxu0
    %1477 = vmatprep.mubr.f32.mxu0 0.0
    %1478 = vmatmul.mubr.f32.gmra.mxu0 %v1323
    %v1479 = vpop.f32.mrf.mxu0
    %v1480 = vadd.f32 0.0, %v1479
    %v1481 = vpop.f32.mrf.mxu0
    %1482 = vmatprep.mubr.f32.mxu0 0.0
    %1483 = vmatmul.mubr.f32.gmra.mxu0 %v1325
    %v1484 = vpop.f32.mrf.mxu0
    %v1485 = vadd.f32 0.0, %v1484
    %v1486 = vpop.f32.mrf.mxu0
    %1487 = vmatprep.mubr.f32.mxu0 0.0
    %1488 = vmatmul.mubr.f32.gmra.mxu0 %v1327
    %v1489 = vpop.f32.mrf.mxu0
    %v1490 = vadd.f32 0.0, %v1489
    %v1491 = vpop.f32.mrf.mxu0
    %1492 = vmatprep.mubr.f32.mxu0 0.0
    %1493 = vmatmul.mubr.f32.gmra.mxu0 %v1329
    %v1494 = vpop.f32.mrf.mxu0
    %v1495 = vadd.f32 0.0, %v1494
    %v1496 = vpop.f32.mrf.mxu0
    %1497 = vmatprep.mubr.f32.mxu0 0.0
    %1498 = vmatmul.mubr.f32.gmra.mxu0 %v1331
    %v1499 = vpop.f32.mrf.mxu0
    %v1500 = vadd.f32 0.0, %v1499
    %v1501 = vpop.f32.mrf.mxu0
    %1502 = vmatprep.mubr.f32.mxu0 0.0
    %1503 = vmatmul.mubr.f32.gmra.mxu0 %v1333
    %v1504 = vpop.f32.mrf.mxu0
    %v1505 = vadd.f32 0.0, %v1504
    %v1506 = vpop.f32.mrf.mxu0
    %1507 = vmatprep.mubr.f32.mxu0 0.0
    %1508 = vmatmul.mubr.f32.gmra.mxu0 %v1335
    %v1509 = vpop.f32.mrf.mxu0
    %v1510 = vadd.f32 0.0, %v1509
    %v1511 = vpop.f32.mrf.mxu0
    %1512 = vdwg.mxu0
    %v1513 = vrcp.pop %v1337
    %v1514 = vmul.f32 %v1435, %v1513
    %v1515 = vrcp.pop %v1339
    %v1516 = vmul.f32 %v1440, %v1515
    %v1517 = vrcp.pop %v1341
    %v1518 = vmul.f32 %v1445, %v1517
    %v1519 = vrcp.pop %v1343
    %v1520 = vmul.f32 %v1450, %v1519
    %v1521 = vrcp.pop %v1345
    %v1522 = vmul.f32 %v1455, %v1521
    %v1523 = vrcp.pop %v1347
    %v1524 = vmul.f32 %v1460, %v1523
    %v1525 = vrcp.pop %v1349
    %v1526 = vmul.f32 %v1465, %v1525
    %v1527 = vrcp.pop %v1351
    %v1528 = vmul.f32 %v1470, %v1527
    %v1529 = vrcp.pop %v1353
    %v1530 = vmul.f32 %v1475, %v1529
    %v1531 = vrcp.pop %v1355
    %v1532 = vmul.f32 %v1480, %v1531
    %v1533 = vrcp.pop %v1357
    %v1534 = vmul.f32 %v1485, %v1533
    %v1535 = vrcp.pop %v1359
    %v1536 = vmul.f32 %v1490, %v1535
    %v1537 = vrcp.pop %v1361
    %v1538 = vmul.f32 %v1495, %v1537
    %v1539 = vrcp.pop %v1363
    %v1540 = vmul.f32 %v1500, %v1539
    %v1541 = vrcp.pop %v1365
    %v1542 = vmul.f32 %v1505, %v1541
    %v1543 = vrcp.pop %v1367
    %v1544 = vmul.f32 %v1510, %v1543
    %s1545 = scalar_lea.vmem %s6, 1
    %v1546 = vld [vmem:[%s1545] sm:$0x1]
    %v1548 = vlaneseq
    %v1549 = vshrl.u32 %v1548, 7
    %v1550 = vsub.s32 0, %v1549
    %v1551 = vrot.slane %v1546, %v1550
    %v1553 = vadd.f32 %v1514, %v1551
    %v1554 = vadd.f32 %v1516, %v1551
    %v1555 = vadd.f32 %v1518, %v1551
    %v1556 = vadd.f32 %v1520, %v1551
    %v1557 = vadd.f32 %v1522, %v1551
    %v1558 = vadd.f32 %v1524, %v1551
    %v1559 = vadd.f32 %v1526, %v1551
    %v1560 = vadd.f32 %v1528, %v1551
    %v1561 = vadd.f32 %v1530, %v1551
    %v1562 = vadd.f32 %v1532, %v1551
    %v1563 = vadd.f32 %v1534, %v1551
    %v1564 = vadd.f32 %v1536, %v1551
    %v1565 = vadd.f32 %v1538, %v1551
    %v1566 = vadd.f32 %v1540, %v1551
    %v1567 = vadd.f32 %v1542, %v1551
    %v1568 = vadd.f32 %v1544, %v1551
    %v1569 = vmax.f32 %v1553, 0.0
    %v1570 = vmax.f32 %v1554, 0.0
    %v1571 = vmax.f32 %v1555, 0.0
    %v1572 = vmax.f32 %v1556, 0.0
    %v1573 = vmax.f32 %v1557, 0.0
    %v1574 = vmax.f32 %v1558, 0.0
    %v1575 = vmax.f32 %v1559, 0.0
    %v1576 = vmax.f32 %v1560, 0.0
    %v1577 = vmax.f32 %v1561, 0.0
    %v1578 = vmax.f32 %v1562, 0.0
    %v1579 = vmax.f32 %v1563, 0.0
    %v1580 = vmax.f32 %v1564, 0.0
    %v1581 = vmax.f32 %v1565, 0.0
    %v1582 = vmax.f32 %v1566, 0.0
    %v1583 = vmax.f32 %v1567, 0.0
    %v1584 = vmax.f32 %v1568, 0.0
    %s1585 = scalar_lea.vmem [#allocation8], 256
    %v1586 = vld [vmem:[%s1585] sm:$0xff]
    %v1587 = vld [vmem:[%s1585 + $0x8] sm:$0xff]
    %v1588 = vld [vmem:[%s1585 + $0x10] sm:$0xff]
    %v1589 = vld [vmem:[%s1585 + $0x18] sm:$0xff]
    %v1590 = vld [vmem:[%s1585 + $0x20] sm:$0xff]
    %v1591 = vld [vmem:[%s1585 + $0x28] sm:$0xff]
    %v1592 = vld [vmem:[%s1585 + $0x30] sm:$0xff]
    %v1593 = vld [vmem:[%s1585 + $0x38] sm:$0xff]
    %v1594 = vld [vmem:[%s1585 + $0x40] sm:$0xff]
    %v1595 = vld [vmem:[%s1585 + $0x48] sm:$0xff]
    %v1596 = vld [vmem:[%s1585 + $0x50] sm:$0xff]
    %v1597 = vld [vmem:[%s1585 + $0x58] sm:$0xff]
    %v1598 = vld [vmem:[%s1585 + $0x60] sm:$0xff]
    %v1599 = vld [vmem:[%s1585 + $0x68] sm:$0xff]
    %v1600 = vld [vmem:[%s1585 + $0x70] sm:$0xff]
    %v1601 = vld [vmem:[%s1585 + $0x78] sm:$0xff]
    %1602 = vmatprep.subr.mxu0 0.0
    %1603 = vmatpush1.msra.mxu0 %v1601
    %1604 = vmatprep.subr.mxu0 0.0
    %1605 = vmatpush1.msra.mxu0 %v1600
    %1606 = vmatprep.subr.mxu0 0.0
    %1607 = vmatpush1.msra.mxu0 %v1599
    %1608 = vmatprep.subr.mxu0 0.0
    %1609 = vmatpush1.msra.mxu0 %v1598
    %1610 = vmatprep.subr.mxu0 0.0
    %1611 = vmatpush1.msra.mxu0 %v1597
    %1612 = vmatprep.subr.mxu0 0.0
    %1613 = vmatpush1.msra.mxu0 %v1596
    %1614 = vmatprep.subr.mxu0 0.0
    %1615 = vmatpush1.msra.mxu0 %v1595
    %1616 = vmatprep.subr.mxu0 0.0
    %1617 = vmatpush1.msra.mxu0 %v1594
    %1618 = vmatprep.subr.mxu0 0.0
    %1619 = vmatpush1.msra.mxu0 %v1593
    %1620 = vmatprep.subr.mxu0 0.0
    %1621 = vmatpush1.msra.mxu0 %v1592
    %1622 = vmatprep.subr.mxu0 0.0
    %1623 = vmatpush1.msra.mxu0 %v1591
    %1624 = vmatprep.subr.mxu0 0.0
    %1625 = vmatpush1.msra.mxu0 %v1590
    %1626 = vmatprep.subr.mxu0 0.0
    %1627 = vmatpush1.msra.mxu0 %v1589
    %1628 = vmatprep.subr.mxu0 0.0
    %1629 = vmatpush1.msra.mxu0 %v1588
    %1630 = vmatprep.subr.mxu0 0.0
    %1631 = vmatpush1.msra.mxu0 %v1587
    %1632 = vmatprep.subr.mxu0 0.0
    %1633 = vmatpush1.msra.mxu0 %v1586
    %1634 = vmatprep.subr.mxu0 0.0
    %1635 = vmatpush2.msra.mxu0 0.0
    %1636 = vmatprep.subr.mxu0 0.0
    %1637 = vmatpush2.msra.mxu0 0.0
    %1638 = vmatprep.subr.mxu0 0.0
    %1639 = vmatpush2.msra.mxu0 0.0
    %1640 = vmatprep.subr.mxu0 0.0
    %1641 = vmatpush2.msra.mxu0 0.0
    %1642 = vmatprep.subr.mxu0 0.0
    %1643 = vmatpush2.msra.mxu0 0.0
    %1644 = vmatprep.subr.mxu0 0.0
    %1645 = vmatpush2.msra.mxu0 0.0
    %1646 = vmatprep.subr.mxu0 0.0
    %1647 = vmatpush2.msra.mxu0 0.0
    %1648 = vmatprep.subr.mxu0 0.0
    %1649 = vmatpush2.msra.mxu0 0.0
    %1650 = vmatprep.subr.mxu0 0.0
    %1651 = vmatpush2.msra.mxu0 0.0
    %1652 = vmatprep.subr.mxu0 0.0
    %1653 = vmatpush2.msra.mxu0 0.0
    %1654 = vmatprep.subr.mxu0 0.0
    %1655 = vmatpush2.msra.mxu0 0.0
    %1656 = vmatprep.subr.mxu0 0.0
    %1657 = vmatpush2.msra.mxu0 0.0
    %1658 = vmatprep.subr.mxu0 0.0
    %1659 = vmatpush2.msra.mxu0 0.0
    %1660 = vmatprep.subr.mxu0 0.0
    %1661 = vmatpush2.msra.mxu0 0.0
    %1662 = vmatprep.subr.mxu0 0.0
    %1663 = vmatpush2.msra.mxu0 0.0
    %1664 = vmatprep.subr.mxu0 0.0
    %1665 = vmatpush2.msra.mxu0 0.0
    %1666 = vmatprep.mubr.f32.mxu0 0.0
    %1667 = vmatmul.mubr.f32.gmra.mxu0 %v1569
    %v1668 = vpop.f32.mrf.mxu0
    %v1669 = vadd.f32 0.0, %v1668
    %v1670 = vpop.f32.mrf.mxu0
    %1671 = vmatprep.mubr.f32.mxu0 0.0
    %1672 = vmatmul.mubr.f32.gmra.mxu0 %v1570
    %v1673 = vpop.f32.mrf.mxu0
    %v1674 = vadd.f32 0.0, %v1673
    %v1675 = vpop.f32.mrf.mxu0
    %1676 = vmatprep.mubr.f32.mxu0 0.0
    %1677 = vmatmul.mubr.f32.gmra.mxu0 %v1571
    %v1678 = vpop.f32.mrf.mxu0
    %v1679 = vadd.f32 0.0, %v1678
    %v1680 = vpop.f32.mrf.mxu0
    %1681 = vmatprep.mubr.f32.mxu0 0.0
    %1682 = vmatmul.mubr.f32.gmra.mxu0 %v1572
    %v1683 = vpop.f32.mrf.mxu0
    %v1684 = vadd.f32 0.0, %v1683
    %v1685 = vpop.f32.mrf.mxu0
    %1686 = vmatprep.mubr.f32.mxu0 0.0
    %1687 = vmatmul.mubr.f32.gmra.mxu0 %v1573
    %v1688 = vpop.f32.mrf.mxu0
    %v1689 = vadd.f32 0.0, %v1688
    %v1690 = vpop.f32.mrf.mxu0
    %1691 = vmatprep.mubr.f32.mxu0 0.0
    %1692 = vmatmul.mubr.f32.gmra.mxu0 %v1574
    %v1693 = vpop.f32.mrf.mxu0
    %v1694 = vadd.f32 0.0, %v1693
    %v1695 = vpop.f32.mrf.mxu0
    %1696 = vmatprep.mubr.f32.mxu0 0.0
    %1697 = vmatmul.mubr.f32.gmra.mxu0 %v1575
    %v1698 = vpop.f32.mrf.mxu0
    %v1699 = vadd.f32 0.0, %v1698
    %v1700 = vpop.f32.mrf.mxu0
    %1701 = vmatprep.mubr.f32.mxu0 0.0
    %1702 = vmatmul.mubr.f32.gmra.mxu0 %v1576
    %v1703 = vpop.f32.mrf.mxu0
    %v1704 = vadd.f32 0.0, %v1703
    %v1705 = vpop.f32.mrf.mxu0
    %1706 = vmatprep.mubr.f32.mxu0 0.0
    %1707 = vmatmul.mubr.f32.gmra.mxu0 %v1577
    %v1708 = vpop.f32.mrf.mxu0
    %v1709 = vadd.f32 0.0, %v1708
    %v1710 = vpop.f32.mrf.mxu0
    %1711 = vmatprep.mubr.f32.mxu0 0.0
    %1712 = vmatmul.mubr.f32.gmra.mxu0 %v1578
    %v1713 = vpop.f32.mrf.mxu0
    %v1714 = vadd.f32 0.0, %v1713
    %v1715 = vpop.f32.mrf.mxu0
    %1716 = vmatprep.mubr.f32.mxu0 0.0
    %1717 = vmatmul.mubr.f32.gmra.mxu0 %v1579
    %v1718 = vpop.f32.mrf.mxu0
    %v1719 = vadd.f32 0.0, %v1718
    %v1720 = vpop.f32.mrf.mxu0
    %1721 = vmatprep.mubr.f32.mxu0 0.0
    %1722 = vmatmul.mubr.f32.gmra.mxu0 %v1580
    %v1723 = vpop.f32.mrf.mxu0
    %v1724 = vadd.f32 0.0, %v1723
    %v1725 = vpop.f32.mrf.mxu0
    %1726 = vmatprep.mubr.f32.mxu0 0.0
    %1727 = vmatmul.mubr.f32.gmra.mxu0 %v1581
    %v1728 = vpop.f32.mrf.mxu0
    %v1729 = vadd.f32 0.0, %v1728
    %v1730 = vpop.f32.mrf.mxu0
    %1731 = vmatprep.mubr.f32.mxu0 0.0
    %1732 = vmatmul.mubr.f32.gmra.mxu0 %v1582
    %v1733 = vpop.f32.mrf.mxu0
    %v1734 = vadd.f32 0.0, %v1733
    %v1735 = vpop.f32.mrf.mxu0
    %1736 = vmatprep.mubr.f32.mxu0 0.0
    %1737 = vmatmul.mubr.f32.gmra.mxu0 %v1583
    %v1738 = vpop.f32.mrf.mxu0
    %v1739 = vadd.f32 0.0, %v1738
    %v1740 = vpop.f32.mrf.mxu0
    %1741 = vmatprep.mubr.f32.mxu0 0.0
    %1742 = vmatmul.mubr.f32.gmra.mxu0 %v1584
    %v1743 = vpop.f32.mrf.mxu0
    %v1744 = vadd.f32 0.0, %v1743
    %v1745 = vpop.f32.mrf.mxu0
    %1746 = vdwg.mxu0
    %s1747 = scalar_lea.vmem %s4, 2
    %v1748 = vld [vmem:[%s1747] sm:$0x1]
    %1749 = vmatprep.subr.mxu0 0.0
    %1750 = vmatpush1.xpose.msra.mxu0 %v1744
    %1751 = vmatprep.subr.mxu0 0.0
    %1752 = vmatpush1.xpose.msra.mxu0 %v1739
    %1753 = vmatprep.subr.mxu0 0.0
    %1754 = vmatpush1.xpose.msra.mxu0 %v1734
    %1755 = vmatprep.subr.mxu0 0.0
    %1756 = vmatpush1.xpose.msra.mxu0 %v1729
    %1757 = vmatprep.subr.mxu0 0.0
    %1758 = vmatpush1.xpose.msra.mxu0 %v1724
    %1759 = vmatprep.subr.mxu0 0.0
    %1760 = vmatpush1.xpose.msra.mxu0 %v1719
    %1761 = vmatprep.subr.mxu0 0.0
    %1762 = vmatpush1.xpose.msra.mxu0 %v1714
    %1763 = vmatprep.subr.mxu0 0.0
    %1764 = vmatpush1.xpose.msra.mxu0 %v1709
    %1765 = vmatprep.subr.mxu0 0.0
    %1766 = vmatpush1.xpose.msra.mxu0 %v1704
    %1767 = vmatprep.subr.mxu0 0.0
    %1768 = vmatpush1.xpose.msra.mxu0 %v1699
    %1769 = vmatprep.subr.mxu0 0.0
    %1770 = vmatpush1.xpose.msra.mxu0 %v1694
    %1771 = vmatprep.subr.mxu0 0.0
    %1772 = vmatpush1.xpose.msra.mxu0 %v1689
    %1773 = vmatprep.subr.mxu0 0.0
    %1774 = vmatpush1.xpose.msra.mxu0 %v1684
    %1775 = vmatprep.subr.mxu0 0.0
    %1776 = vmatpush1.xpose.msra.mxu0 %v1679
    %1777 = vmatprep.subr.mxu0 0.0
    %1778 = vmatpush1.xpose.msra.mxu0 %v1674
    %1779 = vmatprep.subr.mxu0 0.0
    %1780 = vmatpush1.xpose.msra.mxu0 %v1669
    %1781 = vmatprep.subr.mxu0 0.0
    %1782 = vmatpush2.xpose.msra.mxu0 0.0
    %1783 = vmatprep.subr.mxu0 0.0
    %1784 = vmatpush2.xpose.msra.mxu0 0.0
    %1785 = vmatprep.subr.mxu0 0.0
    %1786 = vmatpush2.xpose.msra.mxu0 0.0
    %1787 = vmatprep.subr.mxu0 0.0
    %1788 = vmatpush2.xpose.msra.mxu0 0.0
    %1789 = vmatprep.subr.mxu0 0.0
    %1790 = vmatpush2.xpose.msra.mxu0 0.0
    %1791 = vmatprep.subr.mxu0 0.0
    %1792 = vmatpush2.xpose.msra.mxu0 0.0
    %1793 = vmatprep.subr.mxu0 0.0
    %1794 = vmatpush2.xpose.msra.mxu0 0.0
    %1795 = vmatprep.subr.mxu0 0.0
    %1796 = vmatpush2.xpose.msra.mxu0 0.0
    %1797 = vmatprep.subr.mxu0 0.0
    %1798 = vmatpush2.xpose.msra.mxu0 0.0
    %1799 = vmatprep.subr.mxu0 0.0
    %1800 = vmatpush2.xpose.msra.mxu0 0.0
    %1801 = vmatprep.subr.mxu0 0.0
    %1802 = vmatpush2.xpose.msra.mxu0 0.0
    %1803 = vmatprep.subr.mxu0 0.0
    %1804 = vmatpush2.xpose.msra.mxu0 0.0
    %1805 = vmatprep.subr.mxu0 0.0
    %1806 = vmatpush2.xpose.msra.mxu0 0.0
    %1807 = vmatprep.subr.mxu0 0.0
    %1808 = vmatpush2.xpose.msra.mxu0 0.0
    %1809 = vmatprep.subr.mxu0 0.0
    %1810 = vmatpush2.xpose.msra.mxu0 0.0
    %1811 = vmatprep.subr.mxu0 0.0
    %1812 = vmatpush2.xpose.msra.mxu0 0.0
    %1813 = vmatprep.mubr.f32.mxu0 0.0
    %1814 = vmatmul.mubr.f32.gmra.mxu0 %v1748
    %v1815 = vpop.f32.mrf.mxu0
    %v1816 = vadd.f32 0.0, %v1815
    %v1817 = vpop.f32.mrf.mxu0
    %1818 = vdwg.mxu0
    %s1819 = scalar_lea.vmem [#allocation10], 2
    %v1820 = vld [vmem:[%s1819] sm:$0x1]
    %v1822 = vlaneseq
    %v1823 = vshrl.u32 %v1822, 7
    %v1824 = vsub.s32 0, %v1823
    %v1825 = vrot.slane %v1820, %v1824
    %v1827 = vmul.f32 %v1669, %v1825
    %v1828 = vmul.f32 %v1674, %v1825
    %v1829 = vmul.f32 %v1679, %v1825
    %v1830 = vmul.f32 %v1684, %v1825
    %v1831 = vmul.f32 %v1689, %v1825
    %v1832 = vmul.f32 %v1694, %v1825
    %v1833 = vmul.f32 %v1699, %v1825
    %v1834 = vmul.f32 %v1704, %v1825
    %v1835 = vmul.f32 %v1709, %v1825
    %v1836 = vmul.f32 %v1714, %v1825
    %v1837 = vmul.f32 %v1719, %v1825
    %v1838 = vmul.f32 %v1724, %v1825
    %v1839 = vmul.f32 %v1729, %v1825
    %v1840 = vmul.f32 %v1734, %v1825
    %v1841 = vmul.f32 %v1739, %v1825
    %v1842 = vmul.f32 %v1744, %v1825
    %1843 = vadd.xlane.f32.xlu0 %v1827
    %v1844 = vpop.xlane.xlu0 %1843
    %1845 = vadd.xlane.f32.xlu0 %v1828
    %v1846 = vpop.xlane.xlu0 %1845
    %1847 = vadd.xlane.f32.xlu0 %v1829
    %v1848 = vpop.xlane.xlu0 %1847
    %1849 = vadd.xlane.f32.xlu0 %v1830
    %v1850 = vpop.xlane.xlu0 %1849
    %1851 = vadd.xlane.f32.xlu0 %v1831
    %v1852 = vpop.xlane.xlu0 %1851
    %1853 = vadd.xlane.f32.xlu0 %v1832
    %v1854 = vpop.xlane.xlu0 %1853
    %1855 = vadd.xlane.f32.xlu0 %v1833
    %v1856 = vpop.xlane.xlu0 %1855
    %1857 = vadd.xlane.f32.xlu0 %v1834
    %v1858 = vpop.xlane.xlu0 %1857
    %1859 = vadd.xlane.f32.xlu0 %v1835
    %v1860 = vpop.xlane.xlu0 %1859
    %1861 = vadd.xlane.f32.xlu0 %v1836
    %v1862 = vpop.xlane.xlu0 %1861
    %1863 = vadd.xlane.f32.xlu0 %v1837
    %v1864 = vpop.xlane.xlu0 %1863
    %1865 = vadd.xlane.f32.xlu0 %v1838
    %v1866 = vpop.xlane.xlu0 %1865
    %1867 = vadd.xlane.f32.xlu0 %v1839
    %v1868 = vpop.xlane.xlu0 %1867
    %1869 = vadd.xlane.f32.xlu0 %v1840
    %v1870 = vpop.xlane.xlu0 %1869
    %1871 = vadd.xlane.f32.xlu0 %v1841
    %v1872 = vpop.xlane.xlu0 %1871
    %1873 = vadd.xlane.f32.xlu0 %v1842
    %v1874 = vpop.xlane.xlu0 %1873
    %v1875 = vlaneseq
    %v1876 = vshrl.u32 %v1875, 7
    %v1877 = vsub.s32 0, %v1876
    %v1878 = vrot.slane %v1816, %v1877
    %v1879 = vadd.f32 %v1844, %v1878
    %v1880 = vadd.f32 %v1846, %v1878
    %v1881 = vadd.f32 %v1848, %v1878
    %v1882 = vadd.f32 %v1850, %v1878
    %v1883 = vadd.f32 %v1852, %v1878
    %v1884 = vadd.f32 %v1854, %v1878
    %v1885 = vadd.f32 %v1856, %v1878
    %v1886 = vadd.f32 %v1858, %v1878
    %v1887 = vadd.f32 %v1860, %v1878
    %v1888 = vadd.f32 %v1862, %v1878
    %v1889 = vadd.f32 %v1864, %v1878
    %v1890 = vadd.f32 %v1866, %v1878
    %v1891 = vadd.f32 %v1868, %v1878
    %v1892 = vadd.f32 %v1870, %v1878
    %v1893 = vadd.f32 %v1872, %v1878
    %v1894 = vadd.f32 %v1874, %v1878
    %v1895 = vmul.f32 %v1879, 0.2
    %v1896 = vmul.f32 %v1880, 0.2
    %v1897 = vmul.f32 %v1881, 0.2
    %v1898 = vmul.f32 %v1882, 0.2
    %v1899 = vmul.f32 %v1883, 0.2
    %v1900 = vmul.f32 %v1884, 0.2
    %v1901 = vmul.f32 %v1885, 0.2
    %v1902 = vmul.f32 %v1886, 0.2
    %v1903 = vmul.f32 %v1887, 0.2
    %v1904 = vmul.f32 %v1888, 0.2
    %v1905 = vmul.f32 %v1889, 0.2
    %v1906 = vmul.f32 %v1890, 0.2
    %v1907 = vmul.f32 %v1891, 0.2
    %v1908 = vmul.f32 %v1892, 0.2
    %v1909 = vmul.f32 %v1893, 0.2
    %v1910 = vmul.f32 %v1894, 0.2
    %v1911 = vmax.f32 %v1879, %v1895
    %v1912 = vmax.f32 %v1880, %v1896
    %v1913 = vmax.f32 %v1881, %v1897
    %v1914 = vmax.f32 %v1882, %v1898
    %v1915 = vmax.f32 %v1883, %v1899
    %v1916 = vmax.f32 %v1884, %v1900
    %v1917 = vmax.f32 %v1885, %v1901
    %v1918 = vmax.f32 %v1886, %v1902
    %v1919 = vmax.f32 %v1887, %v1903
    %v1920 = vmax.f32 %v1888, %v1904
    %v1921 = vmax.f32 %v1889, %v1905
    %v1922 = vmax.f32 %v1890, %v1906
    %v1923 = vmax.f32 %v1891, %v1907
    %v1924 = vmax.f32 %v1892, %v1908
    %v1925 = vmax.f32 %v1893, %v1909
    %v1926 = vmax.f32 %v1894, %v1910
    %v1927 = vsel %vm147, %v1911, -1e+30
    %v1928 = vsel %vm148, %v1912, -1e+30
    %v1929 = vsel %vm149, %v1913, -1e+30
    %v1930 = vsel %vm150, %v1914, -1e+30
    %v1931 = vsel %vm151, %v1915, -1e+30
    %v1932 = vsel %vm152, %v1916, -1e+30
    %v1933 = vsel %vm153, %v1917, -1e+30
    %v1934 = vsel %vm154, %v1918, -1e+30
    %v1935 = vsel %vm155, %v1919, -1e+30
    %v1936 = vsel %vm156, %v1920, -1e+30
    %v1937 = vsel %vm157, %v1921, -1e+30
    %v1938 = vsel %vm158, %v1922, -1e+30
    %v1939 = vsel %vm159, %v1923, -1e+30
    %v1940 = vsel %vm160, %v1924, -1e+30
    %v1941 = vsel %vm161, %v1925, -1e+30
    %v1942 = vsel %vm162, %v1926, -1e+30
    %1943 = vmax.xlane.f32.xlu0 %v1927
    %v1944 = vpop.xlane.xlu0 %1943
    %1945 = vmax.xlane.f32.xlu0 %v1928
    %v1946 = vpop.xlane.xlu0 %1945
    %1947 = vmax.xlane.f32.xlu0 %v1929
    %v1948 = vpop.xlane.xlu0 %1947
    %1949 = vmax.xlane.f32.xlu0 %v1930
    %v1950 = vpop.xlane.xlu0 %1949
    %1951 = vmax.xlane.f32.xlu0 %v1931
    %v1952 = vpop.xlane.xlu0 %1951
    %1953 = vmax.xlane.f32.xlu0 %v1932
    %v1954 = vpop.xlane.xlu0 %1953
    %1955 = vmax.xlane.f32.xlu0 %v1933
    %v1956 = vpop.xlane.xlu0 %1955
    %1957 = vmax.xlane.f32.xlu0 %v1934
    %v1958 = vpop.xlane.xlu0 %1957
    %1959 = vmax.xlane.f32.xlu0 %v1935
    %v1960 = vpop.xlane.xlu0 %1959
    %1961 = vmax.xlane.f32.xlu0 %v1936
    %v1962 = vpop.xlane.xlu0 %1961
    %1963 = vmax.xlane.f32.xlu0 %v1937
    %v1964 = vpop.xlane.xlu0 %1963
    %1965 = vmax.xlane.f32.xlu0 %v1938
    %v1966 = vpop.xlane.xlu0 %1965
    %1967 = vmax.xlane.f32.xlu0 %v1939
    %v1968 = vpop.xlane.xlu0 %1967
    %1969 = vmax.xlane.f32.xlu0 %v1940
    %v1970 = vpop.xlane.xlu0 %1969
    %1971 = vmax.xlane.f32.xlu0 %v1941
    %v1972 = vpop.xlane.xlu0 %1971
    %1973 = vmax.xlane.f32.xlu0 %v1942
    %v1974 = vpop.xlane.xlu0 %1973
    %v1975 = vsub.f32 %v1927, %v1944
    %v1976 = vsub.f32 %v1928, %v1946
    %v1977 = vsub.f32 %v1929, %v1948
    %v1978 = vsub.f32 %v1930, %v1950
    %v1979 = vsub.f32 %v1931, %v1952
    %v1980 = vsub.f32 %v1932, %v1954
    %v1981 = vsub.f32 %v1933, %v1956
    %v1982 = vsub.f32 %v1934, %v1958
    %v1983 = vsub.f32 %v1935, %v1960
    %v1984 = vsub.f32 %v1936, %v1962
    %v1985 = vsub.f32 %v1937, %v1964
    %v1986 = vsub.f32 %v1938, %v1966
    %v1987 = vsub.f32 %v1939, %v1968
    %v1988 = vsub.f32 %v1940, %v1970
    %v1989 = vsub.f32 %v1941, %v1972
    %v1990 = vsub.f32 %v1942, %v1974
    %v1991 = vmul.f32 %v1975, 1.442695
    %v1992 = vpow.pop %v1991
    %v1993 = vmul.f32 %v1976, 1.442695
    %v1994 = vpow.pop %v1993
    %v1995 = vmul.f32 %v1977, 1.442695
    %v1996 = vpow.pop %v1995
    %v1997 = vmul.f32 %v1978, 1.442695
    %v1998 = vpow.pop %v1997
    %v1999 = vmul.f32 %v1979, 1.442695
    %v2000 = vpow.pop %v1999
    %v2001 = vmul.f32 %v1980, 1.442695
    %v2002 = vpow.pop %v2001
    %v2003 = vmul.f32 %v1981, 1.442695
    %v2004 = vpow.pop %v2003
    %v2005 = vmul.f32 %v1982, 1.442695
    %v2006 = vpow.pop %v2005
    %v2007 = vmul.f32 %v1983, 1.442695
    %v2008 = vpow.pop %v2007
    %v2009 = vmul.f32 %v1984, 1.442695
    %v2010 = vpow.pop %v2009
    %v2011 = vmul.f32 %v1985, 1.442695
    %v2012 = vpow.pop %v2011
    %v2013 = vmul.f32 %v1986, 1.442695
    %v2014 = vpow.pop %v2013
    %v2015 = vmul.f32 %v1987, 1.442695
    %v2016 = vpow.pop %v2015
    %v2017 = vmul.f32 %v1988, 1.442695
    %v2018 = vpow.pop %v2017
    %v2019 = vmul.f32 %v1989, 1.442695
    %v2020 = vpow.pop %v2019
    %v2021 = vmul.f32 %v1990, 1.442695
    %v2022 = vpow.pop %v2021
    %2023 = vadd.xlane.f32.xlu0 %v1992
    %v2024 = vpop.xlane.xlu0 %2023
    %2025 = vadd.xlane.f32.xlu0 %v1994
    %v2026 = vpop.xlane.xlu0 %2025
    %2027 = vadd.xlane.f32.xlu0 %v1996
    %v2028 = vpop.xlane.xlu0 %2027
    %2029 = vadd.xlane.f32.xlu0 %v1998
    %v2030 = vpop.xlane.xlu0 %2029
    %2031 = vadd.xlane.f32.xlu0 %v2000
    %v2032 = vpop.xlane.xlu0 %2031
    %2033 = vadd.xlane.f32.xlu0 %v2002
    %v2034 = vpop.xlane.xlu0 %2033
    %2035 = vadd.xlane.f32.xlu0 %v2004
    %v2036 = vpop.xlane.xlu0 %2035
    %2037 = vadd.xlane.f32.xlu0 %v2006
    %v2038 = vpop.xlane.xlu0 %2037
    %2039 = vadd.xlane.f32.xlu0 %v2008
    %v2040 = vpop.xlane.xlu0 %2039
    %2041 = vadd.xlane.f32.xlu0 %v2010
    %v2042 = vpop.xlane.xlu0 %2041
    %2043 = vadd.xlane.f32.xlu0 %v2012
    %v2044 = vpop.xlane.xlu0 %2043
    %2045 = vadd.xlane.f32.xlu0 %v2014
    %v2046 = vpop.xlane.xlu0 %2045
    %2047 = vadd.xlane.f32.xlu0 %v2016
    %v2048 = vpop.xlane.xlu0 %2047
    %2049 = vadd.xlane.f32.xlu0 %v2018
    %v2050 = vpop.xlane.xlu0 %2049
    %2051 = vadd.xlane.f32.xlu0 %v2020
    %v2052 = vpop.xlane.xlu0 %2051
    %2053 = vadd.xlane.f32.xlu0 %v2022
    %v2054 = vpop.xlane.xlu0 %2053
    %2055 = vmatprep.subr.mxu0 0.0
    %2056 = vmatpush1.msra.mxu0 %v1744
    %2057 = vmatprep.subr.mxu0 0.0
    %2058 = vmatpush1.msra.mxu0 %v1739
    %2059 = vmatprep.subr.mxu0 0.0
    %2060 = vmatpush1.msra.mxu0 %v1734
    %2061 = vmatprep.subr.mxu0 0.0
    %2062 = vmatpush1.msra.mxu0 %v1729
    %2063 = vmatprep.subr.mxu0 0.0
    %2064 = vmatpush1.msra.mxu0 %v1724
    %2065 = vmatprep.subr.mxu0 0.0
    %2066 = vmatpush1.msra.mxu0 %v1719
    %2067 = vmatprep.subr.mxu0 0.0
    %2068 = vmatpush1.msra.mxu0 %v1714
    %2069 = vmatprep.subr.mxu0 0.0
    %2070 = vmatpush1.msra.mxu0 %v1709
    %2071 = vmatprep.subr.mxu0 0.0
    %2072 = vmatpush1.msra.mxu0 %v1704
    %2073 = vmatprep.subr.mxu0 0.0
    %2074 = vmatpush1.msra.mxu0 %v1699
    %2075 = vmatprep.subr.mxu0 0.0
    %2076 = vmatpush1.msra.mxu0 %v1694
    %2077 = vmatprep.subr.mxu0 0.0
    %2078 = vmatpush1.msra.mxu0 %v1689
    %2079 = vmatprep.subr.mxu0 0.0
    %2080 = vmatpush1.msra.mxu0 %v1684
    %2081 = vmatprep.subr.mxu0 0.0
    %2082 = vmatpush1.msra.mxu0 %v1679
    %2083 = vmatprep.subr.mxu0 0.0
    %2084 = vmatpush1.msra.mxu0 %v1674
    %2085 = vmatprep.subr.mxu0 0.0
    %2086 = vmatpush1.msra.mxu0 %v1669
    %2087 = vmatprep.subr.mxu0 0.0
    %2088 = vmatpush2.msra.mxu0 0.0
    %2089 = vmatprep.subr.mxu0 0.0
    %2090 = vmatpush2.msra.mxu0 0.0
    %2091 = vmatprep.subr.mxu0 0.0
    %2092 = vmatpush2.msra.mxu0 0.0
    %2093 = vmatprep.subr.mxu0 0.0
    %2094 = vmatpush2.msra.mxu0 0.0
    %2095 = vmatprep.subr.mxu0 0.0
    %2096 = vmatpush2.msra.mxu0 0.0
    %2097 = vmatprep.subr.mxu0 0.0
    %2098 = vmatpush2.msra.mxu0 0.0
    %2099 = vmatprep.subr.mxu0 0.0
    %2100 = vmatpush2.msra.mxu0 0.0
    %2101 = vmatprep.subr.mxu0 0.0
    %2102 = vmatpush2.msra.mxu0 0.0
    %2103 = vmatprep.subr.mxu0 0.0
    %2104 = vmatpush2.msra.mxu0 0.0
    %2105 = vmatprep.subr.mxu0 0.0
    %2106 = vmatpush2.msra.mxu0 0.0
    %2107 = vmatprep.subr.mxu0 0.0
    %2108 = vmatpush2.msra.mxu0 0.0
    %2109 = vmatprep.subr.mxu0 0.0
    %2110 = vmatpush2.msra.mxu0 0.0
    %2111 = vmatprep.subr.mxu0 0.0
    %2112 = vmatpush2.msra.mxu0 0.0
    %2113 = vmatprep.subr.mxu0 0.0
    %2114 = vmatpush2.msra.mxu0 0.0
    %2115 = vmatprep.subr.mxu0 0.0
    %2116 = vmatpush2.msra.mxu0 0.0
    %2117 = vmatprep.subr.mxu0 0.0
    %2118 = vmatpush2.msra.mxu0 0.0
    %2119 = vmatprep.mubr.f32.mxu0 0.0
    %2120 = vmatmul.mubr.f32.gmra.mxu0 %v1992
    %v2121 = vpop.f32.mrf.mxu0
    %v2122 = vadd.f32 0.0, %v2121
    %v2123 = vpop.f32.mrf.mxu0
    %2124 = vmatprep.mubr.f32.mxu0 0.0
    %2125 = vmatmul.mubr.f32.gmra.mxu0 %v1994
    %v2126 = vpop.f32.mrf.mxu0
    %v2127 = vadd.f32 0.0, %v2126
    %v2128 = vpop.f32.mrf.mxu0
    %2129 = vmatprep.mubr.f32.mxu0 0.0
    %2130 = vmatmul.mubr.f32.gmra.mxu0 %v1996
    %v2131 = vpop.f32.mrf.mxu0
    %v2132 = vadd.f32 0.0, %v2131
    %v2133 = vpop.f32.mrf.mxu0
    %2134 = vmatprep.mubr.f32.mxu0 0.0
    %2135 = vmatmul.mubr.f32.gmra.mxu0 %v1998
    %v2136 = vpop.f32.mrf.mxu0
    %v2137 = vadd.f32 0.0, %v2136
    %v2138 = vpop.f32.mrf.mxu0
    %2139 = vmatprep.mubr.f32.mxu0 0.0
    %2140 = vmatmul.mubr.f32.gmra.mxu0 %v2000
    %v2141 = vpop.f32.mrf.mxu0
    %v2142 = vadd.f32 0.0, %v2141
    %v2143 = vpop.f32.mrf.mxu0
    %2144 = vmatprep.mubr.f32.mxu0 0.0
    %2145 = vmatmul.mubr.f32.gmra.mxu0 %v2002
    %v2146 = vpop.f32.mrf.mxu0
    %v2147 = vadd.f32 0.0, %v2146
    %v2148 = vpop.f32.mrf.mxu0
    %2149 = vmatprep.mubr.f32.mxu0 0.0
    %2150 = vmatmul.mubr.f32.gmra.mxu0 %v2004
    %v2151 = vpop.f32.mrf.mxu0
    %v2152 = vadd.f32 0.0, %v2151
    %v2153 = vpop.f32.mrf.mxu0
    %2154 = vmatprep.mubr.f32.mxu0 0.0
    %2155 = vmatmul.mubr.f32.gmra.mxu0 %v2006
    %v2156 = vpop.f32.mrf.mxu0
    %v2157 = vadd.f32 0.0, %v2156
    %v2158 = vpop.f32.mrf.mxu0
    %2159 = vmatprep.mubr.f32.mxu0 0.0
    %2160 = vmatmul.mubr.f32.gmra.mxu0 %v2008
    %v2161 = vpop.f32.mrf.mxu0
    %v2162 = vadd.f32 0.0, %v2161
    %v2163 = vpop.f32.mrf.mxu0
    %2164 = vmatprep.mubr.f32.mxu0 0.0
    %2165 = vmatmul.mubr.f32.gmra.mxu0 %v2010
    %v2166 = vpop.f32.mrf.mxu0
    %v2167 = vadd.f32 0.0, %v2166
    %v2168 = vpop.f32.mrf.mxu0
    %2169 = vmatprep.mubr.f32.mxu0 0.0
    %2170 = vmatmul.mubr.f32.gmra.mxu0 %v2012
    %v2171 = vpop.f32.mrf.mxu0
    %v2172 = vadd.f32 0.0, %v2171
    %v2173 = vpop.f32.mrf.mxu0
    %2174 = vmatprep.mubr.f32.mxu0 0.0
    %2175 = vmatmul.mubr.f32.gmra.mxu0 %v2014
    %v2176 = vpop.f32.mrf.mxu0
    %v2177 = vadd.f32 0.0, %v2176
    %v2178 = vpop.f32.mrf.mxu0
    %2179 = vmatprep.mubr.f32.mxu0 0.0
    %2180 = vmatmul.mubr.f32.gmra.mxu0 %v2016
    %v2181 = vpop.f32.mrf.mxu0
    %v2182 = vadd.f32 0.0, %v2181
    %v2183 = vpop.f32.mrf.mxu0
    %2184 = vmatprep.mubr.f32.mxu0 0.0
    %2185 = vmatmul.mubr.f32.gmra.mxu0 %v2018
    %v2186 = vpop.f32.mrf.mxu0
    %v2187 = vadd.f32 0.0, %v2186
    %v2188 = vpop.f32.mrf.mxu0
    %2189 = vmatprep.mubr.f32.mxu0 0.0
    %2190 = vmatmul.mubr.f32.gmra.mxu0 %v2020
    %v2191 = vpop.f32.mrf.mxu0
    %v2192 = vadd.f32 0.0, %v2191
    %v2193 = vpop.f32.mrf.mxu0
    %2194 = vmatprep.mubr.f32.mxu0 0.0
    %2195 = vmatmul.mubr.f32.gmra.mxu0 %v2022
    %v2196 = vpop.f32.mrf.mxu0
    %v2197 = vadd.f32 0.0, %v2196
    %v2198 = vpop.f32.mrf.mxu0
    %2199 = vdwg.mxu0
    %v2200 = vrcp.pop %v2024
    %v2201 = vmul.f32 %v2122, %v2200
    %v2202 = vrcp.pop %v2026
    %v2203 = vmul.f32 %v2127, %v2202
    %v2204 = vrcp.pop %v2028
    %v2205 = vmul.f32 %v2132, %v2204
    %v2206 = vrcp.pop %v2030
    %v2207 = vmul.f32 %v2137, %v2206
    %v2208 = vrcp.pop %v2032
    %v2209 = vmul.f32 %v2142, %v2208
    %v2210 = vrcp.pop %v2034
    %v2211 = vmul.f32 %v2147, %v2210
    %v2212 = vrcp.pop %v2036
    %v2213 = vmul.f32 %v2152, %v2212
    %v2214 = vrcp.pop %v2038
    %v2215 = vmul.f32 %v2157, %v2214
    %v2216 = vrcp.pop %v2040
    %v2217 = vmul.f32 %v2162, %v2216
    %v2218 = vrcp.pop %v2042
    %v2219 = vmul.f32 %v2167, %v2218
    %v2220 = vrcp.pop %v2044
    %v2221 = vmul.f32 %v2172, %v2220
    %v2222 = vrcp.pop %v2046
    %v2223 = vmul.f32 %v2177, %v2222
    %v2224 = vrcp.pop %v2048
    %v2225 = vmul.f32 %v2182, %v2224
    %v2226 = vrcp.pop %v2050
    %v2227 = vmul.f32 %v2187, %v2226
    %v2228 = vrcp.pop %v2052
    %v2229 = vmul.f32 %v2192, %v2228
    %v2230 = vrcp.pop %v2054
    %v2231 = vmul.f32 %v2197, %v2230
    %s2232 = scalar_lea.vmem %s6, 2
    %v2233 = vld [vmem:[%s2232] sm:$0x1]
    %v2235 = vlaneseq
    %v2236 = vshrl.u32 %v2235, 7
    %v2237 = vsub.s32 0, %v2236
    %v2238 = vrot.slane %v2233, %v2237
    %v2240 = vadd.f32 %v2201, %v2238
    %v2241 = vadd.f32 %v2203, %v2238
    %v2242 = vadd.f32 %v2205, %v2238
    %v2243 = vadd.f32 %v2207, %v2238
    %v2244 = vadd.f32 %v2209, %v2238
    %v2245 = vadd.f32 %v2211, %v2238
    %v2246 = vadd.f32 %v2213, %v2238
    %v2247 = vadd.f32 %v2215, %v2238
    %v2248 = vadd.f32 %v2217, %v2238
    %v2249 = vadd.f32 %v2219, %v2238
    %v2250 = vadd.f32 %v2221, %v2238
    %v2251 = vadd.f32 %v2223, %v2238
    %v2252 = vadd.f32 %v2225, %v2238
    %v2253 = vadd.f32 %v2227, %v2238
    %v2254 = vadd.f32 %v2229, %v2238
    %v2255 = vadd.f32 %v2231, %v2238
    %v2256 = vmax.f32 %v2240, 0.0
    %v2257 = vmax.f32 %v2241, 0.0
    %v2258 = vmax.f32 %v2242, 0.0
    %v2259 = vmax.f32 %v2243, 0.0
    %v2260 = vmax.f32 %v2244, 0.0
    %v2261 = vmax.f32 %v2245, 0.0
    %v2262 = vmax.f32 %v2246, 0.0
    %v2263 = vmax.f32 %v2247, 0.0
    %v2264 = vmax.f32 %v2248, 0.0
    %v2265 = vmax.f32 %v2249, 0.0
    %v2266 = vmax.f32 %v2250, 0.0
    %v2267 = vmax.f32 %v2251, 0.0
    %v2268 = vmax.f32 %v2252, 0.0
    %v2269 = vmax.f32 %v2253, 0.0
    %v2270 = vmax.f32 %v2254, 0.0
    %v2271 = vmax.f32 %v2255, 0.0
    %s2272 = scalar_lea.vmem [#allocation8], 384
    %v2273 = vld [vmem:[%s2272] sm:$0xff]
    %v2274 = vld [vmem:[%s2272 + $0x8] sm:$0xff]
    %v2275 = vld [vmem:[%s2272 + $0x10] sm:$0xff]
    %v2276 = vld [vmem:[%s2272 + $0x18] sm:$0xff]
    %v2277 = vld [vmem:[%s2272 + $0x20] sm:$0xff]
    %v2278 = vld [vmem:[%s2272 + $0x28] sm:$0xff]
    %v2279 = vld [vmem:[%s2272 + $0x30] sm:$0xff]
    %v2280 = vld [vmem:[%s2272 + $0x38] sm:$0xff]
    %v2281 = vld [vmem:[%s2272 + $0x40] sm:$0xff]
    %v2282 = vld [vmem:[%s2272 + $0x48] sm:$0xff]
    %v2283 = vld [vmem:[%s2272 + $0x50] sm:$0xff]
    %v2284 = vld [vmem:[%s2272 + $0x58] sm:$0xff]
    %v2285 = vld [vmem:[%s2272 + $0x60] sm:$0xff]
    %v2286 = vld [vmem:[%s2272 + $0x68] sm:$0xff]
    %v2287 = vld [vmem:[%s2272 + $0x70] sm:$0xff]
    %v2288 = vld [vmem:[%s2272 + $0x78] sm:$0xff]
    %2289 = vmatprep.subr.mxu0 0.0
    %2290 = vmatpush1.msra.mxu0 %v2288
    %2291 = vmatprep.subr.mxu0 0.0
    %2292 = vmatpush1.msra.mxu0 %v2287
    %2293 = vmatprep.subr.mxu0 0.0
    %2294 = vmatpush1.msra.mxu0 %v2286
    %2295 = vmatprep.subr.mxu0 0.0
    %2296 = vmatpush1.msra.mxu0 %v2285
    %2297 = vmatprep.subr.mxu0 0.0
    %2298 = vmatpush1.msra.mxu0 %v2284
    %2299 = vmatprep.subr.mxu0 0.0
    %2300 = vmatpush1.msra.mxu0 %v2283
    %2301 = vmatprep.subr.mxu0 0.0
    %2302 = vmatpush1.msra.mxu0 %v2282
    %2303 = vmatprep.subr.mxu0 0.0
    %2304 = vmatpush1.msra.mxu0 %v2281
    %2305 = vmatprep.subr.mxu0 0.0
    %2306 = vmatpush1.msra.mxu0 %v2280
    %2307 = vmatprep.subr.mxu0 0.0
    %2308 = vmatpush1.msra.mxu0 %v2279
    %2309 = vmatprep.subr.mxu0 0.0
    %2310 = vmatpush1.msra.mxu0 %v2278
    %2311 = vmatprep.subr.mxu0 0.0
    %2312 = vmatpush1.msra.mxu0 %v2277
    %2313 = vmatprep.subr.mxu0 0.0
    %2314 = vmatpush1.msra.mxu0 %v2276
    %2315 = vmatprep.subr.mxu0 0.0
    %2316 = vmatpush1.msra.mxu0 %v2275
    %2317 = vmatprep.subr.mxu0 0.0
    %2318 = vmatpush1.msra.mxu0 %v2274
    %2319 = vmatprep.subr.mxu0 0.0
    %2320 = vmatpush1.msra.mxu0 %v2273
    %2321 = vmatprep.subr.mxu0 0.0
    %2322 = vmatpush2.msra.mxu0 0.0
    %2323 = vmatprep.subr.mxu0 0.0
    %2324 = vmatpush2.msra.mxu0 0.0
    %2325 = vmatprep.subr.mxu0 0.0
    %2326 = vmatpush2.msra.mxu0 0.0
    %2327 = vmatprep.subr.mxu0 0.0
    %2328 = vmatpush2.msra.mxu0 0.0
    %2329 = vmatprep.subr.mxu0 0.0
    %2330 = vmatpush2.msra.mxu0 0.0
    %2331 = vmatprep.subr.mxu0 0.0
    %2332 = vmatpush2.msra.mxu0 0.0
    %2333 = vmatprep.subr.mxu0 0.0
    %2334 = vmatpush2.msra.mxu0 0.0
    %2335 = vmatprep.subr.mxu0 0.0
    %2336 = vmatpush2.msra.mxu0 0.0
    %2337 = vmatprep.subr.mxu0 0.0
    %2338 = vmatpush2.msra.mxu0 0.0
    %2339 = vmatprep.subr.mxu0 0.0
    %2340 = vmatpush2.msra.mxu0 0.0
    %2341 = vmatprep.subr.mxu0 0.0
    %2342 = vmatpush2.msra.mxu0 0.0
    %2343 = vmatprep.subr.mxu0 0.0
    %2344 = vmatpush2.msra.mxu0 0.0
    %2345 = vmatprep.subr.mxu0 0.0
    %2346 = vmatpush2.msra.mxu0 0.0
    %2347 = vmatprep.subr.mxu0 0.0
    %2348 = vmatpush2.msra.mxu0 0.0
    %2349 = vmatprep.subr.mxu0 0.0
    %2350 = vmatpush2.msra.mxu0 0.0
    %2351 = vmatprep.subr.mxu0 0.0
    %2352 = vmatpush2.msra.mxu0 0.0
    %2353 = vmatprep.mubr.f32.mxu0 0.0
    %2354 = vmatmul.mubr.f32.gmra.mxu0 %v2256
    %v2355 = vpop.f32.mrf.mxu0
    %v2356 = vadd.f32 0.0, %v2355
    %v2357 = vpop.f32.mrf.mxu0
    %2358 = vmatprep.mubr.f32.mxu0 0.0
    %2359 = vmatmul.mubr.f32.gmra.mxu0 %v2257
    %v2360 = vpop.f32.mrf.mxu0
    %v2361 = vadd.f32 0.0, %v2360
    %v2362 = vpop.f32.mrf.mxu0
    %2363 = vmatprep.mubr.f32.mxu0 0.0
    %2364 = vmatmul.mubr.f32.gmra.mxu0 %v2258
    %v2365 = vpop.f32.mrf.mxu0
    %v2366 = vadd.f32 0.0, %v2365
    %v2367 = vpop.f32.mrf.mxu0
    %2368 = vmatprep.mubr.f32.mxu0 0.0
    %2369 = vmatmul.mubr.f32.gmra.mxu0 %v2259
    %v2370 = vpop.f32.mrf.mxu0
    %v2371 = vadd.f32 0.0, %v2370
    %v2372 = vpop.f32.mrf.mxu0
    %2373 = vmatprep.mubr.f32.mxu0 0.0
    %2374 = vmatmul.mubr.f32.gmra.mxu0 %v2260
    %v2375 = vpop.f32.mrf.mxu0
    %v2376 = vadd.f32 0.0, %v2375
    %v2377 = vpop.f32.mrf.mxu0
    %2378 = vmatprep.mubr.f32.mxu0 0.0
    %2379 = vmatmul.mubr.f32.gmra.mxu0 %v2261
    %v2380 = vpop.f32.mrf.mxu0
    %v2381 = vadd.f32 0.0, %v2380
    %v2382 = vpop.f32.mrf.mxu0
    %2383 = vmatprep.mubr.f32.mxu0 0.0
    %2384 = vmatmul.mubr.f32.gmra.mxu0 %v2262
    %v2385 = vpop.f32.mrf.mxu0
    %v2386 = vadd.f32 0.0, %v2385
    %v2387 = vpop.f32.mrf.mxu0
    %2388 = vmatprep.mubr.f32.mxu0 0.0
    %2389 = vmatmul.mubr.f32.gmra.mxu0 %v2263
    %v2390 = vpop.f32.mrf.mxu0
    %v2391 = vadd.f32 0.0, %v2390
    %v2392 = vpop.f32.mrf.mxu0
    %2393 = vmatprep.mubr.f32.mxu0 0.0
    %2394 = vmatmul.mubr.f32.gmra.mxu0 %v2264
    %v2395 = vpop.f32.mrf.mxu0
    %v2396 = vadd.f32 0.0, %v2395
    %v2397 = vpop.f32.mrf.mxu0
    %2398 = vmatprep.mubr.f32.mxu0 0.0
    %2399 = vmatmul.mubr.f32.gmra.mxu0 %v2265
    %v2400 = vpop.f32.mrf.mxu0
    %v2401 = vadd.f32 0.0, %v2400
    %v2402 = vpop.f32.mrf.mxu0
    %2403 = vmatprep.mubr.f32.mxu0 0.0
    %2404 = vmatmul.mubr.f32.gmra.mxu0 %v2266
    %v2405 = vpop.f32.mrf.mxu0
    %v2406 = vadd.f32 0.0, %v2405
    %v2407 = vpop.f32.mrf.mxu0
    %2408 = vmatprep.mubr.f32.mxu0 0.0
    %2409 = vmatmul.mubr.f32.gmra.mxu0 %v2267
    %v2410 = vpop.f32.mrf.mxu0
    %v2411 = vadd.f32 0.0, %v2410
    %v2412 = vpop.f32.mrf.mxu0
    %2413 = vmatprep.mubr.f32.mxu0 0.0
    %2414 = vmatmul.mubr.f32.gmra.mxu0 %v2268
    %v2415 = vpop.f32.mrf.mxu0
    %v2416 = vadd.f32 0.0, %v2415
    %v2417 = vpop.f32.mrf.mxu0
    %2418 = vmatprep.mubr.f32.mxu0 0.0
    %2419 = vmatmul.mubr.f32.gmra.mxu0 %v2269
    %v2420 = vpop.f32.mrf.mxu0
    %v2421 = vadd.f32 0.0, %v2420
    %v2422 = vpop.f32.mrf.mxu0
    %2423 = vmatprep.mubr.f32.mxu0 0.0
    %2424 = vmatmul.mubr.f32.gmra.mxu0 %v2270
    %v2425 = vpop.f32.mrf.mxu0
    %v2426 = vadd.f32 0.0, %v2425
    %v2427 = vpop.f32.mrf.mxu0
    %2428 = vmatprep.mubr.f32.mxu0 0.0
    %2429 = vmatmul.mubr.f32.gmra.mxu0 %v2271
    %v2430 = vpop.f32.mrf.mxu0
    %v2431 = vadd.f32 0.0, %v2430
    %v2432 = vpop.f32.mrf.mxu0
    %2433 = vdwg.mxu0
    %s2434 = scalar_lea.vmem %s4, 3
    %v2435 = vld [vmem:[%s2434] sm:$0x1]
    %2436 = vmatprep.subr.mxu0 0.0
    %2437 = vmatpush1.xpose.msra.mxu0 %v2431
    %2438 = vmatprep.subr.mxu0 0.0
    %2439 = vmatpush1.xpose.msra.mxu0 %v2426
    %2440 = vmatprep.subr.mxu0 0.0
    %2441 = vmatpush1.xpose.msra.mxu0 %v2421
    %2442 = vmatprep.subr.mxu0 0.0
    %2443 = vmatpush1.xpose.msra.mxu0 %v2416
    %2444 = vmatprep.subr.mxu0 0.0
    %2445 = vmatpush1.xpose.msra.mxu0 %v2411
    %2446 = vmatprep.subr.mxu0 0.0
    %2447 = vmatpush1.xpose.msra.mxu0 %v2406
    %2448 = vmatprep.subr.mxu0 0.0
    %2449 = vmatpush1.xpose.msra.mxu0 %v2401
    %2450 = vmatprep.subr.mxu0 0.0
    %2451 = vmatpush1.xpose.msra.mxu0 %v2396
    %2452 = vmatprep.subr.mxu0 0.0
    %2453 = vmatpush1.xpose.msra.mxu0 %v2391
    %2454 = vmatprep.subr.mxu0 0.0
    %2455 = vmatpush1.xpose.msra.mxu0 %v2386
    %2456 = vmatprep.subr.mxu0 0.0
    %2457 = vmatpush1.xpose.msra.mxu0 %v2381
    %2458 = vmatprep.subr.mxu0 0.0
    %2459 = vmatpush1.xpose.msra.mxu0 %v2376
    %2460 = vmatprep.subr.mxu0 0.0
    %2461 = vmatpush1.xpose.msra.mxu0 %v2371
    %2462 = vmatprep.subr.mxu0 0.0
    %2463 = vmatpush1.xpose.msra.mxu0 %v2366
    %2464 = vmatprep.subr.mxu0 0.0
    %2465 = vmatpush1.xpose.msra.mxu0 %v2361
    %2466 = vmatprep.subr.mxu0 0.0
    %2467 = vmatpush1.xpose.msra.mxu0 %v2356
    %2468 = vmatprep.subr.mxu0 0.0
    %2469 = vmatpush2.xpose.msra.mxu0 0.0
    %2470 = vmatprep.subr.mxu0 0.0
    %2471 = vmatpush2.xpose.msra.mxu0 0.0
    %2472 = vmatprep.subr.mxu0 0.0
    %2473 = vmatpush2.xpose.msra.mxu0 0.0
    %2474 = vmatprep.subr.mxu0 0.0
    %2475 = vmatpush2.xpose.msra.mxu0 0.0
    %2476 = vmatprep.subr.mxu0 0.0
    %2477 = vmatpush2.xpose.msra.mxu0 0.0
    %2478 = vmatprep.subr.mxu0 0.0
    %2479 = vmatpush2.xpose.msra.mxu0 0.0
    %2480 = vmatprep.subr.mxu0 0.0
    %2481 = vmatpush2.xpose.msra.mxu0 0.0
    %2482 = vmatprep.subr.mxu0 0.0
    %2483 = vmatpush2.xpose.msra.mxu0 0.0
    %2484 = vmatprep.subr.mxu0 0.0
    %2485 = vmatpush2.xpose.msra.mxu0 0.0
    %2486 = vmatprep.subr.mxu0 0.0
    %2487 = vmatpush2.xpose.msra.mxu0 0.0
    %2488 = vmatprep.subr.mxu0 0.0
    %2489 = vmatpush2.xpose.msra.mxu0 0.0
    %2490 = vmatprep.subr.mxu0 0.0
    %2491 = vmatpush2.xpose.msra.mxu0 0.0
    %2492 = vmatprep.subr.mxu0 0.0
    %2493 = vmatpush2.xpose.msra.mxu0 0.0
    %2494 = vmatprep.subr.mxu0 0.0
    %2495 = vmatpush2.xpose.msra.mxu0 0.0
    %2496 = vmatprep.subr.mxu0 0.0
    %2497 = vmatpush2.xpose.msra.mxu0 0.0
    %2498 = vmatprep.subr.mxu0 0.0
    %2499 = vmatpush2.xpose.msra.mxu0 0.0
    %2500 = vmatprep.mubr.f32.mxu0 0.0
    %2501 = vmatmul.mubr.f32.gmra.mxu0 %v2435
    %v2502 = vpop.f32.mrf.mxu0
    %v2503 = vadd.f32 0.0, %v2502
    %v2504 = vpop.f32.mrf.mxu0
    %2505 = vdwg.mxu0
    %s2506 = scalar_lea.vmem [#allocation10], 3
    %v2507 = vld [vmem:[%s2506] sm:$0x1]
    %v2509 = vlaneseq
    %v2510 = vshrl.u32 %v2509, 7
    %v2511 = vsub.s32 0, %v2510
    %v2512 = vrot.slane %v2507, %v2511
    %v2514 = vmul.f32 %v2356, %v2512
    %v2515 = vmul.f32 %v2361, %v2512
    %v2516 = vmul.f32 %v2366, %v2512
    %v2517 = vmul.f32 %v2371, %v2512
    %v2518 = vmul.f32 %v2376, %v2512
    %v2519 = vmul.f32 %v2381, %v2512
    %v2520 = vmul.f32 %v2386, %v2512
    %v2521 = vmul.f32 %v2391, %v2512
    %v2522 = vmul.f32 %v2396, %v2512
    %v2523 = vmul.f32 %v2401, %v2512
    %v2524 = vmul.f32 %v2406, %v2512
    %v2525 = vmul.f32 %v2411, %v2512
    %v2526 = vmul.f32 %v2416, %v2512
    %v2527 = vmul.f32 %v2421, %v2512
    %v2528 = vmul.f32 %v2426, %v2512
    %v2529 = vmul.f32 %v2431, %v2512
    %2530 = vadd.xlane.f32.xlu0 %v2514
    %v2531 = vpop.xlane.xlu0 %2530
    %2532 = vadd.xlane.f32.xlu0 %v2515
    %v2533 = vpop.xlane.xlu0 %2532
    %2534 = vadd.xlane.f32.xlu0 %v2516
    %v2535 = vpop.xlane.xlu0 %2534
    %2536 = vadd.xlane.f32.xlu0 %v2517
    %v2537 = vpop.xlane.xlu0 %2536
    %2538 = vadd.xlane.f32.xlu0 %v2518
    %v2539 = vpop.xlane.xlu0 %2538
    %2540 = vadd.xlane.f32.xlu0 %v2519
    %v2541 = vpop.xlane.xlu0 %2540
    %2542 = vadd.xlane.f32.xlu0 %v2520
    %v2543 = vpop.xlane.xlu0 %2542
    %2544 = vadd.xlane.f32.xlu0 %v2521
    %v2545 = vpop.xlane.xlu0 %2544
    %2546 = vadd.xlane.f32.xlu0 %v2522
    %v2547 = vpop.xlane.xlu0 %2546
    %2548 = vadd.xlane.f32.xlu0 %v2523
    %v2549 = vpop.xlane.xlu0 %2548
    %2550 = vadd.xlane.f32.xlu0 %v2524
    %v2551 = vpop.xlane.xlu0 %2550
    %2552 = vadd.xlane.f32.xlu0 %v2525
    %v2553 = vpop.xlane.xlu0 %2552
    %2554 = vadd.xlane.f32.xlu0 %v2526
    %v2555 = vpop.xlane.xlu0 %2554
    %2556 = vadd.xlane.f32.xlu0 %v2527
    %v2557 = vpop.xlane.xlu0 %2556
    %2558 = vadd.xlane.f32.xlu0 %v2528
    %v2559 = vpop.xlane.xlu0 %2558
    %2560 = vadd.xlane.f32.xlu0 %v2529
    %v2561 = vpop.xlane.xlu0 %2560
    %v2562 = vlaneseq
    %v2563 = vshrl.u32 %v2562, 7
    %v2564 = vsub.s32 0, %v2563
    %v2565 = vrot.slane %v2503, %v2564
    %v2566 = vadd.f32 %v2531, %v2565
    %v2567 = vadd.f32 %v2533, %v2565
    %v2568 = vadd.f32 %v2535, %v2565
    %v2569 = vadd.f32 %v2537, %v2565
    %v2570 = vadd.f32 %v2539, %v2565
    %v2571 = vadd.f32 %v2541, %v2565
    %v2572 = vadd.f32 %v2543, %v2565
    %v2573 = vadd.f32 %v2545, %v2565
    %v2574 = vadd.f32 %v2547, %v2565
    %v2575 = vadd.f32 %v2549, %v2565
    %v2576 = vadd.f32 %v2551, %v2565
    %v2577 = vadd.f32 %v2553, %v2565
    %v2578 = vadd.f32 %v2555, %v2565
    %v2579 = vadd.f32 %v2557, %v2565
    %v2580 = vadd.f32 %v2559, %v2565
    %v2581 = vadd.f32 %v2561, %v2565
    %v2582 = vmul.f32 %v2566, 0.2
    %v2583 = vmul.f32 %v2567, 0.2
    %v2584 = vmul.f32 %v2568, 0.2
    %v2585 = vmul.f32 %v2569, 0.2
    %v2586 = vmul.f32 %v2570, 0.2
    %v2587 = vmul.f32 %v2571, 0.2
    %v2588 = vmul.f32 %v2572, 0.2
    %v2589 = vmul.f32 %v2573, 0.2
    %v2590 = vmul.f32 %v2574, 0.2
    %v2591 = vmul.f32 %v2575, 0.2
    %v2592 = vmul.f32 %v2576, 0.2
    %v2593 = vmul.f32 %v2577, 0.2
    %v2594 = vmul.f32 %v2578, 0.2
    %v2595 = vmul.f32 %v2579, 0.2
    %v2596 = vmul.f32 %v2580, 0.2
    %v2597 = vmul.f32 %v2581, 0.2
    %v2598 = vmax.f32 %v2566, %v2582
    %v2599 = vmax.f32 %v2567, %v2583
    %v2600 = vmax.f32 %v2568, %v2584
    %v2601 = vmax.f32 %v2569, %v2585
    %v2602 = vmax.f32 %v2570, %v2586
    %v2603 = vmax.f32 %v2571, %v2587
    %v2604 = vmax.f32 %v2572, %v2588
    %v2605 = vmax.f32 %v2573, %v2589
    %v2606 = vmax.f32 %v2574, %v2590
    %v2607 = vmax.f32 %v2575, %v2591
    %v2608 = vmax.f32 %v2576, %v2592
    %v2609 = vmax.f32 %v2577, %v2593
    %v2610 = vmax.f32 %v2578, %v2594
    %v2611 = vmax.f32 %v2579, %v2595
    %v2612 = vmax.f32 %v2580, %v2596
    %v2613 = vmax.f32 %v2581, %v2597
    %v2614 = vsel %vm199, %v2598, -1e+30
    %v2615 = vsel %vm200, %v2599, -1e+30
    %v2616 = vsel %vm201, %v2600, -1e+30
    %v2617 = vsel %vm202, %v2601, -1e+30
    %v2618 = vsel %vm203, %v2602, -1e+30
    %v2619 = vsel %vm204, %v2603, -1e+30
    %v2620 = vsel %vm205, %v2604, -1e+30
    %v2621 = vsel %vm206, %v2605, -1e+30
    %v2622 = vsel %vm207, %v2606, -1e+30
    %v2623 = vsel %vm208, %v2607, -1e+30
    %v2624 = vsel %vm209, %v2608, -1e+30
    %v2625 = vsel %vm210, %v2609, -1e+30
    %v2626 = vsel %vm211, %v2610, -1e+30
    %v2627 = vsel %vm212, %v2611, -1e+30
    %v2628 = vsel %vm213, %v2612, -1e+30
    %v2629 = vsel %vm214, %v2613, -1e+30
    %2630 = vmax.xlane.f32.xlu0 %v2614
    %v2631 = vpop.xlane.xlu0 %2630
    %2632 = vmax.xlane.f32.xlu0 %v2615
    %v2633 = vpop.xlane.xlu0 %2632
    %2634 = vmax.xlane.f32.xlu0 %v2616
    %v2635 = vpop.xlane.xlu0 %2634
    %2636 = vmax.xlane.f32.xlu0 %v2617
    %v2637 = vpop.xlane.xlu0 %2636
    %2638 = vmax.xlane.f32.xlu0 %v2618
    %v2639 = vpop.xlane.xlu0 %2638
    %2640 = vmax.xlane.f32.xlu0 %v2619
    %v2641 = vpop.xlane.xlu0 %2640
    %2642 = vmax.xlane.f32.xlu0 %v2620
    %v2643 = vpop.xlane.xlu0 %2642
    %2644 = vmax.xlane.f32.xlu0 %v2621
    %v2645 = vpop.xlane.xlu0 %2644
    %2646 = vmax.xlane.f32.xlu0 %v2622
    %v2647 = vpop.xlane.xlu0 %2646
    %2648 = vmax.xlane.f32.xlu0 %v2623
    %v2649 = vpop.xlane.xlu0 %2648
    %2650 = vmax.xlane.f32.xlu0 %v2624
    %v2651 = vpop.xlane.xlu0 %2650
    %2652 = vmax.xlane.f32.xlu0 %v2625
    %v2653 = vpop.xlane.xlu0 %2652
    %2654 = vmax.xlane.f32.xlu0 %v2626
    %v2655 = vpop.xlane.xlu0 %2654
    %2656 = vmax.xlane.f32.xlu0 %v2627
    %v2657 = vpop.xlane.xlu0 %2656
    %2658 = vmax.xlane.f32.xlu0 %v2628
    %v2659 = vpop.xlane.xlu0 %2658
    %2660 = vmax.xlane.f32.xlu0 %v2629
    %v2661 = vpop.xlane.xlu0 %2660
    %v2662 = vsub.f32 %v2614, %v2631
    %v2663 = vsub.f32 %v2615, %v2633
    %v2664 = vsub.f32 %v2616, %v2635
    %v2665 = vsub.f32 %v2617, %v2637
    %v2666 = vsub.f32 %v2618, %v2639
    %v2667 = vsub.f32 %v2619, %v2641
    %v2668 = vsub.f32 %v2620, %v2643
    %v2669 = vsub.f32 %v2621, %v2645
    %v2670 = vsub.f32 %v2622, %v2647
    %v2671 = vsub.f32 %v2623, %v2649
    %v2672 = vsub.f32 %v2624, %v2651
    %v2673 = vsub.f32 %v2625, %v2653
    %v2674 = vsub.f32 %v2626, %v2655
    %v2675 = vsub.f32 %v2627, %v2657
    %v2676 = vsub.f32 %v2628, %v2659
    %v2677 = vsub.f32 %v2629, %v2661
    %v2678 = vmul.f32 %v2662, 1.442695
    %v2679 = vpow.pop %v2678
    %v2680 = vmul.f32 %v2663, 1.442695
    %v2681 = vpow.pop %v2680
    %v2682 = vmul.f32 %v2664, 1.442695
    %v2683 = vpow.pop %v2682
    %v2684 = vmul.f32 %v2665, 1.442695
    %v2685 = vpow.pop %v2684
    %v2686 = vmul.f32 %v2666, 1.442695
    %v2687 = vpow.pop %v2686
    %v2688 = vmul.f32 %v2667, 1.442695
    %v2689 = vpow.pop %v2688
    %v2690 = vmul.f32 %v2668, 1.442695
    %v2691 = vpow.pop %v2690
    %v2692 = vmul.f32 %v2669, 1.442695
    %v2693 = vpow.pop %v2692
    %v2694 = vmul.f32 %v2670, 1.442695
    %v2695 = vpow.pop %v2694
    %v2696 = vmul.f32 %v2671, 1.442695
    %v2697 = vpow.pop %v2696
    %v2698 = vmul.f32 %v2672, 1.442695
    %v2699 = vpow.pop %v2698
    %v2700 = vmul.f32 %v2673, 1.442695
    %v2701 = vpow.pop %v2700
    %v2702 = vmul.f32 %v2674, 1.442695
    %v2703 = vpow.pop %v2702
    %v2704 = vmul.f32 %v2675, 1.442695
    %v2705 = vpow.pop %v2704
    %v2706 = vmul.f32 %v2676, 1.442695
    %v2707 = vpow.pop %v2706
    %v2708 = vmul.f32 %v2677, 1.442695
    %v2709 = vpow.pop %v2708
    %2710 = vadd.xlane.f32.xlu0 %v2679
    %v2711 = vpop.xlane.xlu0 %2710
    %2712 = vadd.xlane.f32.xlu0 %v2681
    %v2713 = vpop.xlane.xlu0 %2712
    %2714 = vadd.xlane.f32.xlu0 %v2683
    %v2715 = vpop.xlane.xlu0 %2714
    %2716 = vadd.xlane.f32.xlu0 %v2685
    %v2717 = vpop.xlane.xlu0 %2716
    %2718 = vadd.xlane.f32.xlu0 %v2687
    %v2719 = vpop.xlane.xlu0 %2718
    %2720 = vadd.xlane.f32.xlu0 %v2689
    %v2721 = vpop.xlane.xlu0 %2720
    %2722 = vadd.xlane.f32.xlu0 %v2691
    %v2723 = vpop.xlane.xlu0 %2722
    %2724 = vadd.xlane.f32.xlu0 %v2693
    %v2725 = vpop.xlane.xlu0 %2724
    %2726 = vadd.xlane.f32.xlu0 %v2695
    %v2727 = vpop.xlane.xlu0 %2726
    %2728 = vadd.xlane.f32.xlu0 %v2697
    %v2729 = vpop.xlane.xlu0 %2728
    %2730 = vadd.xlane.f32.xlu0 %v2699
    %v2731 = vpop.xlane.xlu0 %2730
    %2732 = vadd.xlane.f32.xlu0 %v2701
    %v2733 = vpop.xlane.xlu0 %2732
    %2734 = vadd.xlane.f32.xlu0 %v2703
    %v2735 = vpop.xlane.xlu0 %2734
    %2736 = vadd.xlane.f32.xlu0 %v2705
    %v2737 = vpop.xlane.xlu0 %2736
    %2738 = vadd.xlane.f32.xlu0 %v2707
    %v2739 = vpop.xlane.xlu0 %2738
    %2740 = vadd.xlane.f32.xlu0 %v2709
    %v2741 = vpop.xlane.xlu0 %2740
    %2742 = vmatprep.subr.mxu0 0.0
    %2743 = vmatpush1.msra.mxu0 %v2431
    %2744 = vmatprep.subr.mxu0 0.0
    %2745 = vmatpush1.msra.mxu0 %v2426
    %2746 = vmatprep.subr.mxu0 0.0
    %2747 = vmatpush1.msra.mxu0 %v2421
    %2748 = vmatprep.subr.mxu0 0.0
    %2749 = vmatpush1.msra.mxu0 %v2416
    %2750 = vmatprep.subr.mxu0 0.0
    %2751 = vmatpush1.msra.mxu0 %v2411
    %2752 = vmatprep.subr.mxu0 0.0
    %2753 = vmatpush1.msra.mxu0 %v2406
    %2754 = vmatprep.subr.mxu0 0.0
    %2755 = vmatpush1.msra.mxu0 %v2401
    %2756 = vmatprep.subr.mxu0 0.0
    %2757 = vmatpush1.msra.mxu0 %v2396
    %2758 = vmatprep.subr.mxu0 0.0
    %2759 = vmatpush1.msra.mxu0 %v2391
    %2760 = vmatprep.subr.mxu0 0.0
    %2761 = vmatpush1.msra.mxu0 %v2386
    %2762 = vmatprep.subr.mxu0 0.0
    %2763 = vmatpush1.msra.mxu0 %v2381
    %2764 = vmatprep.subr.mxu0 0.0
    %2765 = vmatpush1.msra.mxu0 %v2376
    %2766 = vmatprep.subr.mxu0 0.0
    %2767 = vmatpush1.msra.mxu0 %v2371
    %2768 = vmatprep.subr.mxu0 0.0
    %2769 = vmatpush1.msra.mxu0 %v2366
    %2770 = vmatprep.subr.mxu0 0.0
    %2771 = vmatpush1.msra.mxu0 %v2361
    %2772 = vmatprep.subr.mxu0 0.0
    %2773 = vmatpush1.msra.mxu0 %v2356
    %2774 = vmatprep.subr.mxu0 0.0
    %2775 = vmatpush2.msra.mxu0 0.0
    %2776 = vmatprep.subr.mxu0 0.0
    %2777 = vmatpush2.msra.mxu0 0.0
    %2778 = vmatprep.subr.mxu0 0.0
    %2779 = vmatpush2.msra.mxu0 0.0
    %2780 = vmatprep.subr.mxu0 0.0
    %2781 = vmatpush2.msra.mxu0 0.0
    %2782 = vmatprep.subr.mxu0 0.0
    %2783 = vmatpush2.msra.mxu0 0.0
    %2784 = vmatprep.subr.mxu0 0.0
    %2785 = vmatpush2.msra.mxu0 0.0
    %2786 = vmatprep.subr.mxu0 0.0
    %2787 = vmatpush2.msra.mxu0 0.0
    %2788 = vmatprep.subr.mxu0 0.0
    %2789 = vmatpush2.msra.mxu0 0.0
    %2790 = vmatprep.subr.mxu0 0.0
    %2791 = vmatpush2.msra.mxu0 0.0
    %2792 = vmatprep.subr.mxu0 0.0
    %2793 = vmatpush2.msra.mxu0 0.0
    %2794 = vmatprep.subr.mxu0 0.0
    %2795 = vmatpush2.msra.mxu0 0.0
    %2796 = vmatprep.subr.mxu0 0.0
    %2797 = vmatpush2.msra.mxu0 0.0
    %2798 = vmatprep.subr.mxu0 0.0
    %2799 = vmatpush2.msra.mxu0 0.0
    %2800 = vmatprep.subr.mxu0 0.0
    %2801 = vmatpush2.msra.mxu0 0.0
    %2802 = vmatprep.subr.mxu0 0.0
    %2803 = vmatpush2.msra.mxu0 0.0
    %2804 = vmatprep.subr.mxu0 0.0
    %2805 = vmatpush2.msra.mxu0 0.0
    %2806 = vmatprep.mubr.f32.mxu0 0.0
    %2807 = vmatmul.mubr.f32.gmra.mxu0 %v2679
    %v2808 = vpop.f32.mrf.mxu0
    %v2809 = vadd.f32 0.0, %v2808
    %v2810 = vpop.f32.mrf.mxu0
    %2811 = vmatprep.mubr.f32.mxu0 0.0
    %2812 = vmatmul.mubr.f32.gmra.mxu0 %v2681
    %v2813 = vpop.f32.mrf.mxu0
    %v2814 = vadd.f32 0.0, %v2813
    %v2815 = vpop.f32.mrf.mxu0
    %2816 = vmatprep.mubr.f32.mxu0 0.0
    %2817 = vmatmul.mubr.f32.gmra.mxu0 %v2683
    %v2818 = vpop.f32.mrf.mxu0
    %v2819 = vadd.f32 0.0, %v2818
    %v2820 = vpop.f32.mrf.mxu0
    %2821 = vmatprep.mubr.f32.mxu0 0.0
    %2822 = vmatmul.mubr.f32.gmra.mxu0 %v2685
    %v2823 = vpop.f32.mrf.mxu0
    %v2824 = vadd.f32 0.0, %v2823
    %v2825 = vpop.f32.mrf.mxu0
    %2826 = vmatprep.mubr.f32.mxu0 0.0
    %2827 = vmatmul.mubr.f32.gmra.mxu0 %v2687
    %v2828 = vpop.f32.mrf.mxu0
    %v2829 = vadd.f32 0.0, %v2828
    %v2830 = vpop.f32.mrf.mxu0
    %2831 = vmatprep.mubr.f32.mxu0 0.0
    %2832 = vmatmul.mubr.f32.gmra.mxu0 %v2689
    %v2833 = vpop.f32.mrf.mxu0
    %v2834 = vadd.f32 0.0, %v2833
    %v2835 = vpop.f32.mrf.mxu0
    %2836 = vmatprep.mubr.f32.mxu0 0.0
    %2837 = vmatmul.mubr.f32.gmra.mxu0 %v2691
    %v2838 = vpop.f32.mrf.mxu0
    %v2839 = vadd.f32 0.0, %v2838
    %v2840 = vpop.f32.mrf.mxu0
    %2841 = vmatprep.mubr.f32.mxu0 0.0
    %2842 = vmatmul.mubr.f32.gmra.mxu0 %v2693
    %v2843 = vpop.f32.mrf.mxu0
    %v2844 = vadd.f32 0.0, %v2843
    %v2845 = vpop.f32.mrf.mxu0
    %2846 = vmatprep.mubr.f32.mxu0 0.0
    %2847 = vmatmul.mubr.f32.gmra.mxu0 %v2695
    %v2848 = vpop.f32.mrf.mxu0
    %v2849 = vadd.f32 0.0, %v2848
    %v2850 = vpop.f32.mrf.mxu0
    %2851 = vmatprep.mubr.f32.mxu0 0.0
    %2852 = vmatmul.mubr.f32.gmra.mxu0 %v2697
    %v2853 = vpop.f32.mrf.mxu0
    %v2854 = vadd.f32 0.0, %v2853
    %v2855 = vpop.f32.mrf.mxu0
    %2856 = vmatprep.mubr.f32.mxu0 0.0
    %2857 = vmatmul.mubr.f32.gmra.mxu0 %v2699
    %v2858 = vpop.f32.mrf.mxu0
    %v2859 = vadd.f32 0.0, %v2858
    %v2860 = vpop.f32.mrf.mxu0
    %2861 = vmatprep.mubr.f32.mxu0 0.0
    %2862 = vmatmul.mubr.f32.gmra.mxu0 %v2701
    %v2863 = vpop.f32.mrf.mxu0
    %v2864 = vadd.f32 0.0, %v2863
    %v2865 = vpop.f32.mrf.mxu0
    %2866 = vmatprep.mubr.f32.mxu0 0.0
    %2867 = vmatmul.mubr.f32.gmra.mxu0 %v2703
    %v2868 = vpop.f32.mrf.mxu0
    %v2869 = vadd.f32 0.0, %v2868
    %v2870 = vpop.f32.mrf.mxu0
    %2871 = vmatprep.mubr.f32.mxu0 0.0
    %2872 = vmatmul.mubr.f32.gmra.mxu0 %v2705
    %v2873 = vpop.f32.mrf.mxu0
    %v2874 = vadd.f32 0.0, %v2873
    %v2875 = vpop.f32.mrf.mxu0
    %2876 = vmatprep.mubr.f32.mxu0 0.0
    %2877 = vmatmul.mubr.f32.gmra.mxu0 %v2707
    %v2878 = vpop.f32.mrf.mxu0
    %v2879 = vadd.f32 0.0, %v2878
    %v2880 = vpop.f32.mrf.mxu0
    %2881 = vmatprep.mubr.f32.mxu0 0.0
    %2882 = vmatmul.mubr.f32.gmra.mxu0 %v2709
    %v2883 = vpop.f32.mrf.mxu0
    %v2884 = vadd.f32 0.0, %v2883
    %v2885 = vpop.f32.mrf.mxu0
    %2886 = vdwg.mxu0
    %v2887 = vrcp.pop %v2711
    %v2888 = vmul.f32 %v2809, %v2887
    %v2889 = vrcp.pop %v2713
    %v2890 = vmul.f32 %v2814, %v2889
    %v2891 = vrcp.pop %v2715
    %v2892 = vmul.f32 %v2819, %v2891
    %v2893 = vrcp.pop %v2717
    %v2894 = vmul.f32 %v2824, %v2893
    %v2895 = vrcp.pop %v2719
    %v2896 = vmul.f32 %v2829, %v2895
    %v2897 = vrcp.pop %v2721
    %v2898 = vmul.f32 %v2834, %v2897
    %v2899 = vrcp.pop %v2723
    %v2900 = vmul.f32 %v2839, %v2899
    %v2901 = vrcp.pop %v2725
    %v2902 = vmul.f32 %v2844, %v2901
    %v2903 = vrcp.pop %v2727
    %v2904 = vmul.f32 %v2849, %v2903
    %v2905 = vrcp.pop %v2729
    %v2906 = vmul.f32 %v2854, %v2905
    %v2907 = vrcp.pop %v2731
    %v2908 = vmul.f32 %v2859, %v2907
    %v2909 = vrcp.pop %v2733
    %v2910 = vmul.f32 %v2864, %v2909
    %v2911 = vrcp.pop %v2735
    %v2912 = vmul.f32 %v2869, %v2911
    %v2913 = vrcp.pop %v2737
    %v2914 = vmul.f32 %v2874, %v2913
    %v2915 = vrcp.pop %v2739
    %v2916 = vmul.f32 %v2879, %v2915
    %v2917 = vrcp.pop %v2741
    %v2918 = vmul.f32 %v2884, %v2917
    %s2919 = scalar_lea.vmem %s6, 3
    %v2920 = vld [vmem:[%s2919] sm:$0x1]
    %v2922 = vlaneseq
    %v2923 = vshrl.u32 %v2922, 7
    %v2924 = vsub.s32 0, %v2923
    %v2925 = vrot.slane %v2920, %v2924
    %v2927 = vadd.f32 %v2888, %v2925
    %v2928 = vadd.f32 %v2890, %v2925
    %v2929 = vadd.f32 %v2892, %v2925
    %v2930 = vadd.f32 %v2894, %v2925
    %v2931 = vadd.f32 %v2896, %v2925
    %v2932 = vadd.f32 %v2898, %v2925
    %v2933 = vadd.f32 %v2900, %v2925
    %v2934 = vadd.f32 %v2902, %v2925
    %v2935 = vadd.f32 %v2904, %v2925
    %v2936 = vadd.f32 %v2906, %v2925
    %v2937 = vadd.f32 %v2908, %v2925
    %v2938 = vadd.f32 %v2910, %v2925
    %v2939 = vadd.f32 %v2912, %v2925
    %v2940 = vadd.f32 %v2914, %v2925
    %v2941 = vadd.f32 %v2916, %v2925
    %v2942 = vadd.f32 %v2918, %v2925
    %v2943 = vmax.f32 %v2927, 0.0
    %v2944 = vmax.f32 %v2928, 0.0
    %v2945 = vmax.f32 %v2929, 0.0
    %v2946 = vmax.f32 %v2930, 0.0
    %v2947 = vmax.f32 %v2931, 0.0
    %v2948 = vmax.f32 %v2932, 0.0
    %v2949 = vmax.f32 %v2933, 0.0
    %v2950 = vmax.f32 %v2934, 0.0
    %v2951 = vmax.f32 %v2935, 0.0
    %v2952 = vmax.f32 %v2936, 0.0
    %v2953 = vmax.f32 %v2937, 0.0
    %v2954 = vmax.f32 %v2938, 0.0
    %v2955 = vmax.f32 %v2939, 0.0
    %v2956 = vmax.f32 %v2940, 0.0
    %v2957 = vmax.f32 %v2941, 0.0
    %v2958 = vmax.f32 %v2942, 0.0
    %s2959 = scalar_lea.vmem [#allocation8], 512
    %v2960 = vld [vmem:[%s2959] sm:$0xff]
    %v2961 = vld [vmem:[%s2959 + $0x8] sm:$0xff]
    %v2962 = vld [vmem:[%s2959 + $0x10] sm:$0xff]
    %v2963 = vld [vmem:[%s2959 + $0x18] sm:$0xff]
    %v2964 = vld [vmem:[%s2959 + $0x20] sm:$0xff]
    %v2965 = vld [vmem:[%s2959 + $0x28] sm:$0xff]
    %v2966 = vld [vmem:[%s2959 + $0x30] sm:$0xff]
    %v2967 = vld [vmem:[%s2959 + $0x38] sm:$0xff]
    %v2968 = vld [vmem:[%s2959 + $0x40] sm:$0xff]
    %v2969 = vld [vmem:[%s2959 + $0x48] sm:$0xff]
    %v2970 = vld [vmem:[%s2959 + $0x50] sm:$0xff]
    %v2971 = vld [vmem:[%s2959 + $0x58] sm:$0xff]
    %v2972 = vld [vmem:[%s2959 + $0x60] sm:$0xff]
    %v2973 = vld [vmem:[%s2959 + $0x68] sm:$0xff]
    %v2974 = vld [vmem:[%s2959 + $0x70] sm:$0xff]
    %v2975 = vld [vmem:[%s2959 + $0x78] sm:$0xff]
    %2976 = vmatprep.subr.mxu0 0.0
    %2977 = vmatpush1.msra.mxu0 %v2975
    %2978 = vmatprep.subr.mxu0 0.0
    %2979 = vmatpush1.msra.mxu0 %v2974
    %2980 = vmatprep.subr.mxu0 0.0
    %2981 = vmatpush1.msra.mxu0 %v2973
    %2982 = vmatprep.subr.mxu0 0.0
    %2983 = vmatpush1.msra.mxu0 %v2972
    %2984 = vmatprep.subr.mxu0 0.0
    %2985 = vmatpush1.msra.mxu0 %v2971
    %2986 = vmatprep.subr.mxu0 0.0
    %2987 = vmatpush1.msra.mxu0 %v2970
    %2988 = vmatprep.subr.mxu0 0.0
    %2989 = vmatpush1.msra.mxu0 %v2969
    %2990 = vmatprep.subr.mxu0 0.0
    %2991 = vmatpush1.msra.mxu0 %v2968
    %2992 = vmatprep.subr.mxu0 0.0
    %2993 = vmatpush1.msra.mxu0 %v2967
    %2994 = vmatprep.subr.mxu0 0.0
    %2995 = vmatpush1.msra.mxu0 %v2966
    %2996 = vmatprep.subr.mxu0 0.0
    %2997 = vmatpush1.msra.mxu0 %v2965
    %2998 = vmatprep.subr.mxu0 0.0
    %2999 = vmatpush1.msra.mxu0 %v2964
    %3000 = vmatprep.subr.mxu0 0.0
    %3001 = vmatpush1.msra.mxu0 %v2963
    %3002 = vmatprep.subr.mxu0 0.0
    %3003 = vmatpush1.msra.mxu0 %v2962
    %3004 = vmatprep.subr.mxu0 0.0
    %3005 = vmatpush1.msra.mxu0 %v2961
    %3006 = vmatprep.subr.mxu0 0.0
    %3007 = vmatpush1.msra.mxu0 %v2960
    %3008 = vmatprep.subr.mxu0 0.0
    %3009 = vmatpush2.msra.mxu0 0.0
    %3010 = vmatprep.subr.mxu0 0.0
    %3011 = vmatpush2.msra.mxu0 0.0
    %3012 = vmatprep.subr.mxu0 0.0
    %3013 = vmatpush2.msra.mxu0 0.0
    %3014 = vmatprep.subr.mxu0 0.0
    %3015 = vmatpush2.msra.mxu0 0.0
    %3016 = vmatprep.subr.mxu0 0.0
    %3017 = vmatpush2.msra.mxu0 0.0
    %3018 = vmatprep.subr.mxu0 0.0
    %3019 = vmatpush2.msra.mxu0 0.0
    %3020 = vmatprep.subr.mxu0 0.0
    %3021 = vmatpush2.msra.mxu0 0.0
    %3022 = vmatprep.subr.mxu0 0.0
    %3023 = vmatpush2.msra.mxu0 0.0
    %3024 = vmatprep.subr.mxu0 0.0
    %3025 = vmatpush2.msra.mxu0 0.0
    %3026 = vmatprep.subr.mxu0 0.0
    %3027 = vmatpush2.msra.mxu0 0.0
    %3028 = vmatprep.subr.mxu0 0.0
    %3029 = vmatpush2.msra.mxu0 0.0
    %3030 = vmatprep.subr.mxu0 0.0
    %3031 = vmatpush2.msra.mxu0 0.0
    %3032 = vmatprep.subr.mxu0 0.0
    %3033 = vmatpush2.msra.mxu0 0.0
    %3034 = vmatprep.subr.mxu0 0.0
    %3035 = vmatpush2.msra.mxu0 0.0
    %3036 = vmatprep.subr.mxu0 0.0
    %3037 = vmatpush2.msra.mxu0 0.0
    %3038 = vmatprep.subr.mxu0 0.0
    %3039 = vmatpush2.msra.mxu0 0.0
    %3040 = vmatprep.mubr.f32.mxu0 0.0
    %3041 = vmatmul.mubr.f32.gmra.mxu0 %v2943
    %v3042 = vpop.f32.mrf.mxu0
    %v3043 = vadd.f32 0.0, %v3042
    %v3044 = vpop.f32.mrf.mxu0
    %3045 = vmatprep.mubr.f32.mxu0 0.0
    %3046 = vmatmul.mubr.f32.gmra.mxu0 %v2944
    %v3047 = vpop.f32.mrf.mxu0
    %v3048 = vadd.f32 0.0, %v3047
    %v3049 = vpop.f32.mrf.mxu0
    %3050 = vmatprep.mubr.f32.mxu0 0.0
    %3051 = vmatmul.mubr.f32.gmra.mxu0 %v2945
    %v3052 = vpop.f32.mrf.mxu0
    %v3053 = vadd.f32 0.0, %v3052
    %v3054 = vpop.f32.mrf.mxu0
    %3055 = vmatprep.mubr.f32.mxu0 0.0
    %3056 = vmatmul.mubr.f32.gmra.mxu0 %v2946
    %v3057 = vpop.f32.mrf.mxu0
    %v3058 = vadd.f32 0.0, %v3057
    %v3059 = vpop.f32.mrf.mxu0
    %3060 = vmatprep.mubr.f32.mxu0 0.0
    %3061 = vmatmul.mubr.f32.gmra.mxu0 %v2947
    %v3062 = vpop.f32.mrf.mxu0
    %v3063 = vadd.f32 0.0, %v3062
    %v3064 = vpop.f32.mrf.mxu0
    %3065 = vmatprep.mubr.f32.mxu0 0.0
    %3066 = vmatmul.mubr.f32.gmra.mxu0 %v2948
    %v3067 = vpop.f32.mrf.mxu0
    %v3068 = vadd.f32 0.0, %v3067
    %v3069 = vpop.f32.mrf.mxu0
    %3070 = vmatprep.mubr.f32.mxu0 0.0
    %3071 = vmatmul.mubr.f32.gmra.mxu0 %v2949
    %v3072 = vpop.f32.mrf.mxu0
    %v3073 = vadd.f32 0.0, %v3072
    %v3074 = vpop.f32.mrf.mxu0
    %3075 = vmatprep.mubr.f32.mxu0 0.0
    %3076 = vmatmul.mubr.f32.gmra.mxu0 %v2950
    %v3077 = vpop.f32.mrf.mxu0
    %v3078 = vadd.f32 0.0, %v3077
    %v3079 = vpop.f32.mrf.mxu0
    %3080 = vmatprep.mubr.f32.mxu0 0.0
    %3081 = vmatmul.mubr.f32.gmra.mxu0 %v2951
    %v3082 = vpop.f32.mrf.mxu0
    %v3083 = vadd.f32 0.0, %v3082
    %v3084 = vpop.f32.mrf.mxu0
    %3085 = vmatprep.mubr.f32.mxu0 0.0
    %3086 = vmatmul.mubr.f32.gmra.mxu0 %v2952
    %v3087 = vpop.f32.mrf.mxu0
    %v3088 = vadd.f32 0.0, %v3087
    %v3089 = vpop.f32.mrf.mxu0
    %3090 = vmatprep.mubr.f32.mxu0 0.0
    %3091 = vmatmul.mubr.f32.gmra.mxu0 %v2953
    %v3092 = vpop.f32.mrf.mxu0
    %v3093 = vadd.f32 0.0, %v3092
    %v3094 = vpop.f32.mrf.mxu0
    %3095 = vmatprep.mubr.f32.mxu0 0.0
    %3096 = vmatmul.mubr.f32.gmra.mxu0 %v2954
    %v3097 = vpop.f32.mrf.mxu0
    %v3098 = vadd.f32 0.0, %v3097
    %v3099 = vpop.f32.mrf.mxu0
    %3100 = vmatprep.mubr.f32.mxu0 0.0
    %3101 = vmatmul.mubr.f32.gmra.mxu0 %v2955
    %v3102 = vpop.f32.mrf.mxu0
    %v3103 = vadd.f32 0.0, %v3102
    %v3104 = vpop.f32.mrf.mxu0
    %3105 = vmatprep.mubr.f32.mxu0 0.0
    %3106 = vmatmul.mubr.f32.gmra.mxu0 %v2956
    %v3107 = vpop.f32.mrf.mxu0
    %v3108 = vadd.f32 0.0, %v3107
    %v3109 = vpop.f32.mrf.mxu0
    %3110 = vmatprep.mubr.f32.mxu0 0.0
    %3111 = vmatmul.mubr.f32.gmra.mxu0 %v2957
    %v3112 = vpop.f32.mrf.mxu0
    %v3113 = vadd.f32 0.0, %v3112
    %v3114 = vpop.f32.mrf.mxu0
    %3115 = vmatprep.mubr.f32.mxu0 0.0
    %3116 = vmatmul.mubr.f32.gmra.mxu0 %v2958
    %v3117 = vpop.f32.mrf.mxu0
    %v3118 = vadd.f32 0.0, %v3117
    %v3119 = vpop.f32.mrf.mxu0
    %3120 = vdwg.mxu0
    %s3121 = scalar_lea.vmem %s4, 4
    %v3122 = vld [vmem:[%s3121] sm:$0x1]
    %3123 = vmatprep.subr.mxu0 0.0
    %3124 = vmatpush1.xpose.msra.mxu0 %v3118
    %3125 = vmatprep.subr.mxu0 0.0
    %3126 = vmatpush1.xpose.msra.mxu0 %v3113
    %3127 = vmatprep.subr.mxu0 0.0
    %3128 = vmatpush1.xpose.msra.mxu0 %v3108
    %3129 = vmatprep.subr.mxu0 0.0
    %3130 = vmatpush1.xpose.msra.mxu0 %v3103
    %3131 = vmatprep.subr.mxu0 0.0
    %3132 = vmatpush1.xpose.msra.mxu0 %v3098
    %3133 = vmatprep.subr.mxu0 0.0
    %3134 = vmatpush1.xpose.msra.mxu0 %v3093
    %3135 = vmatprep.subr.mxu0 0.0
    %3136 = vmatpush1.xpose.msra.mxu0 %v3088
    %3137 = vmatprep.subr.mxu0 0.0
    %3138 = vmatpush1.xpose.msra.mxu0 %v3083
    %3139 = vmatprep.subr.mxu0 0.0
    %3140 = vmatpush1.xpose.msra.mxu0 %v3078
    %3141 = vmatprep.subr.mxu0 0.0
    %3142 = vmatpush1.xpose.msra.mxu0 %v3073
    %3143 = vmatprep.subr.mxu0 0.0
    %3144 = vmatpush1.xpose.msra.mxu0 %v3068
    %3145 = vmatprep.subr.mxu0 0.0
    %3146 = vmatpush1.xpose.msra.mxu0 %v3063
    %3147 = vmatprep.subr.mxu0 0.0
    %3148 = vmatpush1.xpose.msra.mxu0 %v3058
    %3149 = vmatprep.subr.mxu0 0.0
    %3150 = vmatpush1.xpose.msra.mxu0 %v3053
    %3151 = vmatprep.subr.mxu0 0.0
    %3152 = vmatpush1.xpose.msra.mxu0 %v3048
    %3153 = vmatprep.subr.mxu0 0.0
    %3154 = vmatpush1.xpose.msra.mxu0 %v3043
    %3155 = vmatprep.subr.mxu0 0.0
    %3156 = vmatpush2.xpose.msra.mxu0 0.0
    %3157 = vmatprep.subr.mxu0 0.0
    %3158 = vmatpush2.xpose.msra.mxu0 0.0
    %3159 = vmatprep.subr.mxu0 0.0
    %3160 = vmatpush2.xpose.msra.mxu0 0.0
    %3161 = vmatprep.subr.mxu0 0.0
    %3162 = vmatpush2.xpose.msra.mxu0 0.0
    %3163 = vmatprep.subr.mxu0 0.0
    %3164 = vmatpush2.xpose.msra.mxu0 0.0
    %3165 = vmatprep.subr.mxu0 0.0
    %3166 = vmatpush2.xpose.msra.mxu0 0.0
    %3167 = vmatprep.subr.mxu0 0.0
    %3168 = vmatpush2.xpose.msra.mxu0 0.0
    %3169 = vmatprep.subr.mxu0 0.0
    %3170 = vmatpush2.xpose.msra.mxu0 0.0
    %3171 = vmatprep.subr.mxu0 0.0
    %3172 = vmatpush2.xpose.msra.mxu0 0.0
    %3173 = vmatprep.subr.mxu0 0.0
    %3174 = vmatpush2.xpose.msra.mxu0 0.0
    %3175 = vmatprep.subr.mxu0 0.0
    %3176 = vmatpush2.xpose.msra.mxu0 0.0
    %3177 = vmatprep.subr.mxu0 0.0
    %3178 = vmatpush2.xpose.msra.mxu0 0.0
    %3179 = vmatprep.subr.mxu0 0.0
    %3180 = vmatpush2.xpose.msra.mxu0 0.0
    %3181 = vmatprep.subr.mxu0 0.0
    %3182 = vmatpush2.xpose.msra.mxu0 0.0
    %3183 = vmatprep.subr.mxu0 0.0
    %3184 = vmatpush2.xpose.msra.mxu0 0.0
    %3185 = vmatprep.subr.mxu0 0.0
    %3186 = vmatpush2.xpose.msra.mxu0 0.0
    %3187 = vmatprep.mubr.f32.mxu0 0.0
    %3188 = vmatmul.mubr.f32.gmra.mxu0 %v3122
    %v3189 = vpop.f32.mrf.mxu0
    %v3190 = vadd.f32 0.0, %v3189
    %v3191 = vpop.f32.mrf.mxu0
    %3192 = vdwg.mxu0
    %s3193 = scalar_lea.vmem [#allocation10], 4
    %v3194 = vld [vmem:[%s3193] sm:$0x1]
    %v3196 = vlaneseq
    %v3197 = vshrl.u32 %v3196, 7
    %v3198 = vsub.s32 0, %v3197
    %v3199 = vrot.slane %v3194, %v3198
    %v3201 = vmul.f32 %v3043, %v3199
    %v3202 = vmul.f32 %v3048, %v3199
    %v3203 = vmul.f32 %v3053, %v3199
    %v3204 = vmul.f32 %v3058, %v3199
    %v3205 = vmul.f32 %v3063, %v3199
    %v3206 = vmul.f32 %v3068, %v3199
    %v3207 = vmul.f32 %v3073, %v3199
    %v3208 = vmul.f32 %v3078, %v3199
    %v3209 = vmul.f32 %v3083, %v3199
    %v3210 = vmul.f32 %v3088, %v3199
    %v3211 = vmul.f32 %v3093, %v3199
    %v3212 = vmul.f32 %v3098, %v3199
    %v3213 = vmul.f32 %v3103, %v3199
    %v3214 = vmul.f32 %v3108, %v3199
    %v3215 = vmul.f32 %v3113, %v3199
    %v3216 = vmul.f32 %v3118, %v3199
    %3217 = vadd.xlane.f32.xlu0 %v3201
    %v3218 = vpop.xlane.xlu0 %3217
    %3219 = vadd.xlane.f32.xlu0 %v3202
    %v3220 = vpop.xlane.xlu0 %3219
    %3221 = vadd.xlane.f32.xlu0 %v3203
    %v3222 = vpop.xlane.xlu0 %3221
    %3223 = vadd.xlane.f32.xlu0 %v3204
    %v3224 = vpop.xlane.xlu0 %3223
    %3225 = vadd.xlane.f32.xlu0 %v3205
    %v3226 = vpop.xlane.xlu0 %3225
    %3227 = vadd.xlane.f32.xlu0 %v3206
    %v3228 = vpop.xlane.xlu0 %3227
    %3229 = vadd.xlane.f32.xlu0 %v3207
    %v3230 = vpop.xlane.xlu0 %3229
    %3231 = vadd.xlane.f32.xlu0 %v3208
    %v3232 = vpop.xlane.xlu0 %3231
    %3233 = vadd.xlane.f32.xlu0 %v3209
    %v3234 = vpop.xlane.xlu0 %3233
    %3235 = vadd.xlane.f32.xlu0 %v3210
    %v3236 = vpop.xlane.xlu0 %3235
    %3237 = vadd.xlane.f32.xlu0 %v3211
    %v3238 = vpop.xlane.xlu0 %3237
    %3239 = vadd.xlane.f32.xlu0 %v3212
    %v3240 = vpop.xlane.xlu0 %3239
    %3241 = vadd.xlane.f32.xlu0 %v3213
    %v3242 = vpop.xlane.xlu0 %3241
    %3243 = vadd.xlane.f32.xlu0 %v3214
    %v3244 = vpop.xlane.xlu0 %3243
    %3245 = vadd.xlane.f32.xlu0 %v3215
    %v3246 = vpop.xlane.xlu0 %3245
    %3247 = vadd.xlane.f32.xlu0 %v3216
    %v3248 = vpop.xlane.xlu0 %3247
    %v3249 = vlaneseq
    %v3250 = vshrl.u32 %v3249, 7
    %v3251 = vsub.s32 0, %v3250
    %v3252 = vrot.slane %v3190, %v3251
    %v3253 = vadd.f32 %v3218, %v3252
    %v3254 = vadd.f32 %v3220, %v3252
    %v3255 = vadd.f32 %v3222, %v3252
    %v3256 = vadd.f32 %v3224, %v3252
    %v3257 = vadd.f32 %v3226, %v3252
    %v3258 = vadd.f32 %v3228, %v3252
    %v3259 = vadd.f32 %v3230, %v3252
    %v3260 = vadd.f32 %v3232, %v3252
    %v3261 = vadd.f32 %v3234, %v3252
    %v3262 = vadd.f32 %v3236, %v3252
    %v3263 = vadd.f32 %v3238, %v3252
    %v3264 = vadd.f32 %v3240, %v3252
    %v3265 = vadd.f32 %v3242, %v3252
    %v3266 = vadd.f32 %v3244, %v3252
    %v3267 = vadd.f32 %v3246, %v3252
    %v3268 = vadd.f32 %v3248, %v3252
    %v3269 = vmul.f32 %v3253, 0.2
    %v3270 = vmul.f32 %v3254, 0.2
    %v3271 = vmul.f32 %v3255, 0.2
    %v3272 = vmul.f32 %v3256, 0.2
    %v3273 = vmul.f32 %v3257, 0.2
    %v3274 = vmul.f32 %v3258, 0.2
    %v3275 = vmul.f32 %v3259, 0.2
    %v3276 = vmul.f32 %v3260, 0.2
    %v3277 = vmul.f32 %v3261, 0.2
    %v3278 = vmul.f32 %v3262, 0.2
    %v3279 = vmul.f32 %v3263, 0.2
    %v3280 = vmul.f32 %v3264, 0.2
    %v3281 = vmul.f32 %v3265, 0.2
    %v3282 = vmul.f32 %v3266, 0.2
    %v3283 = vmul.f32 %v3267, 0.2
    %v3284 = vmul.f32 %v3268, 0.2
    %v3285 = vmax.f32 %v3253, %v3269
    %v3286 = vmax.f32 %v3254, %v3270
    %v3287 = vmax.f32 %v3255, %v3271
    %v3288 = vmax.f32 %v3256, %v3272
    %v3289 = vmax.f32 %v3257, %v3273
    %v3290 = vmax.f32 %v3258, %v3274
    %v3291 = vmax.f32 %v3259, %v3275
    %v3292 = vmax.f32 %v3260, %v3276
    %v3293 = vmax.f32 %v3261, %v3277
    %v3294 = vmax.f32 %v3262, %v3278
    %v3295 = vmax.f32 %v3263, %v3279
    %v3296 = vmax.f32 %v3264, %v3280
    %v3297 = vmax.f32 %v3265, %v3281
    %v3298 = vmax.f32 %v3266, %v3282
    %v3299 = vmax.f32 %v3267, %v3283
    %v3300 = vmax.f32 %v3268, %v3284
    %v3301 = vsel %vm147, %v3285, -1e+30
    %v3302 = vsel %vm148, %v3286, -1e+30
    %v3303 = vsel %vm149, %v3287, -1e+30
    %v3304 = vsel %vm150, %v3288, -1e+30
    %v3305 = vsel %vm151, %v3289, -1e+30
    %v3306 = vsel %vm152, %v3290, -1e+30
    %v3307 = vsel %vm153, %v3291, -1e+30
    %v3308 = vsel %vm154, %v3292, -1e+30
    %v3309 = vsel %vm155, %v3293, -1e+30
    %v3310 = vsel %vm156, %v3294, -1e+30
    %v3311 = vsel %vm157, %v3295, -1e+30
    %v3312 = vsel %vm158, %v3296, -1e+30
    %v3313 = vsel %vm159, %v3297, -1e+30
    %v3314 = vsel %vm160, %v3298, -1e+30
    %v3315 = vsel %vm161, %v3299, -1e+30
    %v3316 = vsel %vm162, %v3300, -1e+30
    %3317 = vmax.xlane.f32.xlu0 %v3301
    %v3318 = vpop.xlane.xlu0 %3317
    %3319 = vmax.xlane.f32.xlu0 %v3302
    %v3320 = vpop.xlane.xlu0 %3319
    %3321 = vmax.xlane.f32.xlu0 %v3303
    %v3322 = vpop.xlane.xlu0 %3321
    %3323 = vmax.xlane.f32.xlu0 %v3304
    %v3324 = vpop.xlane.xlu0 %3323
    %3325 = vmax.xlane.f32.xlu0 %v3305
    %v3326 = vpop.xlane.xlu0 %3325
    %3327 = vmax.xlane.f32.xlu0 %v3306
    %v3328 = vpop.xlane.xlu0 %3327
    %3329 = vmax.xlane.f32.xlu0 %v3307
    %v3330 = vpop.xlane.xlu0 %3329
    %3331 = vmax.xlane.f32.xlu0 %v3308
    %v3332 = vpop.xlane.xlu0 %3331
    %3333 = vmax.xlane.f32.xlu0 %v3309
    %v3334 = vpop.xlane.xlu0 %3333
    %3335 = vmax.xlane.f32.xlu0 %v3310
    %v3336 = vpop.xlane.xlu0 %3335
    %3337 = vmax.xlane.f32.xlu0 %v3311
    %v3338 = vpop.xlane.xlu0 %3337
    %3339 = vmax.xlane.f32.xlu0 %v3312
    %v3340 = vpop.xlane.xlu0 %3339
    %3341 = vmax.xlane.f32.xlu0 %v3313
    %v3342 = vpop.xlane.xlu0 %3341
    %3343 = vmax.xlane.f32.xlu0 %v3314
    %v3344 = vpop.xlane.xlu0 %3343
    %3345 = vmax.xlane.f32.xlu0 %v3315
    %v3346 = vpop.xlane.xlu0 %3345
    %3347 = vmax.xlane.f32.xlu0 %v3316
    %v3348 = vpop.xlane.xlu0 %3347
    %v3349 = vsub.f32 %v3301, %v3318
    %v3350 = vsub.f32 %v3302, %v3320
    %v3351 = vsub.f32 %v3303, %v3322
    %v3352 = vsub.f32 %v3304, %v3324
    %v3353 = vsub.f32 %v3305, %v3326
    %v3354 = vsub.f32 %v3306, %v3328
    %v3355 = vsub.f32 %v3307, %v3330
    %v3356 = vsub.f32 %v3308, %v3332
    %v3357 = vsub.f32 %v3309, %v3334
    %v3358 = vsub.f32 %v3310, %v3336
    %v3359 = vsub.f32 %v3311, %v3338
    %v3360 = vsub.f32 %v3312, %v3340
    %v3361 = vsub.f32 %v3313, %v3342
    %v3362 = vsub.f32 %v3314, %v3344
    %v3363 = vsub.f32 %v3315, %v3346
    %v3364 = vsub.f32 %v3316, %v3348
    %v3365 = vmul.f32 %v3349, 1.442695
    %v3366 = vpow.pop %v3365
    %v3367 = vmul.f32 %v3350, 1.442695
    %v3368 = vpow.pop %v3367
    %v3369 = vmul.f32 %v3351, 1.442695
    %v3370 = vpow.pop %v3369
    %v3371 = vmul.f32 %v3352, 1.442695
    %v3372 = vpow.pop %v3371
    %v3373 = vmul.f32 %v3353, 1.442695
    %v3374 = vpow.pop %v3373
    %v3375 = vmul.f32 %v3354, 1.442695
    %v3376 = vpow.pop %v3375
    %v3377 = vmul.f32 %v3355, 1.442695
    %v3378 = vpow.pop %v3377
    %v3379 = vmul.f32 %v3356, 1.442695
    %v3380 = vpow.pop %v3379
    %v3381 = vmul.f32 %v3357, 1.442695
    %v3382 = vpow.pop %v3381
    %v3383 = vmul.f32 %v3358, 1.442695
    %v3384 = vpow.pop %v3383
    %v3385 = vmul.f32 %v3359, 1.442695
    %v3386 = vpow.pop %v3385
    %v3387 = vmul.f32 %v3360, 1.442695
    %v3388 = vpow.pop %v3387
    %v3389 = vmul.f32 %v3361, 1.442695
    %v3390 = vpow.pop %v3389
    %v3391 = vmul.f32 %v3362, 1.442695
    %v3392 = vpow.pop %v3391
    %v3393 = vmul.f32 %v3363, 1.442695
    %v3394 = vpow.pop %v3393
    %v3395 = vmul.f32 %v3364, 1.442695
    %v3396 = vpow.pop %v3395
    %3397 = vadd.xlane.f32.xlu0 %v3366
    %v3398 = vpop.xlane.xlu0 %3397
    %3399 = vadd.xlane.f32.xlu0 %v3368
    %v3400 = vpop.xlane.xlu0 %3399
    %3401 = vadd.xlane.f32.xlu0 %v3370
    %v3402 = vpop.xlane.xlu0 %3401
    %3403 = vadd.xlane.f32.xlu0 %v3372
    %v3404 = vpop.xlane.xlu0 %3403
    %3405 = vadd.xlane.f32.xlu0 %v3374
    %v3406 = vpop.xlane.xlu0 %3405
    %3407 = vadd.xlane.f32.xlu0 %v3376
    %v3408 = vpop.xlane.xlu0 %3407
    %3409 = vadd.xlane.f32.xlu0 %v3378
    %v3410 = vpop.xlane.xlu0 %3409
    %3411 = vadd.xlane.f32.xlu0 %v3380
    %v3412 = vpop.xlane.xlu0 %3411
    %3413 = vadd.xlane.f32.xlu0 %v3382
    %v3414 = vpop.xlane.xlu0 %3413
    %3415 = vadd.xlane.f32.xlu0 %v3384
    %v3416 = vpop.xlane.xlu0 %3415
    %3417 = vadd.xlane.f32.xlu0 %v3386
    %v3418 = vpop.xlane.xlu0 %3417
    %3419 = vadd.xlane.f32.xlu0 %v3388
    %v3420 = vpop.xlane.xlu0 %3419
    %3421 = vadd.xlane.f32.xlu0 %v3390
    %v3422 = vpop.xlane.xlu0 %3421
    %3423 = vadd.xlane.f32.xlu0 %v3392
    %v3424 = vpop.xlane.xlu0 %3423
    %3425 = vadd.xlane.f32.xlu0 %v3394
    %v3426 = vpop.xlane.xlu0 %3425
    %3427 = vadd.xlane.f32.xlu0 %v3396
    %v3428 = vpop.xlane.xlu0 %3427
    %3429 = vmatprep.subr.mxu0 0.0
    %3430 = vmatpush1.msra.mxu0 %v3118
    %3431 = vmatprep.subr.mxu0 0.0
    %3432 = vmatpush1.msra.mxu0 %v3113
    %3433 = vmatprep.subr.mxu0 0.0
    %3434 = vmatpush1.msra.mxu0 %v3108
    %3435 = vmatprep.subr.mxu0 0.0
    %3436 = vmatpush1.msra.mxu0 %v3103
    %3437 = vmatprep.subr.mxu0 0.0
    %3438 = vmatpush1.msra.mxu0 %v3098
    %3439 = vmatprep.subr.mxu0 0.0
    %3440 = vmatpush1.msra.mxu0 %v3093
    %3441 = vmatprep.subr.mxu0 0.0
    %3442 = vmatpush1.msra.mxu0 %v3088
    %3443 = vmatprep.subr.mxu0 0.0
    %3444 = vmatpush1.msra.mxu0 %v3083
    %3445 = vmatprep.subr.mxu0 0.0
    %3446 = vmatpush1.msra.mxu0 %v3078
    %3447 = vmatprep.subr.mxu0 0.0
    %3448 = vmatpush1.msra.mxu0 %v3073
    %3449 = vmatprep.subr.mxu0 0.0
    %3450 = vmatpush1.msra.mxu0 %v3068
    %3451 = vmatprep.subr.mxu0 0.0
    %3452 = vmatpush1.msra.mxu0 %v3063
    %3453 = vmatprep.subr.mxu0 0.0
    %3454 = vmatpush1.msra.mxu0 %v3058
    %3455 = vmatprep.subr.mxu0 0.0
    %3456 = vmatpush1.msra.mxu0 %v3053
    %3457 = vmatprep.subr.mxu0 0.0
    %3458 = vmatpush1.msra.mxu0 %v3048
    %3459 = vmatprep.subr.mxu0 0.0
    %3460 = vmatpush1.msra.mxu0 %v3043
    %3461 = vmatprep.subr.mxu0 0.0
    %3462 = vmatpush2.msra.mxu0 0.0
    %3463 = vmatprep.subr.mxu0 0.0
    %3464 = vmatpush2.msra.mxu0 0.0
    %3465 = vmatprep.subr.mxu0 0.0
    %3466 = vmatpush2.msra.mxu0 0.0
    %3467 = vmatprep.subr.mxu0 0.0
    %3468 = vmatpush2.msra.mxu0 0.0
    %3469 = vmatprep.subr.mxu0 0.0
    %3470 = vmatpush2.msra.mxu0 0.0
    %3471 = vmatprep.subr.mxu0 0.0
    %3472 = vmatpush2.msra.mxu0 0.0
    %3473 = vmatprep.subr.mxu0 0.0
    %3474 = vmatpush2.msra.mxu0 0.0
    %3475 = vmatprep.subr.mxu0 0.0
    %3476 = vmatpush2.msra.mxu0 0.0
    %3477 = vmatprep.subr.mxu0 0.0
    %3478 = vmatpush2.msra.mxu0 0.0
    %3479 = vmatprep.subr.mxu0 0.0
    %3480 = vmatpush2.msra.mxu0 0.0
    %3481 = vmatprep.subr.mxu0 0.0
    %3482 = vmatpush2.msra.mxu0 0.0
    %3483 = vmatprep.subr.mxu0 0.0
    %3484 = vmatpush2.msra.mxu0 0.0
    %3485 = vmatprep.subr.mxu0 0.0
    %3486 = vmatpush2.msra.mxu0 0.0
    %3487 = vmatprep.subr.mxu0 0.0
    %3488 = vmatpush2.msra.mxu0 0.0
    %3489 = vmatprep.subr.mxu0 0.0
    %3490 = vmatpush2.msra.mxu0 0.0
    %3491 = vmatprep.subr.mxu0 0.0
    %3492 = vmatpush2.msra.mxu0 0.0
    %3493 = vmatprep.mubr.f32.mxu0 0.0
    %3494 = vmatmul.mubr.f32.gmra.mxu0 %v3366
    %v3495 = vpop.f32.mrf.mxu0
    %v3496 = vadd.f32 0.0, %v3495
    %v3497 = vpop.f32.mrf.mxu0
    %3498 = vmatprep.mubr.f32.mxu0 0.0
    %3499 = vmatmul.mubr.f32.gmra.mxu0 %v3368
    %v3500 = vpop.f32.mrf.mxu0
    %v3501 = vadd.f32 0.0, %v3500
    %v3502 = vpop.f32.mrf.mxu0
    %3503 = vmatprep.mubr.f32.mxu0 0.0
    %3504 = vmatmul.mubr.f32.gmra.mxu0 %v3370
    %v3505 = vpop.f32.mrf.mxu0
    %v3506 = vadd.f32 0.0, %v3505
    %v3507 = vpop.f32.mrf.mxu0
    %3508 = vmatprep.mubr.f32.mxu0 0.0
    %3509 = vmatmul.mubr.f32.gmra.mxu0 %v3372
    %v3510 = vpop.f32.mrf.mxu0
    %v3511 = vadd.f32 0.0, %v3510
    %v3512 = vpop.f32.mrf.mxu0
    %3513 = vmatprep.mubr.f32.mxu0 0.0
    %3514 = vmatmul.mubr.f32.gmra.mxu0 %v3374
    %v3515 = vpop.f32.mrf.mxu0
    %v3516 = vadd.f32 0.0, %v3515
    %v3517 = vpop.f32.mrf.mxu0
    %3518 = vmatprep.mubr.f32.mxu0 0.0
    %3519 = vmatmul.mubr.f32.gmra.mxu0 %v3376
    %v3520 = vpop.f32.mrf.mxu0
    %v3521 = vadd.f32 0.0, %v3520
    %v3522 = vpop.f32.mrf.mxu0
    %3523 = vmatprep.mubr.f32.mxu0 0.0
    %3524 = vmatmul.mubr.f32.gmra.mxu0 %v3378
    %v3525 = vpop.f32.mrf.mxu0
    %v3526 = vadd.f32 0.0, %v3525
    %v3527 = vpop.f32.mrf.mxu0
    %3528 = vmatprep.mubr.f32.mxu0 0.0
    %3529 = vmatmul.mubr.f32.gmra.mxu0 %v3380
    %v3530 = vpop.f32.mrf.mxu0
    %v3531 = vadd.f32 0.0, %v3530
    %v3532 = vpop.f32.mrf.mxu0
    %3533 = vmatprep.mubr.f32.mxu0 0.0
    %3534 = vmatmul.mubr.f32.gmra.mxu0 %v3382
    %v3535 = vpop.f32.mrf.mxu0
    %v3536 = vadd.f32 0.0, %v3535
    %v3537 = vpop.f32.mrf.mxu0
    %3538 = vmatprep.mubr.f32.mxu0 0.0
    %3539 = vmatmul.mubr.f32.gmra.mxu0 %v3384
    %v3540 = vpop.f32.mrf.mxu0
    %v3541 = vadd.f32 0.0, %v3540
    %v3542 = vpop.f32.mrf.mxu0
    %3543 = vmatprep.mubr.f32.mxu0 0.0
    %3544 = vmatmul.mubr.f32.gmra.mxu0 %v3386
    %v3545 = vpop.f32.mrf.mxu0
    %v3546 = vadd.f32 0.0, %v3545
    %v3547 = vpop.f32.mrf.mxu0
    %3548 = vmatprep.mubr.f32.mxu0 0.0
    %3549 = vmatmul.mubr.f32.gmra.mxu0 %v3388
    %v3550 = vpop.f32.mrf.mxu0
    %v3551 = vadd.f32 0.0, %v3550
    %v3552 = vpop.f32.mrf.mxu0
    %3553 = vmatprep.mubr.f32.mxu0 0.0
    %3554 = vmatmul.mubr.f32.gmra.mxu0 %v3390
    %v3555 = vpop.f32.mrf.mxu0
    %v3556 = vadd.f32 0.0, %v3555
    %v3557 = vpop.f32.mrf.mxu0
    %3558 = vmatprep.mubr.f32.mxu0 0.0
    %3559 = vmatmul.mubr.f32.gmra.mxu0 %v3392
    %v3560 = vpop.f32.mrf.mxu0
    %v3561 = vadd.f32 0.0, %v3560
    %v3562 = vpop.f32.mrf.mxu0
    %3563 = vmatprep.mubr.f32.mxu0 0.0
    %3564 = vmatmul.mubr.f32.gmra.mxu0 %v3394
    %v3565 = vpop.f32.mrf.mxu0
    %v3566 = vadd.f32 0.0, %v3565
    %v3567 = vpop.f32.mrf.mxu0
    %3568 = vmatprep.mubr.f32.mxu0 0.0
    %3569 = vmatmul.mubr.f32.gmra.mxu0 %v3396
    %v3570 = vpop.f32.mrf.mxu0
    %v3571 = vadd.f32 0.0, %v3570
    %v3572 = vpop.f32.mrf.mxu0
    %3573 = vdwg.mxu0
    %v3574 = vrcp.pop %v3398
    %v3575 = vmul.f32 %v3496, %v3574
    %v3576 = vrcp.pop %v3400
    %v3577 = vmul.f32 %v3501, %v3576
    %v3578 = vrcp.pop %v3402
    %v3579 = vmul.f32 %v3506, %v3578
    %v3580 = vrcp.pop %v3404
    %v3581 = vmul.f32 %v3511, %v3580
    %v3582 = vrcp.pop %v3406
    %v3583 = vmul.f32 %v3516, %v3582
    %v3584 = vrcp.pop %v3408
    %v3585 = vmul.f32 %v3521, %v3584
    %v3586 = vrcp.pop %v3410
    %v3587 = vmul.f32 %v3526, %v3586
    %v3588 = vrcp.pop %v3412
    %v3589 = vmul.f32 %v3531, %v3588
    %v3590 = vrcp.pop %v3414
    %v3591 = vmul.f32 %v3536, %v3590
    %v3592 = vrcp.pop %v3416
    %v3593 = vmul.f32 %v3541, %v3592
    %v3594 = vrcp.pop %v3418
    %v3595 = vmul.f32 %v3546, %v3594
    %v3596 = vrcp.pop %v3420
    %v3597 = vmul.f32 %v3551, %v3596
    %v3598 = vrcp.pop %v3422
    %v3599 = vmul.f32 %v3556, %v3598
    %v3600 = vrcp.pop %v3424
    %v3601 = vmul.f32 %v3561, %v3600
    %v3602 = vrcp.pop %v3426
    %v3603 = vmul.f32 %v3566, %v3602
    %v3604 = vrcp.pop %v3428
    %v3605 = vmul.f32 %v3571, %v3604
    %s3606 = scalar_lea.vmem %s6, 4
    %v3607 = vld [vmem:[%s3606] sm:$0x1]
    %v3609 = vlaneseq
    %v3610 = vshrl.u32 %v3609, 7
    %v3611 = vsub.s32 0, %v3610
    %v3612 = vrot.slane %v3607, %v3611
    %v3614 = vadd.f32 %v3575, %v3612
    %v3615 = vadd.f32 %v3577, %v3612
    %v3616 = vadd.f32 %v3579, %v3612
    %v3617 = vadd.f32 %v3581, %v3612
    %v3618 = vadd.f32 %v3583, %v3612
    %v3619 = vadd.f32 %v3585, %v3612
    %v3620 = vadd.f32 %v3587, %v3612
    %v3621 = vadd.f32 %v3589, %v3612
    %v3622 = vadd.f32 %v3591, %v3612
    %v3623 = vadd.f32 %v3593, %v3612
    %v3624 = vadd.f32 %v3595, %v3612
    %v3625 = vadd.f32 %v3597, %v3612
    %v3626 = vadd.f32 %v3599, %v3612
    %v3627 = vadd.f32 %v3601, %v3612
    %v3628 = vadd.f32 %v3603, %v3612
    %v3629 = vadd.f32 %v3605, %v3612
    %3630 = vst [vmem:[#allocation11] sm:$0xff] %v3614
    %3631 = vst [vmem:[#allocation11 + $0x8] sm:$0xff] %v3615
    %3632 = vst [vmem:[#allocation11 + $0x10] sm:$0xff] %v3616
    %3633 = vst [vmem:[#allocation11 + $0x18] sm:$0xff] %v3617
    %3634 = vst [vmem:[#allocation11 + $0x20] sm:$0xff] %v3618
    %3635 = vst [vmem:[#allocation11 + $0x28] sm:$0xff] %v3619
    %3636 = vst [vmem:[#allocation11 + $0x30] sm:$0xff] %v3620
    %3637 = vst [vmem:[#allocation11 + $0x38] sm:$0xff] %v3621
    %3638 = vst [vmem:[#allocation11 + $0x40] sm:$0xff] %v3622
    %3639 = vst [vmem:[#allocation11 + $0x48] sm:$0xff] %v3623
    %3640 = vst [vmem:[#allocation11 + $0x50] sm:$0xff] %v3624
    %3641 = vst [vmem:[#allocation11 + $0x58] sm:$0xff] %v3625
    %3642 = vst [vmem:[#allocation11 + $0x60] sm:$0xff] %v3626
    %3643 = vst [vmem:[#allocation11 + $0x68] sm:$0xff] %v3627
    %3644 = vst [vmem:[#allocation11 + $0x70] sm:$0xff] %v3628
    %3645 = vst [vmem:[#allocation11 + $0x78] sm:$0xff] %v3629
    // Predicated region
    $region50: #{tpu_custom_call.1} parent=1 // pred_check
      _
    $region51: #{tpu_custom_call.1} parent=1 // pred_check_branch
      %3647 = sbr.rel (0) target = $region53
    $region52: #{tpu_custom_call.1} parent=1 // pred_region
      %s3649 = ssub.s32 2048, 2048
      %3650 = vsyncadd [#allocation4], %s3649
      %s3651 = sshll.u32 [#allocation11], 4
      %s3652 = int_to_ptr.vmem [resolvable:$true] %s3651
      %3657 = dma.vmem_to_hbm [thread:$0]  %s3652, 2048, %s7, [#allocation4], 128, 128, 8
    $region53: #{tpu_custom_call.1} parent=1 // pred_fallthru
      _
    // Predicated region
    $region54: #{tpu_custom_call.1} parent=1 // pred_check
      _
    $region55: #{tpu_custom_call.1} parent=1 // pred_check_branch
      %3659 = sbr.rel (0) target = $region57
    $region56: #{tpu_custom_call.1} parent=1 // pred_region
      %3660 = dma.done [#allocation4], 2048
    $region57: #{tpu_custom_call.1} parent=1 // pred_fallthru
      _
    %3661 = vsyncpa [#allocation3], 1
    %3662 = vsyncpa [#allocation6], 1
    %3663 = vsyncpa [#allocation9], 1
    %3664 = vsyncpa [#allocation4], 1

</llo_original>
